<compile_context>
chip_gen: v5e
topology: v5e:2x2
jax: 0.10.0
libtpu: 0.0.40
codegen_flags: <defaults>
</compile_context>

<pallas_src>
import math

import numpy as np
import jax
import jax.numpy as jnp
from jax.experimental import pallas as pl
from jax.experimental.pallas import tpu as pltpu

C_OUT = 40      # conv1 / conv2 output channels
KW1 = 50        # conv1 kernel width
KH2 = 44        # conv2 kernel height (== EEG channel count == input H)
POOL_K = 150    # avg_pool2d kernel width
POOL_S = 90     # avg_pool2d stride
BN_EPS = 1e-5
LOG_EPS = 1e-6  # braindecode safe_log eps
VMEM_LIMIT = 32 * 1024 * 1024


# --------------------------------------------------------------- kernel A ----
def _make_conv_kernel(tp, wc):
    def kernel(xl_ref, xh_ref, w_ref, b_ref, z_ref, s_ref):
        # xl/xh: (1, 44, tp)   current width tile of x / next tile (halo)
        # w:     (KW1, C, 44)  composed conv1∘conv2 weights, w_ref[kw] = (C, 44)
        # b:     (C, 1)        composed bias
        # z:     (1, C, tp)    conv output tile (channels on sublanes; lane-dense)
        # s:     (1, 1, C, 2)  per-tile BN partials: [:, 0]=sum, [:, 1]=sum(z^2)
        xw = jnp.concatenate([xl_ref[0], xh_ref[0]], axis=1)     # (44, 2*tp)
        acc = jnp.zeros((C_OUT, tp), jnp.float32)
        for kw in range(KW1):                                    # static shifts
            acc = acc + jnp.dot(w_ref[kw], xw[:, kw:kw + tp],
                                preferred_element_type=jnp.float32)
        z = acc + b_ref[...]                                     # (C, tp)
        z_ref[0] = z                                             # lane-dense store

        # one-pass BN statistics; mask positions past the true conv width
        p0 = pl.program_id(1) * tp
        pos = p0 + jax.lax.broadcasted_iota(jnp.int32, (1, tp), 1)
        zm = jnp.where(pos < wc, z, 0.0)
        s_ref[0, 0, :, 0:1] = jnp.sum(zm, axis=1, keepdims=True)
        s_ref[0, 0, :, 1:2] = jnp.sum(zm * zm, axis=1, keepdims=True)
    return kernel


def fused_conv(x_pad, we, be, *, wc, tp):
    """x_pad: (N, 44, (gp+1)*tp) zero-padded input (NCHW squeezed).
    Returns z: (N, C_OUT, gp*tp) and per-tile BN partials (N, gp, C_OUT, 2)."""
    n, h, w_pad = x_pad.shape
    gp = w_pad // tp - 1
    wc_pad = gp * tp
    return pl.pallas_call(
        _make_conv_kernel(tp, wc),
        out_shape=(
            jax.ShapeDtypeStruct((n, C_OUT, wc_pad), jnp.float32),
            jax.ShapeDtypeStruct((n, gp, C_OUT, 2), jnp.float32),
        ),
        grid=(n, gp),
        in_specs=[
            pl.BlockSpec((1, h, tp), lambda i, j: (i, 0, j)),        # tile
            pl.BlockSpec((1, h, tp), lambda i, j: (i, 0, j + 1)),    # halo block
            pl.BlockSpec((KW1, C_OUT, KH2), lambda i, j: (0, 0, 0)),
            pl.BlockSpec((C_OUT, 1), lambda i, j: (0, 0)),
        ],
        out_specs=(
            pl.BlockSpec((1, C_OUT, tp), lambda i, j: (i, 0, j)),
            pl.BlockSpec((1, 1, C_OUT, 2), lambda i, j: (i, j, 0, 0)),
        ),
        compiler_params=pltpu.CompilerParams(
            dimension_semantics=("parallel", "parallel"),
            vmem_limit_bytes=VMEM_LIMIT,
        ),
    )(x_pad, x_pad, we, be)


# --------------------------------------------------------------- kernel B ----
def _head_kernel(z_ref, s_ref, t_ref, a_ref, o_ref):
    # z: (1, C, Wc_pad); s/t: (C, 1); a: (Wc_pad, Wp); o: (1, C, Wp)
    zn = z_ref[0] * s_ref[...] + t_ref[...]          # BatchNorm folded to affine
    sq = zn * zn                                     # square nonlinearity
    pooled = jnp.dot(sq, a_ref[...], preferred_element_type=jnp.float32)
    o_ref[0] = jnp.log(jnp.maximum(pooled, LOG_EPS))  # safe_log


def head_call(z, scale, shift, pool_mat):
    n, c, wc_pad = z.shape
    wp = pool_mat.shape[1]
    return pl.pallas_call(
        _head_kernel,
        out_shape=jax.ShapeDtypeStruct((n, c, wp), jnp.float32),
        grid=(n,),
        in_specs=[
            pl.BlockSpec((1, c, wc_pad), lambda i: (i, 0, 0)),
            pl.BlockSpec((c, 1), lambda i: (0, 0)),
            pl.BlockSpec((c, 1), lambda i: (0, 0)),
            pl.BlockSpec((wc_pad, wp), lambda i: (0, 0)),
        ],
        out_specs=pl.BlockSpec((1, c, wp), lambda i: (i, 0, 0)),
        compiler_params=pltpu.CompilerParams(
            dimension_semantics=("parallel",),
            vmem_limit_bytes=VMEM_LIMIT,
        ),
    )(z, scale, shift, pool_mat)


# ---------------------------------------------------------------- forward ----
@jax.jit
def globalnetwork_forward(x, w1, b1, w2, b2, gamma, beta):
    n, cin, h, w = x.shape
    assert cin == 1 and h == KH2, "module hardcodes in_channels=1 and H=44"
    wc = w - KW1 + 1
    wp = (wc - POOL_K) // POOL_S + 1
    assert wp >= 1, "avg_pool2d(1,150) needs W - 49 >= 150"

    # width tile: lane-dense (multiple of 128); bigger tiles for longer signals
    tp = 128 if wc < 256 else (256 if wc < 1024 else 512)
    gp = pl.cdiv(wc, tp)
    wc_pad = gp * tp

    # ---- tiny wrapper glue (O(weights) / O(x)) ------------------------------
    # Compose conv1 (1x50) and conv2 (44x1) into one effective (44x50) conv.
    w1m = w1.reshape(C_OUT, KW1)                       # (c1, kw)
    w2m = w2.reshape(C_OUT, C_OUT, KH2)                # (c2, c1, h)
    we = jnp.einsum("ak,cah->kch", w1m, w2m,
                    precision=jax.lax.Precision.HIGHEST)           # (KW1, C, 44)
    be = (jnp.einsum("a,cah->c", b1, w2m,
                     precision=jax.lax.Precision.HIGHEST) + b2).reshape(C_OUT, 1)

    # x NCHW (N,1,44,W) -> (N,44,W); zero-pad the width to (gp+1)*tp so every
    # tile has an in-bounds halo block.  Padded positions are masked out of the
    # BN stats and get zero weight in the pooling matrix.
    x_pad = jnp.pad(x[:, 0], ((0, 0), (0, 0), (0, (gp + 1) * tp - w)))

    # ---- kernel A: fused conv + one-pass BN partial statistics --------------
    z, stats = fused_conv(x_pad, we, be, wc=wc, tp=tp)

    # ---- finalize BN (training-mode batch stats) as a per-channel affine ----
    cnt = n * wc
    mean = jnp.sum(stats[..., 0], axis=(0, 1)) / cnt
    var = jnp.sum(stats[..., 1], axis=(0, 1)) / cnt - mean * mean   # biased var
    scale = gamma * jax.lax.rsqrt(var + BN_EPS)
    shift = beta - mean * scale

    # static averaging matrix for avg_pool2d((1,150), stride (1,90))
    a = np.zeros((wc_pad, wp), np.float32)
    for q in range(wp):
        a[q * POOL_S: q * POOL_S + POOL_K, q] = 1.0 / POOL_K
    pool_mat = jnp.asarray(a)

    # ---- kernel B: BN affine + square + avg-pool (matmul) + safe_log --------
    out = head_call(z, scale.reshape(C_OUT, 1), shift.reshape(C_OUT, 1), pool_mat)
    return out.reshape(n, C_OUT, 1, wp)                # NCHW (N, 40, 1, Wp)
    # TODO(synk): BatchNorm2d running-stat (momentum) buffer updates are a
    # training-state side effect, not part of the returned forward value.


# ----------------------------------------------------- pure-JAX reference ----
def reference(x, w1, b1, w2, b2, gamma, beta):
    dn = ("NCHW", "OIHW", "NCHW")
    y = jax.lax.conv_general_dilated(x, w1, (1, 1), "VALID", dimension_numbers=dn)
    y = y + b1[None, :, None, None]
    y = jax.lax.conv_general_dilated(y, w2, (1, 1), "VALID", dimension_numbers=dn)
    y = y + b2[None, :, None, None]
    mean = jnp.mean(y, axis=(0, 2, 3), keepdims=True)
    var = jnp.mean((y - mean) ** 2, axis=(0, 2, 3), keepdims=True)
    y = (y - mean) / jnp.sqrt(var + BN_EPS)
    y = y * gamma[None, :, None, None] + beta[None, :, None, None]
    y = y * y
    wc = y.shape[-1]
    wp = (wc - POOL_K) // POOL_S + 1
    y = jnp.stack(
        [jnp.mean(y[..., p * POOL_S: p * POOL_S + POOL_K], axis=-1) for p in range(wp)],
        axis=-1,
    )
    return jnp.log(jnp.maximum(y, LOG_EPS))


if __name__ == "__main__":
    key = jax.random.PRNGKey(0)
    k1, k2, kx = jax.random.split(key, 3)

    # Smallest shapes consistent with the module: conv2 needs H == 44,
    # avg_pool2d(1,150) needs (W - 49) >= 150.  W=289 -> Wc=240 -> Wp=2.
    N, H, W = 2, 44, 289

    # Deterministic synthetic params mirroring __init__ (xavier_uniform / zeros / ones)
    bound1 = math.sqrt(6.0 / (1 * KW1 + C_OUT * KW1))
    w1 = jax.random.uniform(k1, (C_OUT, 1, 1, KW1), jnp.float32, -bound1, bound1)
    b1 = jnp.zeros((C_OUT,), jnp.float32)
    bound2 = math.sqrt(6.0 / (C_OUT * KH2 + C_OUT * KH2))
    w2 = jax.random.uniform(k2, (C_OUT, C_OUT, KH2, 1), jnp.float32, -bound2, bound2)
    b2 = jnp.zeros((C_OUT,), jnp.float32)
    gamma = jnp.ones((C_OUT,), jnp.float32)   # bn2.weight
    beta = jnp.zeros((C_OUT,), jnp.float32)   # bn2.bias

    x = jax.random.normal(kx, (N, 1, H, W), jnp.float32)

    out = jax.block_until_ready(globalnetwork_forward(x, w1, b1, w2, b2, gamma, beta))
    ref = jax.block_until_ready(reference(x, w1, b1, w2, b2, gamma, beta))

    wp = (W - KW1 + 1 - POOL_K) // POOL_S + 1
    assert out.shape == ref.shape == (N, C_OUT, 1, wp)
    np.testing.assert_allclose(np.asarray(out), np.asarray(ref), rtol=5e-2, atol=5e-2)
    print("KERNEL_OK")
</pallas_src>

<mosaic_0001>
module attributes {stable_mosaic.version = 11 : i64} {
  func.func @kernel(%arg0: i32, %arg1: i32, %arg2: memref<1x44x128xf32, #tpu.memory_space<vmem>>, %arg3: memref<1x44x128xf32, #tpu.memory_space<vmem>>, %arg4: memref<50x40x44xf32, #tpu.memory_space<vmem>>, %arg5: memref<40x1xf32, #tpu.memory_space<vmem>>, %arg6: memref<1x40x128xf32, #tpu.memory_space<vmem>>, %arg7: memref<1x1x40x2xf32, #tpu.memory_space<vmem>>) attributes {dimension_semantics = [#tpu.dimension_semantics<parallel>, #tpu.dimension_semantics<parallel>], iteration_bounds = array<i64: 2, 2>, scalar_prefetch = 0 : i64, scratch_operands = 0 : i64, tpu.core_type = #tpu.core_type<tc>, window_params = [{transform_indices = @transform_0, window_bounds = array<i64: 1, 44, 128>}, {transform_indices = @transform_1, window_bounds = array<i64: 1, 44, 128>}, {pipeline_mode = #tpu.pipeline_mode<synchronous>, transform_indices = @transform_2, window_bounds = array<i64: 50, 40, 44>}, {pipeline_mode = #tpu.pipeline_mode<synchronous>, transform_indices = @transform_3, window_bounds = array<i64: 40, 1>}, {transform_indices = @transform_4, window_bounds = array<i64: 1, 40, 128>}, {transform_indices = @transform_5, window_bounds = array<i64: 1, 1, 40, 2>}]} {
    %c0 = arith.constant 0 : index
    %c0_0 = arith.constant 0 : index
    %c0_1 = arith.constant 0 : index
    %0 = vector.load %arg2[%c0, %c0_0, %c0_1] : memref<1x44x128xf32, #tpu.memory_space<vmem>>, vector<1x44x128xf32>
    %1 = vector.shape_cast %0 : vector<1x44x128xf32> to vector<44x128xf32>
    %c0_2 = arith.constant 0 : index
    %c0_3 = arith.constant 0 : index
    %c0_4 = arith.constant 0 : index
    %2 = vector.load %arg3[%c0_2, %c0_3, %c0_4] : memref<1x44x128xf32, #tpu.memory_space<vmem>>, vector<1x44x128xf32>
    %3 = vector.shape_cast %2 : vector<1x44x128xf32> to vector<44x128xf32>
    %4 = tpu.concatenate %1, %3 in 1 : vector<44x128xf32>, vector<44x128xf32> -> vector<44x256xf32>
    %cst = arith.constant 0.000000e+00 : f32
    %5 = vector.broadcast %cst : f32 to vector<40x128xf32>
    %c0_5 = arith.constant 0 : index
    %c0_6 = arith.constant 0 : index
    %c0_7 = arith.constant 0 : index
    %6 = vector.load %arg4[%c0_5, %c0_6, %c0_7] : memref<50x40x44xf32, #tpu.memory_space<vmem>>, vector<1x40x44xf32>
    %7 = vector.shape_cast %6 : vector<1x40x44xf32> to vector<40x44xf32>
    %8 = vector.extract_strided_slice %4 {offsets = [0, 0], sizes = [44, 128], strides = [1, 1]} : vector<44x256xf32> to vector<44x128xf32>
    %cst_8 = arith.constant dense<0.000000e+00> : vector<40x128xf32>
    %9 = tpu.matmul %7, %8, %cst_8 {dimension_numbers = #tpu.dot_dimension_numbers<[1], [0], [0], [1], [0, 0, 1, 1], [], []>} : vector<40x44xf32>, vector<44x128xf32>, vector<40x128xf32> -> vector<40x128xf32>
    %10 = arith.addf %5, %9 : vector<40x128xf32>
    %c1 = arith.constant 1 : index
    %c0_9 = arith.constant 0 : index
    %c0_10 = arith.constant 0 : index
    %11 = vector.load %arg4[%c1, %c0_9, %c0_10] : memref<50x40x44xf32, #tpu.memory_space<vmem>>, vector<1x40x44xf32>
    %12 = vector.shape_cast %11 : vector<1x40x44xf32> to vector<40x44xf32>
    %13 = vector.extract_strided_slice %4 {offsets = [0, 1], sizes = [44, 128], strides = [1, 1]} : vector<44x256xf32> to vector<44x128xf32>
    %cst_11 = arith.constant dense<0.000000e+00> : vector<40x128xf32>
    %14 = tpu.matmul %12, %13, %cst_11 {dimension_numbers = #tpu.dot_dimension_numbers<[1], [0], [0], [1], [0, 0, 1, 1], [], []>} : vector<40x44xf32>, vector<44x128xf32>, vector<40x128xf32> -> vector<40x128xf32>
    %15 = arith.addf %10, %14 : vector<40x128xf32>
    %c2 = arith.constant 2 : index
    %c0_12 = arith.constant 0 : index
    %c0_13 = arith.constant 0 : index
    %16 = vector.load %arg4[%c2, %c0_12, %c0_13] : memref<50x40x44xf32, #tpu.memory_space<vmem>>, vector<1x40x44xf32>
    %17 = vector.shape_cast %16 : vector<1x40x44xf32> to vector<40x44xf32>
    %18 = vector.extract_strided_slice %4 {offsets = [0, 2], sizes = [44, 128], strides = [1, 1]} : vector<44x256xf32> to vector<44x128xf32>
    %cst_14 = arith.constant dense<0.000000e+00> : vector<40x128xf32>
    %19 = tpu.matmul %17, %18, %cst_14 {dimension_numbers = #tpu.dot_dimension_numbers<[1], [0], [0], [1], [0, 0, 1, 1], [], []>} : vector<40x44xf32>, vector<44x128xf32>, vector<40x128xf32> -> vector<40x128xf32>
    %20 = arith.addf %15, %19 : vector<40x128xf32>
    %c3 = arith.constant 3 : index
    %c0_15 = arith.constant 0 : index
    %c0_16 = arith.constant 0 : index
    %21 = vector.load %arg4[%c3, %c0_15, %c0_16] : memref<50x40x44xf32, #tpu.memory_space<vmem>>, vector<1x40x44xf32>
    %22 = vector.shape_cast %21 : vector<1x40x44xf32> to vector<40x44xf32>
    %23 = vector.extract_strided_slice %4 {offsets = [0, 3], sizes = [44, 128], strides = [1, 1]} : vector<44x256xf32> to vector<44x128xf32>
    %cst_17 = arith.constant dense<0.000000e+00> : vector<40x128xf32>
    %24 = tpu.matmul %22, %23, %cst_17 {dimension_numbers = #tpu.dot_dimension_numbers<[1], [0], [0], [1], [0, 0, 1, 1], [], []>} : vector<40x44xf32>, vector<44x128xf32>, vector<40x128xf32> -> vector<40x128xf32>
    %25 = arith.addf %20, %24 : vector<40x128xf32>
    %c4 = arith.constant 4 : index
    %c0_18 = arith.constant 0 : index
    %c0_19 = arith.constant 0 : index
    %26 = vector.load %arg4[%c4, %c0_18, %c0_19] : memref<50x40x44xf32, #tpu.memory_space<vmem>>, vector<1x40x44xf32>
    %27 = vector.shape_cast %26 : vector<1x40x44xf32> to vector<40x44xf32>
    %28 = vector.extract_strided_slice %4 {offsets = [0, 4], sizes = [44, 128], strides = [1, 1]} : vector<44x256xf32> to vector<44x128xf32>
    %cst_20 = arith.constant dense<0.000000e+00> : vector<40x128xf32>
    %29 = tpu.matmul %27, %28, %cst_20 {dimension_numbers = #tpu.dot_dimension_numbers<[1], [0], [0], [1], [0, 0, 1, 1], [], []>} : vector<40x44xf32>, vector<44x128xf32>, vector<40x128xf32> -> vector<40x128xf32>
    %30 = arith.addf %25, %29 : vector<40x128xf32>
    %c5 = arith.constant 5 : index
    %c0_21 = arith.constant 0 : index
    %c0_22 = arith.constant 0 : index
    %31 = vector.load %arg4[%c5, %c0_21, %c0_22] : memref<50x40x44xf32, #tpu.memory_space<vmem>>, vector<1x40x44xf32>
    %32 = vector.shape_cast %31 : vector<1x40x44xf32> to vector<40x44xf32>
    %33 = vector.extract_strided_slice %4 {offsets = [0, 5], sizes = [44, 128], strides = [1, 1]} : vector<44x256xf32> to vector<44x128xf32>
    %cst_23 = arith.constant dense<0.000000e+00> : vector<40x128xf32>
    %34 = tpu.matmul %32, %33, %cst_23 {dimension_numbers = #tpu.dot_dimension_numbers<[1], [0], [0], [1], [0, 0, 1, 1], [], []>} : vector<40x44xf32>, vector<44x128xf32>, vector<40x128xf32> -> vector<40x128xf32>
    %35 = arith.addf %30, %34 : vector<40x128xf32>
    %c6 = arith.constant 6 : index
    %c0_24 = arith.constant 0 : index
    %c0_25 = arith.constant 0 : index
    %36 = vector.load %arg4[%c6, %c0_24, %c0_25] : memref<50x40x44xf32, #tpu.memory_space<vmem>>, vector<1x40x44xf32>
    %37 = vector.shape_cast %36 : vector<1x40x44xf32> to vector<40x44xf32>
    %38 = vector.extract_strided_slice %4 {offsets = [0, 6], sizes = [44, 128], strides = [1, 1]} : vector<44x256xf32> to vector<44x128xf32>
    %cst_26 = arith.constant dense<0.000000e+00> : vector<40x128xf32>
    %39 = tpu.matmul %37, %38, %cst_26 {dimension_numbers = #tpu.dot_dimension_numbers<[1], [0], [0], [1], [0, 0, 1, 1], [], []>} : vector<40x44xf32>, vector<44x128xf32>, vector<40x128xf32> -> vector<40x128xf32>
    %40 = arith.addf %35, %39 : vector<40x128xf32>
    %c7 = arith.constant 7 : index
    %c0_27 = arith.constant 0 : index
    %c0_28 = arith.constant 0 : index
    %41 = vector.load %arg4[%c7, %c0_27, %c0_28] : memref<50x40x44xf32, #tpu.memory_space<vmem>>, vector<1x40x44xf32>
    %42 = vector.shape_cast %41 : vector<1x40x44xf32> to vector<40x44xf32>
    %43 = vector.extract_strided_slice %4 {offsets = [0, 7], sizes = [44, 128], strides = [1, 1]} : vector<44x256xf32> to vector<44x128xf32>
    %cst_29 = arith.constant dense<0.000000e+00> : vector<40x128xf32>
    %44 = tpu.matmul %42, %43, %cst_29 {dimension_numbers = #tpu.dot_dimension_numbers<[1], [0], [0], [1], [0, 0, 1, 1], [], []>} : vector<40x44xf32>, vector<44x128xf32>, vector<40x128xf32> -> vector<40x128xf32>
    %45 = arith.addf %40, %44 : vector<40x128xf32>
    %c8 = arith.constant 8 : index
    %c0_30 = arith.constant 0 : index
    %c0_31 = arith.constant 0 : index
    %46 = vector.load %arg4[%c8, %c0_30, %c0_31] : memref<50x40x44xf32, #tpu.memory_space<vmem>>, vector<1x40x44xf32>
    %47 = vector.shape_cast %46 : vector<1x40x44xf32> to vector<40x44xf32>
    %48 = vector.extract_strided_slice %4 {offsets = [0, 8], sizes = [44, 128], strides = [1, 1]} : vector<44x256xf32> to vector<44x128xf32>
    %cst_32 = arith.constant dense<0.000000e+00> : vector<40x128xf32>
    %49 = tpu.matmul %47, %48, %cst_32 {dimension_numbers = #tpu.dot_dimension_numbers<[1], [0], [0], [1], [0, 0, 1, 1], [], []>} : vector<40x44xf32>, vector<44x128xf32>, vector<40x128xf32> -> vector<40x128xf32>
    %50 = arith.addf %45, %49 : vector<40x128xf32>
    %c9 = arith.constant 9 : index
    %c0_33 = arith.constant 0 : index
    %c0_34 = arith.constant 0 : index
    %51 = vector.load %arg4[%c9, %c0_33, %c0_34] : memref<50x40x44xf32, #tpu.memory_space<vmem>>, vector<1x40x44xf32>
    %52 = vector.shape_cast %51 : vector<1x40x44xf32> to vector<40x44xf32>
    %53 = vector.extract_strided_slice %4 {offsets = [0, 9], sizes = [44, 128], strides = [1, 1]} : vector<44x256xf32> to vector<44x128xf32>
    %cst_35 = arith.constant dense<0.000000e+00> : vector<40x128xf32>
    %54 = tpu.matmul %52, %53, %cst_35 {dimension_numbers = #tpu.dot_dimension_numbers<[1], [0], [0], [1], [0, 0, 1, 1], [], []>} : vector<40x44xf32>, vector<44x128xf32>, vector<40x128xf32> -> vector<40x128xf32>
    %55 = arith.addf %50, %54 : vector<40x128xf32>
    %c10 = arith.constant 10 : index
    %c0_36 = arith.constant 0 : index
    %c0_37 = arith.constant 0 : index
    %56 = vector.load %arg4[%c10, %c0_36, %c0_37] : memref<50x40x44xf32, #tpu.memory_space<vmem>>, vector<1x40x44xf32>
    %57 = vector.shape_cast %56 : vector<1x40x44xf32> to vector<40x44xf32>
    %58 = vector.extract_strided_slice %4 {offsets = [0, 10], sizes = [44, 128], strides = [1, 1]} : vector<44x256xf32> to vector<44x128xf32>
    %cst_38 = arith.constant dense<0.000000e+00> : vector<40x128xf32>
    %59 = tpu.matmul %57, %58, %cst_38 {dimension_numbers = #tpu.dot_dimension_numbers<[1], [0], [0], [1], [0, 0, 1, 1], [], []>} : vector<40x44xf32>, vector<44x128xf32>, vector<40x128xf32> -> vector<40x128xf32>
    %60 = arith.addf %55, %59 : vector<40x128xf32>
    %c11 = arith.constant 11 : index
    %c0_39 = arith.constant 0 : index
    %c0_40 = arith.constant 0 : index
    %61 = vector.load %arg4[%c11, %c0_39, %c0_40] : memref<50x40x44xf32, #tpu.memory_space<vmem>>, vector<1x40x44xf32>
    %62 = vector.shape_cast %61 : vector<1x40x44xf32> to vector<40x44xf32>
    %63 = vector.extract_strided_slice %4 {offsets = [0, 11], sizes = [44, 128], strides = [1, 1]} : vector<44x256xf32> to vector<44x128xf32>
    %cst_41 = arith.constant dense<0.000000e+00> : vector<40x128xf32>
    %64 = tpu.matmul %62, %63, %cst_41 {dimension_numbers = #tpu.dot_dimension_numbers<[1], [0], [0], [1], [0, 0, 1, 1], [], []>} : vector<40x44xf32>, vector<44x128xf32>, vector<40x128xf32> -> vector<40x128xf32>
    %65 = arith.addf %60, %64 : vector<40x128xf32>
    %c12 = arith.constant 12 : index
    %c0_42 = arith.constant 0 : index
    %c0_43 = arith.constant 0 : index
    %66 = vector.load %arg4[%c12, %c0_42, %c0_43] : memref<50x40x44xf32, #tpu.memory_space<vmem>>, vector<1x40x44xf32>
    %67 = vector.shape_cast %66 : vector<1x40x44xf32> to vector<40x44xf32>
    %68 = vector.extract_strided_slice %4 {offsets = [0, 12], sizes = [44, 128], strides = [1, 1]} : vector<44x256xf32> to vector<44x128xf32>
    %cst_44 = arith.constant dense<0.000000e+00> : vector<40x128xf32>
    %69 = tpu.matmul %67, %68, %cst_44 {dimension_numbers = #tpu.dot_dimension_numbers<[1], [0], [0], [1], [0, 0, 1, 1], [], []>} : vector<40x44xf32>, vector<44x128xf32>, vector<40x128xf32> -> vector<40x128xf32>
    %70 = arith.addf %65, %69 : vector<40x128xf32>
    %c13 = arith.constant 13 : index
    %c0_45 = arith.constant 0 : index
    %c0_46 = arith.constant 0 : index
    %71 = vector.load %arg4[%c13, %c0_45, %c0_46] : memref<50x40x44xf32, #tpu.memory_space<vmem>>, vector<1x40x44xf32>
    %72 = vector.shape_cast %71 : vector<1x40x44xf32> to vector<40x44xf32>
    %73 = vector.extract_strided_slice %4 {offsets = [0, 13], sizes = [44, 128], strides = [1, 1]} : vector<44x256xf32> to vector<44x128xf32>
    %cst_47 = arith.constant dense<0.000000e+00> : vector<40x128xf32>
    %74 = tpu.matmul %72, %73, %cst_47 {dimension_numbers = #tpu.dot_dimension_numbers<[1], [0], [0], [1], [0, 0, 1, 1], [], []>} : vector<40x44xf32>, vector<44x128xf32>, vector<40x128xf32> -> vector<40x128xf32>
    %75 = arith.addf %70, %74 : vector<40x128xf32>
    %c14 = arith.constant 14 : index
    %c0_48 = arith.constant 0 : index
    %c0_49 = arith.constant 0 : index
    %76 = vector.load %arg4[%c14, %c0_48, %c0_49] : memref<50x40x44xf32, #tpu.memory_space<vmem>>, vector<1x40x44xf32>
    %77 = vector.shape_cast %76 : vector<1x40x44xf32> to vector<40x44xf32>
    %78 = vector.extract_strided_slice %4 {offsets = [0, 14], sizes = [44, 128], strides = [1, 1]} : vector<44x256xf32> to vector<44x128xf32>
    %cst_50 = arith.constant dense<0.000000e+00> : vector<40x128xf32>
    %79 = tpu.matmul %77, %78, %cst_50 {dimension_numbers = #tpu.dot_dimension_numbers<[1], [0], [0], [1], [0, 0, 1, 1], [], []>} : vector<40x44xf32>, vector<44x128xf32>, vector<40x128xf32> -> vector<40x128xf32>
    %80 = arith.addf %75, %79 : vector<40x128xf32>
    %c15 = arith.constant 15 : index
    %c0_51 = arith.constant 0 : index
    %c0_52 = arith.constant 0 : index
    %81 = vector.load %arg4[%c15, %c0_51, %c0_52] : memref<50x40x44xf32, #tpu.memory_space<vmem>>, vector<1x40x44xf32>
    %82 = vector.shape_cast %81 : vector<1x40x44xf32> to vector<40x44xf32>
    %83 = vector.extract_strided_slice %4 {offsets = [0, 15], sizes = [44, 128], strides = [1, 1]} : vector<44x256xf32> to vector<44x128xf32>
    %cst_53 = arith.constant dense<0.000000e+00> : vector<40x128xf32>
    %84 = tpu.matmul %82, %83, %cst_53 {dimension_numbers = #tpu.dot_dimension_numbers<[1], [0], [0], [1], [0, 0, 1, 1], [], []>} : vector<40x44xf32>, vector<44x128xf32>, vector<40x128xf32> -> vector<40x128xf32>
    %85 = arith.addf %80, %84 : vector<40x128xf32>
    %c16 = arith.constant 16 : index
    %c0_54 = arith.constant 0 : index
    %c0_55 = arith.constant 0 : index
    %86 = vector.load %arg4[%c16, %c0_54, %c0_55] : memref<50x40x44xf32, #tpu.memory_space<vmem>>, vector<1x40x44xf32>
    %87 = vector.shape_cast %86 : vector<1x40x44xf32> to vector<40x44xf32>
    %88 = vector.extract_strided_slice %4 {offsets = [0, 16], sizes = [44, 128], strides = [1, 1]} : vector<44x256xf32> to vector<44x128xf32>
    %cst_56 = arith.constant dense<0.000000e+00> : vector<40x128xf32>
    %89 = tpu.matmul %87, %88, %cst_56 {dimension_numbers = #tpu.dot_dimension_numbers<[1], [0], [0], [1], [0, 0, 1, 1], [], []>} : vector<40x44xf32>, vector<44x128xf32>, vector<40x128xf32> -> vector<40x128xf32>
    %90 = arith.addf %85, %89 : vector<40x128xf32>
    %c17 = arith.constant 17 : index
    %c0_57 = arith.constant 0 : index
    %c0_58 = arith.constant 0 : index
    %91 = vector.load %arg4[%c17, %c0_57, %c0_58] : memref<50x40x44xf32, #tpu.memory_space<vmem>>, vector<1x40x44xf32>
    %92 = vector.shape_cast %91 : vector<1x40x44xf32> to vector<40x44xf32>
    %93 = vector.extract_strided_slice %4 {offsets = [0, 17], sizes = [44, 128], strides = [1, 1]} : vector<44x256xf32> to vector<44x128xf32>
    %cst_59 = arith.constant dense<0.000000e+00> : vector<40x128xf32>
    %94 = tpu.matmul %92, %93, %cst_59 {dimension_numbers = #tpu.dot_dimension_numbers<[1], [0], [0], [1], [0, 0, 1, 1], [], []>} : vector<40x44xf32>, vector<44x128xf32>, vector<40x128xf32> -> vector<40x128xf32>
    %95 = arith.addf %90, %94 : vector<40x128xf32>
    %c18 = arith.constant 18 : index
    %c0_60 = arith.constant 0 : index
    %c0_61 = arith.constant 0 : index
    %96 = vector.load %arg4[%c18, %c0_60, %c0_61] : memref<50x40x44xf32, #tpu.memory_space<vmem>>, vector<1x40x44xf32>
    %97 = vector.shape_cast %96 : vector<1x40x44xf32> to vector<40x44xf32>
    %98 = vector.extract_strided_slice %4 {offsets = [0, 18], sizes = [44, 128], strides = [1, 1]} : vector<44x256xf32> to vector<44x128xf32>
    %cst_62 = arith.constant dense<0.000000e+00> : vector<40x128xf32>
    %99 = tpu.matmul %97, %98, %cst_62 {dimension_numbers = #tpu.dot_dimension_numbers<[1], [0], [0], [1], [0, 0, 1, 1], [], []>} : vector<40x44xf32>, vector<44x128xf32>, vector<40x128xf32> -> vector<40x128xf32>
    %100 = arith.addf %95, %99 : vector<40x128xf32>
    %c19 = arith.constant 19 : index
    %c0_63 = arith.constant 0 : index
    %c0_64 = arith.constant 0 : index
    %101 = vector.load %arg4[%c19, %c0_63, %c0_64] : memref<50x40x44xf32, #tpu.memory_space<vmem>>, vector<1x40x44xf32>
    %102 = vector.shape_cast %101 : vector<1x40x44xf32> to vector<40x44xf32>
    %103 = vector.extract_strided_slice %4 {offsets = [0, 19], sizes = [44, 128], strides = [1, 1]} : vector<44x256xf32> to vector<44x128xf32>
    %cst_65 = arith.constant dense<0.000000e+00> : vector<40x128xf32>
    %104 = tpu.matmul %102, %103, %cst_65 {dimension_numbers = #tpu.dot_dimension_numbers<[1], [0], [0], [1], [0, 0, 1, 1], [], []>} : vector<40x44xf32>, vector<44x128xf32>, vector<40x128xf32> -> vector<40x128xf32>
    %105 = arith.addf %100, %104 : vector<40x128xf32>
    %c20 = arith.constant 20 : index
    %c0_66 = arith.constant 0 : index
    %c0_67 = arith.constant 0 : index
    %106 = vector.load %arg4[%c20, %c0_66, %c0_67] : memref<50x40x44xf32, #tpu.memory_space<vmem>>, vector<1x40x44xf32>
    %107 = vector.shape_cast %106 : vector<1x40x44xf32> to vector<40x44xf32>
    %108 = vector.extract_strided_slice %4 {offsets = [0, 20], sizes = [44, 128], strides = [1, 1]} : vector<44x256xf32> to vector<44x128xf32>
    %cst_68 = arith.constant dense<0.000000e+00> : vector<40x128xf32>
    %109 = tpu.matmul %107, %108, %cst_68 {dimension_numbers = #tpu.dot_dimension_numbers<[1], [0], [0], [1], [0, 0, 1, 1], [], []>} : vector<40x44xf32>, vector<44x128xf32>, vector<40x128xf32> -> vector<40x128xf32>
    %110 = arith.addf %105, %109 : vector<40x128xf32>
    %c21 = arith.constant 21 : index
    %c0_69 = arith.constant 0 : index
    %c0_70 = arith.constant 0 : index
    %111 = vector.load %arg4[%c21, %c0_69, %c0_70] : memref<50x40x44xf32, #tpu.memory_space<vmem>>, vector<1x40x44xf32>
    %112 = vector.shape_cast %111 : vector<1x40x44xf32> to vector<40x44xf32>
    %113 = vector.extract_strided_slice %4 {offsets = [0, 21], sizes = [44, 128], strides = [1, 1]} : vector<44x256xf32> to vector<44x128xf32>
    %cst_71 = arith.constant dense<0.000000e+00> : vector<40x128xf32>
    %114 = tpu.matmul %112, %113, %cst_71 {dimension_numbers = #tpu.dot_dimension_numbers<[1], [0], [0], [1], [0, 0, 1, 1], [], []>} : vector<40x44xf32>, vector<44x128xf32>, vector<40x128xf32> -> vector<40x128xf32>
    %115 = arith.addf %110, %114 : vector<40x128xf32>
    %c22 = arith.constant 22 : index
    %c0_72 = arith.constant 0 : index
    %c0_73 = arith.constant 0 : index
    %116 = vector.load %arg4[%c22, %c0_72, %c0_73] : memref<50x40x44xf32, #tpu.memory_space<vmem>>, vector<1x40x44xf32>
    %117 = vector.shape_cast %116 : vector<1x40x44xf32> to vector<40x44xf32>
    %118 = vector.extract_strided_slice %4 {offsets = [0, 22], sizes = [44, 128], strides = [1, 1]} : vector<44x256xf32> to vector<44x128xf32>
    %cst_74 = arith.constant dense<0.000000e+00> : vector<40x128xf32>
    %119 = tpu.matmul %117, %118, %cst_74 {dimension_numbers = #tpu.dot_dimension_numbers<[1], [0], [0], [1], [0, 0, 1, 1], [], []>} : vector<40x44xf32>, vector<44x128xf32>, vector<40x128xf32> -> vector<40x128xf32>
    %120 = arith.addf %115, %119 : vector<40x128xf32>
    %c23 = arith.constant 23 : index
    %c0_75 = arith.constant 0 : index
    %c0_76 = arith.constant 0 : index
    %121 = vector.load %arg4[%c23, %c0_75, %c0_76] : memref<50x40x44xf32, #tpu.memory_space<vmem>>, vector<1x40x44xf32>
    %122 = vector.shape_cast %121 : vector<1x40x44xf32> to vector<40x44xf32>
    %123 = vector.extract_strided_slice %4 {offsets = [0, 23], sizes = [44, 128], strides = [1, 1]} : vector<44x256xf32> to vector<44x128xf32>
    %cst_77 = arith.constant dense<0.000000e+00> : vector<40x128xf32>
    %124 = tpu.matmul %122, %123, %cst_77 {dimension_numbers = #tpu.dot_dimension_numbers<[1], [0], [0], [1], [0, 0, 1, 1], [], []>} : vector<40x44xf32>, vector<44x128xf32>, vector<40x128xf32> -> vector<40x128xf32>
    %125 = arith.addf %120, %124 : vector<40x128xf32>
    %c24 = arith.constant 24 : index
    %c0_78 = arith.constant 0 : index
    %c0_79 = arith.constant 0 : index
    %126 = vector.load %arg4[%c24, %c0_78, %c0_79] : memref<50x40x44xf32, #tpu.memory_space<vmem>>, vector<1x40x44xf32>
    %127 = vector.shape_cast %126 : vector<1x40x44xf32> to vector<40x44xf32>
    %128 = vector.extract_strided_slice %4 {offsets = [0, 24], sizes = [44, 128], strides = [1, 1]} : vector<44x256xf32> to vector<44x128xf32>
    %cst_80 = arith.constant dense<0.000000e+00> : vector<40x128xf32>
    %129 = tpu.matmul %127, %128, %cst_80 {dimension_numbers = #tpu.dot_dimension_numbers<[1], [0], [0], [1], [0, 0, 1, 1], [], []>} : vector<40x44xf32>, vector<44x128xf32>, vector<40x128xf32> -> vector<40x128xf32>
    %130 = arith.addf %125, %129 : vector<40x128xf32>
    %c25 = arith.constant 25 : index
    %c0_81 = arith.constant 0 : index
    %c0_82 = arith.constant 0 : index
    %131 = vector.load %arg4[%c25, %c0_81, %c0_82] : memref<50x40x44xf32, #tpu.memory_space<vmem>>, vector<1x40x44xf32>
    %132 = vector.shape_cast %131 : vector<1x40x44xf32> to vector<40x44xf32>
    %133 = vector.extract_strided_slice %4 {offsets = [0, 25], sizes = [44, 128], strides = [1, 1]} : vector<44x256xf32> to vector<44x128xf32>
    %cst_83 = arith.constant dense<0.000000e+00> : vector<40x128xf32>
    %134 = tpu.matmul %132, %133, %cst_83 {dimension_numbers = #tpu.dot_dimension_numbers<[1], [0], [0], [1], [0, 0, 1, 1], [], []>} : vector<40x44xf32>, vector<44x128xf32>, vector<40x128xf32> -> vector<40x128xf32>
    %135 = arith.addf %130, %134 : vector<40x128xf32>
    %c26 = arith.constant 26 : index
    %c0_84 = arith.constant 0 : index
    %c0_85 = arith.constant 0 : index
    %136 = vector.load %arg4[%c26, %c0_84, %c0_85] : memref<50x40x44xf32, #tpu.memory_space<vmem>>, vector<1x40x44xf32>
    %137 = vector.shape_cast %136 : vector<1x40x44xf32> to vector<40x44xf32>
    %138 = vector.extract_strided_slice %4 {offsets = [0, 26], sizes = [44, 128], strides = [1, 1]} : vector<44x256xf32> to vector<44x128xf32>
    %cst_86 = arith.constant dense<0.000000e+00> : vector<40x128xf32>
    %139 = tpu.matmul %137, %138, %cst_86 {dimension_numbers = #tpu.dot_dimension_numbers<[1], [0], [0], [1], [0, 0, 1, 1], [], []>} : vector<40x44xf32>, vector<44x128xf32>, vector<40x128xf32> -> vector<40x128xf32>
    %140 = arith.addf %135, %139 : vector<40x128xf32>
    %c27 = arith.constant 27 : index
    %c0_87 = arith.constant 0 : index
    %c0_88 = arith.constant 0 : index
    %141 = vector.load %arg4[%c27, %c0_87, %c0_88] : memref<50x40x44xf32, #tpu.memory_space<vmem>>, vector<1x40x44xf32>
    %142 = vector.shape_cast %141 : vector<1x40x44xf32> to vector<40x44xf32>
    %143 = vector.extract_strided_slice %4 {offsets = [0, 27], sizes = [44, 128], strides = [1, 1]} : vector<44x256xf32> to vector<44x128xf32>
    %cst_89 = arith.constant dense<0.000000e+00> : vector<40x128xf32>
    %144 = tpu.matmul %142, %143, %cst_89 {dimension_numbers = #tpu.dot_dimension_numbers<[1], [0], [0], [1], [0, 0, 1, 1], [], []>} : vector<40x44xf32>, vector<44x128xf32>, vector<40x128xf32> -> vector<40x128xf32>
    %145 = arith.addf %140, %144 : vector<40x128xf32>
    %c28 = arith.constant 28 : index
    %c0_90 = arith.constant 0 : index
    %c0_91 = arith.constant 0 : index
    %146 = vector.load %arg4[%c28, %c0_90, %c0_91] : memref<50x40x44xf32, #tpu.memory_space<vmem>>, vector<1x40x44xf32>
    %147 = vector.shape_cast %146 : vector<1x40x44xf32> to vector<40x44xf32>
    %148 = vector.extract_strided_slice %4 {offsets = [0, 28], sizes = [44, 128], strides = [1, 1]} : vector<44x256xf32> to vector<44x128xf32>
    %cst_92 = arith.constant dense<0.000000e+00> : vector<40x128xf32>
    %149 = tpu.matmul %147, %148, %cst_92 {dimension_numbers = #tpu.dot_dimension_numbers<[1], [0], [0], [1], [0, 0, 1, 1], [], []>} : vector<40x44xf32>, vector<44x128xf32>, vector<40x128xf32> -> vector<40x128xf32>
    %150 = arith.addf %145, %149 : vector<40x128xf32>
    %c29 = arith.constant 29 : index
    %c0_93 = arith.constant 0 : index
    %c0_94 = arith.constant 0 : index
    %151 = vector.load %arg4[%c29, %c0_93, %c0_94] : memref<50x40x44xf32, #tpu.memory_space<vmem>>, vector<1x40x44xf32>
    %152 = vector.shape_cast %151 : vector<1x40x44xf32> to vector<40x44xf32>
    %153 = vector.extract_strided_slice %4 {offsets = [0, 29], sizes = [44, 128], strides = [1, 1]} : vector<44x256xf32> to vector<44x128xf32>
    %cst_95 = arith.constant dense<0.000000e+00> : vector<40x128xf32>
    %154 = tpu.matmul %152, %153, %cst_95 {dimension_numbers = #tpu.dot_dimension_numbers<[1], [0], [0], [1], [0, 0, 1, 1], [], []>} : vector<40x44xf32>, vector<44x128xf32>, vector<40x128xf32> -> vector<40x128xf32>
    %155 = arith.addf %150, %154 : vector<40x128xf32>
    %c30 = arith.constant 30 : index
    %c0_96 = arith.constant 0 : index
    %c0_97 = arith.constant 0 : index
    %156 = vector.load %arg4[%c30, %c0_96, %c0_97] : memref<50x40x44xf32, #tpu.memory_space<vmem>>, vector<1x40x44xf32>
    %157 = vector.shape_cast %156 : vector<1x40x44xf32> to vector<40x44xf32>
    %158 = vector.extract_strided_slice %4 {offsets = [0, 30], sizes = [44, 128], strides = [1, 1]} : vector<44x256xf32> to vector<44x128xf32>
    %cst_98 = arith.constant dense<0.000000e+00> : vector<40x128xf32>
    %159 = tpu.matmul %157, %158, %cst_98 {dimension_numbers = #tpu.dot_dimension_numbers<[1], [0], [0], [1], [0, 0, 1, 1], [], []>} : vector<40x44xf32>, vector<44x128xf32>, vector<40x128xf32> -> vector<40x128xf32>
    %160 = arith.addf %155, %159 : vector<40x128xf32>
    %c31 = arith.constant 31 : index
    %c0_99 = arith.constant 0 : index
    %c0_100 = arith.constant 0 : index
    %161 = vector.load %arg4[%c31, %c0_99, %c0_100] : memref<50x40x44xf32, #tpu.memory_space<vmem>>, vector<1x40x44xf32>
    %162 = vector.shape_cast %161 : vector<1x40x44xf32> to vector<40x44xf32>
    %163 = vector.extract_strided_slice %4 {offsets = [0, 31], sizes = [44, 128], strides = [1, 1]} : vector<44x256xf32> to vector<44x128xf32>
    %cst_101 = arith.constant dense<0.000000e+00> : vector<40x128xf32>
    %164 = tpu.matmul %162, %163, %cst_101 {dimension_numbers = #tpu.dot_dimension_numbers<[1], [0], [0], [1], [0, 0, 1, 1], [], []>} : vector<40x44xf32>, vector<44x128xf32>, vector<40x128xf32> -> vector<40x128xf32>
    %165 = arith.addf %160, %164 : vector<40x128xf32>
    %c32 = arith.constant 32 : index
    %c0_102 = arith.constant 0 : index
    %c0_103 = arith.constant 0 : index
    %166 = vector.load %arg4[%c32, %c0_102, %c0_103] : memref<50x40x44xf32, #tpu.memory_space<vmem>>, vector<1x40x44xf32>
    %167 = vector.shape_cast %166 : vector<1x40x44xf32> to vector<40x44xf32>
    %168 = vector.extract_strided_slice %4 {offsets = [0, 32], sizes = [44, 128], strides = [1, 1]} : vector<44x256xf32> to vector<44x128xf32>
    %cst_104 = arith.constant dense<0.000000e+00> : vector<40x128xf32>
    %169 = tpu.matmul %167, %168, %cst_104 {dimension_numbers = #tpu.dot_dimension_numbers<[1], [0], [0], [1], [0, 0, 1, 1], [], []>} : vector<40x44xf32>, vector<44x128xf32>, vector<40x128xf32> -> vector<40x128xf32>
    %170 = arith.addf %165, %169 : vector<40x128xf32>
    %c33 = arith.constant 33 : index
    %c0_105 = arith.constant 0 : index
    %c0_106 = arith.constant 0 : index
    %171 = vector.load %arg4[%c33, %c0_105, %c0_106] : memref<50x40x44xf32, #tpu.memory_space<vmem>>, vector<1x40x44xf32>
    %172 = vector.shape_cast %171 : vector<1x40x44xf32> to vector<40x44xf32>
    %173 = vector.extract_strided_slice %4 {offsets = [0, 33], sizes = [44, 128], strides = [1, 1]} : vector<44x256xf32> to vector<44x128xf32>
    %cst_107 = arith.constant dense<0.000000e+00> : vector<40x128xf32>
    %174 = tpu.matmul %172, %173, %cst_107 {dimension_numbers = #tpu.dot_dimension_numbers<[1], [0], [0], [1], [0, 0, 1, 1], [], []>} : vector<40x44xf32>, vector<44x128xf32>, vector<40x128xf32> -> vector<40x128xf32>
    %175 = arith.addf %170, %174 : vector<40x128xf32>
    %c34 = arith.constant 34 : index
    %c0_108 = arith.constant 0 : index
    %c0_109 = arith.constant 0 : index
    %176 = vector.load %arg4[%c34, %c0_108, %c0_109] : memref<50x40x44xf32, #tpu.memory_space<vmem>>, vector<1x40x44xf32>
    %177 = vector.shape_cast %176 : vector<1x40x44xf32> to vector<40x44xf32>
    %178 = vector.extract_strided_slice %4 {offsets = [0, 34], sizes = [44, 128], strides = [1, 1]} : vector<44x256xf32> to vector<44x128xf32>
    %cst_110 = arith.constant dense<0.000000e+00> : vector<40x128xf32>
    %179 = tpu.matmul %177, %178, %cst_110 {dimension_numbers = #tpu.dot_dimension_numbers<[1], [0], [0], [1], [0, 0, 1, 1], [], []>} : vector<40x44xf32>, vector<44x128xf32>, vector<40x128xf32> -> vector<40x128xf32>
    %180 = arith.addf %175, %179 : vector<40x128xf32>
    %c35 = arith.constant 35 : index
    %c0_111 = arith.constant 0 : index
    %c0_112 = arith.constant 0 : index
    %181 = vector.load %arg4[%c35, %c0_111, %c0_112] : memref<50x40x44xf32, #tpu.memory_space<vmem>>, vector<1x40x44xf32>
    %182 = vector.shape_cast %181 : vector<1x40x44xf32> to vector<40x44xf32>
    %183 = vector.extract_strided_slice %4 {offsets = [0, 35], sizes = [44, 128], strides = [1, 1]} : vector<44x256xf32> to vector<44x128xf32>
    %cst_113 = arith.constant dense<0.000000e+00> : vector<40x128xf32>
    %184 = tpu.matmul %182, %183, %cst_113 {dimension_numbers = #tpu.dot_dimension_numbers<[1], [0], [0], [1], [0, 0, 1, 1], [], []>} : vector<40x44xf32>, vector<44x128xf32>, vector<40x128xf32> -> vector<40x128xf32>
    %185 = arith.addf %180, %184 : vector<40x128xf32>
    %c36 = arith.constant 36 : index
    %c0_114 = arith.constant 0 : index
    %c0_115 = arith.constant 0 : index
    %186 = vector.load %arg4[%c36, %c0_114, %c0_115] : memref<50x40x44xf32, #tpu.memory_space<vmem>>, vector<1x40x44xf32>
    %187 = vector.shape_cast %186 : vector<1x40x44xf32> to vector<40x44xf32>
    %188 = vector.extract_strided_slice %4 {offsets = [0, 36], sizes = [44, 128], strides = [1, 1]} : vector<44x256xf32> to vector<44x128xf32>
    %cst_116 = arith.constant dense<0.000000e+00> : vector<40x128xf32>
    %189 = tpu.matmul %187, %188, %cst_116 {dimension_numbers = #tpu.dot_dimension_numbers<[1], [0], [0], [1], [0, 0, 1, 1], [], []>} : vector<40x44xf32>, vector<44x128xf32>, vector<40x128xf32> -> vector<40x128xf32>
    %190 = arith.addf %185, %189 : vector<40x128xf32>
    %c37 = arith.constant 37 : index
    %c0_117 = arith.constant 0 : index
    %c0_118 = arith.constant 0 : index
    %191 = vector.load %arg4[%c37, %c0_117, %c0_118] : memref<50x40x44xf32, #tpu.memory_space<vmem>>, vector<1x40x44xf32>
    %192 = vector.shape_cast %191 : vector<1x40x44xf32> to vector<40x44xf32>
    %193 = vector.extract_strided_slice %4 {offsets = [0, 37], sizes = [44, 128], strides = [1, 1]} : vector<44x256xf32> to vector<44x128xf32>
    %cst_119 = arith.constant dense<0.000000e+00> : vector<40x128xf32>
    %194 = tpu.matmul %192, %193, %cst_119 {dimension_numbers = #tpu.dot_dimension_numbers<[1], [0], [0], [1], [0, 0, 1, 1], [], []>} : vector<40x44xf32>, vector<44x128xf32>, vector<40x128xf32> -> vector<40x128xf32>
    %195 = arith.addf %190, %194 : vector<40x128xf32>
    %c38 = arith.constant 38 : index
    %c0_120 = arith.constant 0 : index
    %c0_121 = arith.constant 0 : index
    %196 = vector.load %arg4[%c38, %c0_120, %c0_121] : memref<50x40x44xf32, #tpu.memory_space<vmem>>, vector<1x40x44xf32>
    %197 = vector.shape_cast %196 : vector<1x40x44xf32> to vector<40x44xf32>
    %198 = vector.extract_strided_slice %4 {offsets = [0, 38], sizes = [44, 128], strides = [1, 1]} : vector<44x256xf32> to vector<44x128xf32>
    %cst_122 = arith.constant dense<0.000000e+00> : vector<40x128xf32>
    %199 = tpu.matmul %197, %198, %cst_122 {dimension_numbers = #tpu.dot_dimension_numbers<[1], [0], [0], [1], [0, 0, 1, 1], [], []>} : vector<40x44xf32>, vector<44x128xf32>, vector<40x128xf32> -> vector<40x128xf32>
    %200 = arith.addf %195, %199 : vector<40x128xf32>
    %c39 = arith.constant 39 : index
    %c0_123 = arith.constant 0 : index
    %c0_124 = arith.constant 0 : index
    %201 = vector.load %arg4[%c39, %c0_123, %c0_124] : memref<50x40x44xf32, #tpu.memory_space<vmem>>, vector<1x40x44xf32>
    %202 = vector.shape_cast %201 : vector<1x40x44xf32> to vector<40x44xf32>
    %203 = vector.extract_strided_slice %4 {offsets = [0, 39], sizes = [44, 128], strides = [1, 1]} : vector<44x256xf32> to vector<44x128xf32>
    %cst_125 = arith.constant dense<0.000000e+00> : vector<40x128xf32>
    %204 = tpu.matmul %202, %203, %cst_125 {dimension_numbers = #tpu.dot_dimension_numbers<[1], [0], [0], [1], [0, 0, 1, 1], [], []>} : vector<40x44xf32>, vector<44x128xf32>, vector<40x128xf32> -> vector<40x128xf32>
    %205 = arith.addf %200, %204 : vector<40x128xf32>
    %c40 = arith.constant 40 : index
    %c0_126 = arith.constant 0 : index
    %c0_127 = arith.constant 0 : index
    %206 = vector.load %arg4[%c40, %c0_126, %c0_127] : memref<50x40x44xf32, #tpu.memory_space<vmem>>, vector<1x40x44xf32>
    %207 = vector.shape_cast %206 : vector<1x40x44xf32> to vector<40x44xf32>
    %208 = vector.extract_strided_slice %4 {offsets = [0, 40], sizes = [44, 128], strides = [1, 1]} : vector<44x256xf32> to vector<44x128xf32>
    %cst_128 = arith.constant dense<0.000000e+00> : vector<40x128xf32>
    %209 = tpu.matmul %207, %208, %cst_128 {dimension_numbers = #tpu.dot_dimension_numbers<[1], [0], [0], [1], [0, 0, 1, 1], [], []>} : vector<40x44xf32>, vector<44x128xf32>, vector<40x128xf32> -> vector<40x128xf32>
    %210 = arith.addf %205, %209 : vector<40x128xf32>
    %c41 = arith.constant 41 : index
    %c0_129 = arith.constant 0 : index
    %c0_130 = arith.constant 0 : index
    %211 = vector.load %arg4[%c41, %c0_129, %c0_130] : memref<50x40x44xf32, #tpu.memory_space<vmem>>, vector<1x40x44xf32>
    %212 = vector.shape_cast %211 : vector<1x40x44xf32> to vector<40x44xf32>
    %213 = vector.extract_strided_slice %4 {offsets = [0, 41], sizes = [44, 128], strides = [1, 1]} : vector<44x256xf32> to vector<44x128xf32>
    %cst_131 = arith.constant dense<0.000000e+00> : vector<40x128xf32>
    %214 = tpu.matmul %212, %213, %cst_131 {dimension_numbers = #tpu.dot_dimension_numbers<[1], [0], [0], [1], [0, 0, 1, 1], [], []>} : vector<40x44xf32>, vector<44x128xf32>, vector<40x128xf32> -> vector<40x128xf32>
    %215 = arith.addf %210, %214 : vector<40x128xf32>
    %c42 = arith.constant 42 : index
    %c0_132 = arith.constant 0 : index
    %c0_133 = arith.constant 0 : index
    %216 = vector.load %arg4[%c42, %c0_132, %c0_133] : memref<50x40x44xf32, #tpu.memory_space<vmem>>, vector<1x40x44xf32>
    %217 = vector.shape_cast %216 : vector<1x40x44xf32> to vector<40x44xf32>
    %218 = vector.extract_strided_slice %4 {offsets = [0, 42], sizes = [44, 128], strides = [1, 1]} : vector<44x256xf32> to vector<44x128xf32>
    %cst_134 = arith.constant dense<0.000000e+00> : vector<40x128xf32>
    %219 = tpu.matmul %217, %218, %cst_134 {dimension_numbers = #tpu.dot_dimension_numbers<[1], [0], [0], [1], [0, 0, 1, 1], [], []>} : vector<40x44xf32>, vector<44x128xf32>, vector<40x128xf32> -> vector<40x128xf32>
    %220 = arith.addf %215, %219 : vector<40x128xf32>
    %c43 = arith.constant 43 : index
    %c0_135 = arith.constant 0 : index
    %c0_136 = arith.constant 0 : index
    %221 = vector.load %arg4[%c43, %c0_135, %c0_136] : memref<50x40x44xf32, #tpu.memory_space<vmem>>, vector<1x40x44xf32>
    %222 = vector.shape_cast %221 : vector<1x40x44xf32> to vector<40x44xf32>
    %223 = vector.extract_strided_slice %4 {offsets = [0, 43], sizes = [44, 128], strides = [1, 1]} : vector<44x256xf32> to vector<44x128xf32>
    %cst_137 = arith.constant dense<0.000000e+00> : vector<40x128xf32>
    %224 = tpu.matmul %222, %223, %cst_137 {dimension_numbers = #tpu.dot_dimension_numbers<[1], [0], [0], [1], [0, 0, 1, 1], [], []>} : vector<40x44xf32>, vector<44x128xf32>, vector<40x128xf32> -> vector<40x128xf32>
    %225 = arith.addf %220, %224 : vector<40x128xf32>
    %c44 = arith.constant 44 : index
    %c0_138 = arith.constant 0 : index
    %c0_139 = arith.constant 0 : index
    %226 = vector.load %arg4[%c44, %c0_138, %c0_139] : memref<50x40x44xf32, #tpu.memory_space<vmem>>, vector<1x40x44xf32>
    %227 = vector.shape_cast %226 : vector<1x40x44xf32> to vector<40x44xf32>
    %228 = vector.extract_strided_slice %4 {offsets = [0, 44], sizes = [44, 128], strides = [1, 1]} : vector<44x256xf32> to vector<44x128xf32>
    %cst_140 = arith.constant dense<0.000000e+00> : vector<40x128xf32>
    %229 = tpu.matmul %227, %228, %cst_140 {dimension_numbers = #tpu.dot_dimension_numbers<[1], [0], [0], [1], [0, 0, 1, 1], [], []>} : vector<40x44xf32>, vector<44x128xf32>, vector<40x128xf32> -> vector<40x128xf32>
    %230 = arith.addf %225, %229 : vector<40x128xf32>
    %c45 = arith.constant 45 : index
    %c0_141 = arith.constant 0 : index
    %c0_142 = arith.constant 0 : index
    %231 = vector.load %arg4[%c45, %c0_141, %c0_142] : memref<50x40x44xf32, #tpu.memory_space<vmem>>, vector<1x40x44xf32>
    %232 = vector.shape_cast %231 : vector<1x40x44xf32> to vector<40x44xf32>
    %233 = vector.extract_strided_slice %4 {offsets = [0, 45], sizes = [44, 128], strides = [1, 1]} : vector<44x256xf32> to vector<44x128xf32>
    %cst_143 = arith.constant dense<0.000000e+00> : vector<40x128xf32>
    %234 = tpu.matmul %232, %233, %cst_143 {dimension_numbers = #tpu.dot_dimension_numbers<[1], [0], [0], [1], [0, 0, 1, 1], [], []>} : vector<40x44xf32>, vector<44x128xf32>, vector<40x128xf32> -> vector<40x128xf32>
    %235 = arith.addf %230, %234 : vector<40x128xf32>
    %c46 = arith.constant 46 : index
    %c0_144 = arith.constant 0 : index
    %c0_145 = arith.constant 0 : index
    %236 = vector.load %arg4[%c46, %c0_144, %c0_145] : memref<50x40x44xf32, #tpu.memory_space<vmem>>, vector<1x40x44xf32>
    %237 = vector.shape_cast %236 : vector<1x40x44xf32> to vector<40x44xf32>
    %238 = vector.extract_strided_slice %4 {offsets = [0, 46], sizes = [44, 128], strides = [1, 1]} : vector<44x256xf32> to vector<44x128xf32>
    %cst_146 = arith.constant dense<0.000000e+00> : vector<40x128xf32>
    %239 = tpu.matmul %237, %238, %cst_146 {dimension_numbers = #tpu.dot_dimension_numbers<[1], [0], [0], [1], [0, 0, 1, 1], [], []>} : vector<40x44xf32>, vector<44x128xf32>, vector<40x128xf32> -> vector<40x128xf32>
    %240 = arith.addf %235, %239 : vector<40x128xf32>
    %c47 = arith.constant 47 : index
    %c0_147 = arith.constant 0 : index
    %c0_148 = arith.constant 0 : index
    %241 = vector.load %arg4[%c47, %c0_147, %c0_148] : memref<50x40x44xf32, #tpu.memory_space<vmem>>, vector<1x40x44xf32>
    %242 = vector.shape_cast %241 : vector<1x40x44xf32> to vector<40x44xf32>
    %243 = vector.extract_strided_slice %4 {offsets = [0, 47], sizes = [44, 128], strides = [1, 1]} : vector<44x256xf32> to vector<44x128xf32>
    %cst_149 = arith.constant dense<0.000000e+00> : vector<40x128xf32>
    %244 = tpu.matmul %242, %243, %cst_149 {dimension_numbers = #tpu.dot_dimension_numbers<[1], [0], [0], [1], [0, 0, 1, 1], [], []>} : vector<40x44xf32>, vector<44x128xf32>, vector<40x128xf32> -> vector<40x128xf32>
    %245 = arith.addf %240, %244 : vector<40x128xf32>
    %c48 = arith.constant 48 : index
    %c0_150 = arith.constant 0 : index
    %c0_151 = arith.constant 0 : index
    %246 = vector.load %arg4[%c48, %c0_150, %c0_151] : memref<50x40x44xf32, #tpu.memory_space<vmem>>, vector<1x40x44xf32>
    %247 = vector.shape_cast %246 : vector<1x40x44xf32> to vector<40x44xf32>
    %248 = vector.extract_strided_slice %4 {offsets = [0, 48], sizes = [44, 128], strides = [1, 1]} : vector<44x256xf32> to vector<44x128xf32>
    %cst_152 = arith.constant dense<0.000000e+00> : vector<40x128xf32>
    %249 = tpu.matmul %247, %248, %cst_152 {dimension_numbers = #tpu.dot_dimension_numbers<[1], [0], [0], [1], [0, 0, 1, 1], [], []>} : vector<40x44xf32>, vector<44x128xf32>, vector<40x128xf32> -> vector<40x128xf32>
    %250 = arith.addf %245, %249 : vector<40x128xf32>
    %c49 = arith.constant 49 : index
    %c0_153 = arith.constant 0 : index
    %c0_154 = arith.constant 0 : index
    %251 = vector.load %arg4[%c49, %c0_153, %c0_154] : memref<50x40x44xf32, #tpu.memory_space<vmem>>, vector<1x40x44xf32>
    %252 = vector.shape_cast %251 : vector<1x40x44xf32> to vector<40x44xf32>
    %253 = vector.extract_strided_slice %4 {offsets = [0, 49], sizes = [44, 128], strides = [1, 1]} : vector<44x256xf32> to vector<44x128xf32>
    %cst_155 = arith.constant dense<0.000000e+00> : vector<40x128xf32>
    %254 = tpu.matmul %252, %253, %cst_155 {dimension_numbers = #tpu.dot_dimension_numbers<[1], [0], [0], [1], [0, 0, 1, 1], [], []>} : vector<40x44xf32>, vector<44x128xf32>, vector<40x128xf32> -> vector<40x128xf32>
    %255 = arith.addf %250, %254 : vector<40x128xf32>
    %c0_156 = arith.constant 0 : index
    %c0_157 = arith.constant 0 : index
    %256 = vector.load %arg5[%c0_156, %c0_157] : memref<40x1xf32, #tpu.memory_space<vmem>>, vector<40x1xf32>
    %257 = vector.broadcast %256 : vector<40x1xf32> to vector<40x128xf32>
    %258 = arith.addf %255, %257 : vector<40x128xf32>
    %c0_158 = arith.constant 0 : index
    %c0_159 = arith.constant 0 : index
    %c0_160 = arith.constant 0 : index
    %259 = vector.load %arg6[%c0_158, %c0_159, %c0_160] : memref<1x40x128xf32, #tpu.memory_space<vmem>>, vector<1x40x128xf32>
    %260 = vector.shape_cast %259 : vector<1x40x128xf32> to vector<40x128xf32>
    %261 = vector.shape_cast %258 : vector<40x128xf32> to vector<1x40x128xf32>
    tpu.vector_store %arg6[%c0_158, %c0_159, %c0_160], %261 {strides = array<i32>} : memref<1x40x128xf32, #tpu.memory_space<vmem>>, vector<1x40x128xf32>,
    %c128_i32 = arith.constant 128 : i32
    %262 = arith.muli %arg1, %c128_i32 : i32
    %263 = tpu.iota {dimensions = array<i32: 1>} : vector<1x128xi32>
    %264 = vector.broadcast %262 : i32 to vector<1x128xi32>
    %265 = arith.addi %264, %263 : vector<1x128xi32>
    %c240_i32 = arith.constant 240 : i32
    %266 = vector.broadcast %c240_i32 : i32 to vector<1x128xi32>
    %267 = arith.cmpi slt, %265, %266 : vector<1x128xi32>
    %cst_161 = arith.constant 0.000000e+00 : f32
    %268 = vector.shape_cast %267 : vector<1x128xi1> to vector<1x128xi1>
    %269 = vector.broadcast %268 : vector<1x128xi1> to vector<40x128xi1>
    %270 = vector.broadcast %cst_161 : f32 to vector<40x128xf32>
    %271 = arith.select %269, %258, %270 : vector<40x128xi1>, vector<40x128xf32>
    %cst_162 = arith.constant dense<0.000000e+00> : vector<40xf32>
    %272 = vector.multi_reduction <add>, %271, %cst_162 [1] : vector<40x128xf32> to vector<40xf32>
    %273 = vector.shape_cast %272 : vector<40xf32> to vector<40x1xf32>
    %c0_163 = arith.constant 0 : index
    %c0_164 = arith.constant 0 : index
    %c0_165 = arith.constant 0 : index
    %c0_166 = arith.constant 0 : index
    %274 = vector.load %arg7[%c0_163, %c0_164, %c0_165, %c0_166] : memref<1x1x40x2xf32, #tpu.memory_space<vmem>>, vector<1x1x40x1xf32>
    %275 = vector.shape_cast %274 : vector<1x1x40x1xf32> to vector<40x1xf32>
    %276 = vector.shape_cast %273 : vector<40x1xf32> to vector<1x1x40x1xf32>
    tpu.vector_store %arg7[%c0_163, %c0_164, %c0_165, %c0_166], %276 {strides = array<i32>} : memref<1x1x40x2xf32, #tpu.memory_space<vmem>>, vector<1x1x40x1xf32>,
    %277 = arith.mulf %271, %271 : vector<40x128xf32>
    %cst_167 = arith.constant dense<0.000000e+00> : vector<40xf32>
    %278 = vector.multi_reduction <add>, %277, %cst_167 [1] : vector<40x128xf32> to vector<40xf32>
    %279 = vector.shape_cast %278 : vector<40xf32> to vector<40x1xf32>
    %c0_168 = arith.constant 0 : index
    %c0_169 = arith.constant 0 : index
    %c0_170 = arith.constant 0 : index
    %c1_171 = arith.constant 1 : index
    %280 = vector.load %arg7[%c0_168, %c0_169, %c0_170, %c1_171] : memref<1x1x40x2xf32, #tpu.memory_space<vmem>>, vector<1x1x40x1xf32>
    %281 = vector.shape_cast %280 : vector<1x1x40x1xf32> to vector<40x1xf32>
    %282 = vector.shape_cast %279 : vector<40x1xf32> to vector<1x1x40x1xf32>
    tpu.vector_store %arg7[%c0_168, %c0_169, %c0_170, %c1_171], %282 {strides = array<i32>} : memref<1x1x40x2xf32, #tpu.memory_space<vmem>>, vector<1x1x40x1xf32>,
    return
  }
  func.func @transform_0(%arg0: i32, %arg1: i32) -> (i32, i32, i32) {
    %c0_i32 = arith.constant 0 : i32
    %c0_i32_0 = arith.constant 0 : i32
    return %arg0, %c0_i32, %arg1 : i32, i32, i32
  }
  func.func @transform_1(%arg0: i32, %arg1: i32) -> (i32, i32, i32) {
    %c1_i32 = arith.constant 1 : i32
    %0 = arith.addi %arg1, %c1_i32 : i32
    %c0_i32 = arith.constant 0 : i32
    %c0_i32_0 = arith.constant 0 : i32
    return %arg0, %c0_i32, %0 : i32, i32, i32
  }
  func.func @transform_2(%arg0: i32, %arg1: i32) -> (i32, i32, i32) {
    %c0_i32 = arith.constant 0 : i32
    %c0_i32_0 = arith.constant 0 : i32
    %c0_i32_1 = arith.constant 0 : i32
    %c0_i32_2 = arith.constant 0 : i32
    return %c0_i32, %c0_i32_0, %c0_i32_1 : i32, i32, i32
  }
  func.func @transform_3(%arg0: i32, %arg1: i32) -> (i32, i32) {
    %c0_i32 = arith.constant 0 : i32
    %c0_i32_0 = arith.constant 0 : i32
    %c0_i32_1 = arith.constant 0 : i32
    return %c0_i32, %c0_i32_0 : i32, i32
  }
  func.func @transform_4(%arg0: i32, %arg1: i32) -> (i32, i32, i32) {
    %c0_i32 = arith.constant 0 : i32
    %c0_i32_0 = arith.constant 0 : i32
    return %arg0, %c0_i32, %arg1 : i32, i32, i32
  }
  func.func @transform_5(%arg0: i32, %arg1: i32) -> (i32, i32, i32, i32) {
    %c0_i32 = arith.constant 0 : i32
    %c0_i32_0 = arith.constant 0 : i32
    %c0_i32_1 = arith.constant 0 : i32
    return %arg0, %arg1, %c0_i32, %c0_i32_0 : i32, i32, i32, i32
  }
}

module attributes {stable_mosaic.version = 11 : i64} {
  func.func @_head_kernel(%arg0: i32, %arg1: memref<1x40x256xf32, #tpu.memory_space<vmem>>, %arg2: memref<40x1xf32, #tpu.memory_space<vmem>>, %arg3: memref<40x1xf32, #tpu.memory_space<vmem>>, %arg4: memref<256x2xf32, #tpu.memory_space<vmem>>, %arg5: memref<1x40x2xf32, #tpu.memory_space<vmem>>) attributes {dimension_semantics = [#tpu.dimension_semantics<parallel>], iteration_bounds = array<i64: 2>, scalar_prefetch = 0 : i64, scratch_operands = 0 : i64, tpu.core_type = #tpu.core_type<tc>, window_params = [{transform_indices = @transform_0, window_bounds = array<i64: 1, 40, 256>}, {pipeline_mode = #tpu.pipeline_mode<synchronous>, transform_indices = @transform_1, window_bounds = array<i64: 40, 1>}, {pipeline_mode = #tpu.pipeline_mode<synchronous>, transform_indices = @transform_2, window_bounds = array<i64: 40, 1>}, {pipeline_mode = #tpu.pipeline_mode<synchronous>, transform_indices = @transform_3, window_bounds = array<i64: 256, 2>}, {transform_indices = @transform_4, window_bounds = array<i64: 1, 40, 2>}]} {
    %c0 = arith.constant 0 : index
    %c0_0 = arith.constant 0 : index
    %c0_1 = arith.constant 0 : index
    %0 = vector.load %arg1[%c0, %c0_0, %c0_1] : memref<1x40x256xf32, #tpu.memory_space<vmem>>, vector<1x40x256xf32>
    %1 = vector.shape_cast %0 : vector<1x40x256xf32> to vector<40x256xf32>
    %c0_2 = arith.constant 0 : index
    %c0_3 = arith.constant 0 : index
    %2 = vector.load %arg2[%c0_2, %c0_3] : memref<40x1xf32, #tpu.memory_space<vmem>>, vector<40x1xf32>
    %3 = vector.broadcast %2 : vector<40x1xf32> to vector<40x256xf32>
    %4 = arith.mulf %1, %3 : vector<40x256xf32>
    %c0_4 = arith.constant 0 : index
    %c0_5 = arith.constant 0 : index
    %5 = vector.load %arg3[%c0_4, %c0_5] : memref<40x1xf32, #tpu.memory_space<vmem>>, vector<40x1xf32>
    %6 = vector.broadcast %5 : vector<40x1xf32> to vector<40x256xf32>
    %7 = arith.addf %4, %6 : vector<40x256xf32>
    %8 = arith.mulf %7, %7 : vector<40x256xf32>
    %c0_6 = arith.constant 0 : index
    %c0_7 = arith.constant 0 : index
    %9 = vector.load %arg4[%c0_6, %c0_7] : memref<256x2xf32, #tpu.memory_space<vmem>>, vector<256x2xf32>
    %cst = arith.constant dense<0.000000e+00> : vector<40x2xf32>
    %10 = tpu.matmul %8, %9, %cst {dimension_numbers = #tpu.dot_dimension_numbers<[1], [0], [0], [1], [0, 0, 1, 1], [], []>} : vector<40x256xf32>, vector<256x2xf32>, vector<40x2xf32> -> vector<40x2xf32>
    %cst_8 = arith.constant 9.99999997E-7 : f32
    %11 = vector.broadcast %cst_8 : f32 to vector<40x2xf32>
    %12 = arith.maximumf %10, %11 : vector<40x2xf32>
    %13 = math.log %12 : vector<40x2xf32>
    %c0_9 = arith.constant 0 : index
    %c0_10 = arith.constant 0 : index
    %c0_11 = arith.constant 0 : index
    %14 = vector.load %arg5[%c0_9, %c0_10, %c0_11] : memref<1x40x2xf32, #tpu.memory_space<vmem>>, vector<1x40x2xf32>
    %15 = vector.shape_cast %14 : vector<1x40x2xf32> to vector<40x2xf32>
    %16 = vector.shape_cast %13 : vector<40x2xf32> to vector<1x40x2xf32>
    tpu.vector_store %arg5[%c0_9, %c0_10, %c0_11], %16 {strides = array<i32>} : memref<1x40x2xf32, #tpu.memory_space<vmem>>, vector<1x40x2xf32>,
    return
  }
  func.func @transform_0(%arg0: i32) -> (i32, i32, i32) {
    %c0_i32 = arith.constant 0 : i32
    %c0_i32_0 = arith.constant 0 : i32
    %c0_i32_1 = arith.constant 0 : i32
    return %arg0, %c0_i32, %c0_i32_0 : i32, i32, i32
  }
  func.func @transform_1(%arg0: i32) -> (i32, i32) {
    %c0_i32 = arith.constant 0 : i32
    %c0_i32_0 = arith.constant 0 : i32
    %c0_i32_1 = arith.constant 0 : i32
    return %c0_i32, %c0_i32_0 : i32, i32
  }
  func.func @transform_2(%arg0: i32) -> (i32, i32) {
    %c0_i32 = arith.constant 0 : i32
    %c0_i32_0 = arith.constant 0 : i32
    %c0_i32_1 = arith.constant 0 : i32
    return %c0_i32, %c0_i32_0 : i32, i32
  }
  func.func @transform_3(%arg0: i32) -> (i32, i32) {
    %c0_i32 = arith.constant 0 : i32
    %c0_i32_0 = arith.constant 0 : i32
    %c0_i32_1 = arith.constant 0 : i32
    return %c0_i32, %c0_i32_0 : i32, i32
  }
  func.func @transform_4(%arg0: i32) -> (i32, i32, i32) {
    %c0_i32 = arith.constant 0 : i32
    %c0_i32_0 = arith.constant 0 : i32
    %c0_i32_1 = arith.constant 0 : i32
    return %arg0, %c0_i32, %c0_i32_0 : i32, i32, i32
  }
}

</mosaic_0001>

<llo_original>
// kernel: globalnetwork_forward.3
$region0: #{globalnetwork_forward.3}
  #allocation0 [shape = 'u32[]', space=smem, size = 0x4, offset = 0x4, fixed_abs, tag = 'smem constant byte address 0x4 - core index']
  #allocation1 [shape = 'u32[72,128]{1,0:T(1,128)}', space=vmem, size = 0x9000, scoped, tag = 'internal scratch']
  %s0 = inlined_call_operand.vmem [shape: f32[2,40,256], index: 0, kind: input, shape index: {}]
  %s1 = inlined_call_operand.vmem [shape: f32[40,1], index: 1, kind: input, shape index: {}]
  %s2 = inlined_call_operand.vmem [shape: f32[40,1], index: 2, kind: input, shape index: {}]
  %s3 = inlined_call_operand.vmem [shape: f32[256,2], index: 3, kind: input, shape index: {}]
  %s4 = inlined_call_operand.vmem [shape: f32[2,40,2], index: 4, kind: output, shape index: {}]
  %s5 = sld [smem:[#allocation0]]
  $region49: #{globalnetwork_forward.3} parent=0
    _
  %s7 = ssub.s32 1, %s5
  %s8 = scalar_select 0, %s7, %s5
  loop: start=0, step=1, limit=4
  $region2: #{globalnetwork_forward.3} parent=0 // loop_pre_header
    _
  $region3: #{globalnetwork_forward.3} parent=0 // loop_header
    %s10 = sphi 0, %s14
    %p11 = scmp.ge.s32.totalorder %s10, 4
    %s20 = sphi 0, %s22
    %s23 = sphi 0, %s20
    %s24 = sphi 0, %s23
    %s40 = sphi 0, %s24
    %s44 = sphi 0, %s44
    %s46 = sphi 0, %s44
    %s47 = sphi 0, %s46
    %s61 = sphi 0, %s47
    %s65 = sphi 0, %s65
    %s67 = sphi 0, %s65
    %s68 = sphi 0, %s67
    %s82 = sphi 0, %s68
    %s86 = sphi 0, %s86
    %s88 = sphi 0, %s86
    %s89 = sphi 0, %s88
    %s103 = sphi 0, %s89
    %s109 = sphi 0, %s111
    %s112 = sphi 0, %s109
    %s113 = sphi 0, %s112
    %s129 = sphi 0, %s113
  $region4: #{globalnetwork_forward.3} parent=0 // loop_header_branch
    %13 = sbr.rel (%p11) target = $region8
  $region5: #{globalnetwork_forward.3} parent=0 // loop_body
    %s15 = ssub.s32 %s10, 1
    %s16 = ssub.s32 %s10, 2
    %s17 = sadd.s32 %s10, 1
    %s18 = ssub.s32 %s10, %s17
    %p19 = scmp.eq.s32.totalorder %s18, 0
    %s21 = sadd.s32 %s20, 1
    %s22 = scalar_select %p19, %s20, %s21
    %p25 = pneg %p19
    %p26 = scmp.eq.s32.totalorder %s10, 1
    %p27 = por %p25, %p26
    %p28 = scmp.ne.s32.totalorder %s20, %s23
    %p29 = scmp.eq.s32.totalorder %s10, 0
    %p30 = por %p28, %p29
    %p31 = scmp.ne.s32.totalorder %s20, %s23
    %p32 = scmp.eq.s32.totalorder %s15, 1
    %p33 = por %p31, %p32
    %p34 = scmp.ne.s32.totalorder %s23, %s24
    %p35 = scmp.eq.s32.totalorder %s15, 0
    %p36 = por %p34, %p35
    %p37 = scmp.ne.s32.totalorder %s23, %s24
    %p38 = scmp.eq.s32.totalorder %s16, 1
    %p39 = por %p37, %p38
    %p41 = scmp.ne.s32.totalorder %s24, %s40
    %p42 = scmp.eq.s32.totalorder %s16, 0
    %p43 = por %p41, %p42
    %s45 = sadd.s32 %s44, 1
    %p48 = scmp.eq.s32.totalorder %s10, 1
    %p49 = scmp.ne.s32.totalorder %s44, %s46
    %p50 = scmp.eq.s32.totalorder %s10, 0
    %p51 = por %p49, %p50
    %p52 = scmp.ne.s32.totalorder %s44, %s46
    %p53 = scmp.eq.s32.totalorder %s15, 1
    %p54 = por %p52, %p53
    %p55 = scmp.ne.s32.totalorder %s46, %s47
    %p56 = scmp.eq.s32.totalorder %s15, 0
    %p57 = por %p55, %p56
    %p58 = scmp.ne.s32.totalorder %s46, %s47
    %p59 = scmp.eq.s32.totalorder %s16, 1
    %p60 = por %p58, %p59
    %p62 = scmp.ne.s32.totalorder %s47, %s61
    %p63 = scmp.eq.s32.totalorder %s16, 0
    %p64 = por %p62, %p63
    %s66 = sadd.s32 %s65, 1
    %p69 = scmp.eq.s32.totalorder %s10, 1
    %p70 = scmp.ne.s32.totalorder %s65, %s67
    %p71 = scmp.eq.s32.totalorder %s10, 0
    %p72 = por %p70, %p71
    %p73 = scmp.ne.s32.totalorder %s65, %s67
    %p74 = scmp.eq.s32.totalorder %s15, 1
    %p75 = por %p73, %p74
    %p76 = scmp.ne.s32.totalorder %s67, %s68
    %p77 = scmp.eq.s32.totalorder %s15, 0
    %p78 = por %p76, %p77
    %p79 = scmp.ne.s32.totalorder %s67, %s68
    %p80 = scmp.eq.s32.totalorder %s16, 1
    %p81 = por %p79, %p80
    %p83 = scmp.ne.s32.totalorder %s68, %s82
    %p84 = scmp.eq.s32.totalorder %s16, 0
    %p85 = por %p83, %p84
    %s87 = sadd.s32 %s86, 1
    %p90 = scmp.eq.s32.totalorder %s10, 1
    %p91 = scmp.ne.s32.totalorder %s86, %s88
    %p92 = scmp.eq.s32.totalorder %s10, 0
    %p93 = por %p91, %p92
    %p94 = scmp.ne.s32.totalorder %s86, %s88
    %p95 = scmp.eq.s32.totalorder %s15, 1
    %p96 = por %p94, %p95
    %p97 = scmp.ne.s32.totalorder %s88, %s89
    %p98 = scmp.eq.s32.totalorder %s15, 0
    %p99 = por %p97, %p98
    %p100 = scmp.ne.s32.totalorder %s88, %s89
    %p101 = scmp.eq.s32.totalorder %s16, 1
    %p102 = por %p100, %p101
    %p104 = scmp.ne.s32.totalorder %s89, %s103
    %p105 = scmp.eq.s32.totalorder %s16, 0
    %p106 = por %p104, %p105
    %s107 = ssub.s32 %s10, %s17
    %p108 = scmp.eq.s32.totalorder %s107, 0
    %s110 = sadd.s32 %s109, 1
    %s111 = scalar_select %p108, %s109, %s110
    %p114 = pneg %p108
    %p115 = scmp.eq.s32.totalorder %s10, 1
    %p116 = por %p114, %p115
    %p117 = scmp.ne.s32.totalorder %s109, %s112
    %p118 = scmp.eq.s32.totalorder %s10, 0
    %p119 = por %p117, %p118
    %p120 = scmp.ne.s32.totalorder %s109, %s112
    %p121 = scmp.eq.s32.totalorder %s15, 1
    %p122 = por %p120, %p121
    %p123 = scmp.ne.s32.totalorder %s112, %s113
    %p124 = scmp.eq.s32.totalorder %s15, 0
    %p125 = por %p123, %p124
    %p126 = scmp.ne.s32.totalorder %s112, %s113
    %p127 = scmp.eq.s32.totalorder %s16, 1
    %p128 = por %p126, %p127
    %p130 = scmp.ne.s32.totalorder %s113, %s129
    %p131 = scmp.eq.s32.totalorder %s16, 0
    %p132 = por %p130, %p131
    %p133 = scmp.le.s32.totalorder 1, %s10
    %p134 = scmp.lt.s32.totalorder %s10, 3
    %p135 = pnand %p133, %p134
    %p136 = pneg %p135
    // Predicated region
    $region9: #{globalnetwork_forward.3} parent=5 // pred_check
      _
    $region10: #{globalnetwork_forward.3} parent=5 // pred_check_branch
      %138 = sbr.rel (%p135) target = $region12
    $region11: #{globalnetwork_forward.3} parent=5 // pred_region
      %s139 = ssub.s32 %s10, 1
      // Predicated region
      $region13: #{globalnetwork_forward.3} parent=11 // pred_check
        %p140 = pneg %p57
      $region14: #{globalnetwork_forward.3} parent=11 // pred_check_branch
        %142 = sbr.rel (%p140) target = $region16
      $region15: #{globalnetwork_forward.3} parent=11 // pred_region
        _
      $region16: #{globalnetwork_forward.3} parent=11 // pred_fallthru
        _
      // Predicated region
      $region17: #{globalnetwork_forward.3} parent=11 // pred_check
        %p143 = pneg %p78
      $region18: #{globalnetwork_forward.3} parent=11 // pred_check_branch
        %145 = sbr.rel (%p143) target = $region20
      $region19: #{globalnetwork_forward.3} parent=11 // pred_region
        _
      $region20: #{globalnetwork_forward.3} parent=11 // pred_fallthru
        _
      // Predicated region
      $region21: #{globalnetwork_forward.3} parent=11 // pred_check
        %p146 = pneg %p99
      $region22: #{globalnetwork_forward.3} parent=11 // pred_check_branch
        %148 = sbr.rel (%p146) target = $region24
      $region23: #{globalnetwork_forward.3} parent=11 // pred_region
        _
      $region24: #{globalnetwork_forward.3} parent=11 // pred_fallthru
        _
    $region12: #{globalnetwork_forward.3} parent=5 // pred_fallthru
      _
    %p149 = scmp.lt.s32.totalorder %s10, 2
    // Predicated region
    $region25: #{globalnetwork_forward.3} parent=5 // pred_check
      %p150 = pneg %p149
    $region26: #{globalnetwork_forward.3} parent=5 // pred_check_branch
      %152 = sbr.rel (%p150) target = $region28
    $region27: #{globalnetwork_forward.3} parent=5 // pred_region
      // Predicated region
      $region29: #{globalnetwork_forward.3} parent=27 // pred_check
        %p153 = pneg %p30
      $region30: #{globalnetwork_forward.3} parent=27 // pred_check_branch
        %155 = sbr.rel (%p153) target = $region32
      $region31: #{globalnetwork_forward.3} parent=27 // pred_region
        %p156 = scmp.lt.s32.totalorder %s10, 1
        %s157 = scalar_select %p156, %s10, 1
        %s158 = smul.addr %s157, 10
        %s159 = smul.addr %s158, 8
        %s160 = scalar_lea.vmem %s0, %s159
      $region32: #{globalnetwork_forward.3} parent=27 // pred_fallthru
        _
    $region28: #{globalnetwork_forward.3} parent=5 // pred_fallthru
      _
    %p161 = scmp.le.s32.totalorder 1, %s10
    %p162 = scmp.lt.s32.totalorder %s10, 3
    %p163 = pnand %p161, %p162
    %p164 = pneg %p163
    // Predicated region
    $region33: #{globalnetwork_forward.3} parent=5 // pred_check
      _
    $region34: #{globalnetwork_forward.3} parent=5 // pred_check_branch
      %166 = sbr.rel (%p163) target = $region36
    $region35: #{globalnetwork_forward.3} parent=5 // pred_region
      %s167 = ssub.s32 %s10, 1
      %p168 = scmp.lt.s32.totalorder %s15, 1
      %s169 = scalar_select %p168, %s15, 1
      %s170 = smul.addr %s169, 10
      %s171 = smul.addr %s170, 8
      %s172 = scalar_lea.vmem %s0, %s171
      %p173 = pneg %p36
      %p174 = pneg %p33
      %p175 = pneg %p57
      %p176 = pneg %p54
      %p177 = pneg %p78
      %p178 = pneg %p75
      %p179 = pneg %p99
      %p180 = pneg %p96
      %p181 = pneg %p125
      %p182 = pneg %p122
      %p183 = scmp.lt.s32.totalorder %s15, 1
      %s184 = scalar_select %p183, %s15, 1
      %s185 = smul.addr %s184, 5
      %s186 = smul.addr %s185, 8
      %s187 = scalar_lea.vmem %s4, %s186
      %p188 = scmp.lt.s32.totalorder %s15, 1
      %s189 = scalar_select %p188, %s15, 1
      %s190 = smul.addr %s189, 10
      %s191 = smul.addr %s190, 8
      %s192 = scalar_lea.vmem %s0, %s191
      %p193 = scmp.lt.s32.totalorder %s15, 1
      %s194 = scalar_select %p193, %s15, 1
      %s195 = smul.addr %s194, 5
      %s196 = smul.addr %s195, 8
      %s197 = scalar_lea.vmem %s4, %s196
      %v198 = vld [vmem:[%s192] sm:$0xff]
      %v199 = vld [vmem:[%s192 + $0x8] sm:$0xff]
      %v200 = vld [vmem:[%s192 + $0x10] sm:$0xff]
      %v201 = vld [vmem:[%s192 + $0x18] sm:$0xff]
      %v202 = vld [vmem:[%s192 + $0x20] sm:$0xff]
      %v203 = vld [vmem:[%s192 + $0x28] sm:$0xff]
      %v204 = vld [vmem:[%s192 + $0x30] sm:$0xff]
      %v205 = vld [vmem:[%s192 + $0x38] sm:$0xff]
      %v206 = vld [vmem:[%s192 + $0x40] sm:$0xff]
      %v207 = vld [vmem:[%s192 + $0x48] sm:$0xff]
      %v208 = vld [vmem:[%s1] sm:$0xff]
      %v209 = vld [vmem:[%s1 + $0x8] sm:$0xff]
      %v210 = vld [vmem:[%s1 + $0x10] sm:$0xff]
      %v211 = vld [vmem:[%s1 + $0x18] sm:$0xff]
      %v212 = vld [vmem:[%s1 + $0x20] sm:$0xff]
      %214 = vset.pattern.permute.xlu0 0
      %215 = vperm.xlu0 %214, %v208
      %v216 = vpop.permute.xlu0 %215
      %219 = vset.pattern.permute.xlu0 0
      %220 = vperm.xlu0 %219, %v209
      %v221 = vpop.permute.xlu0 %220
      %224 = vset.pattern.permute.xlu0 0
      %225 = vperm.xlu0 %224, %v210
      %v226 = vpop.permute.xlu0 %225
      %229 = vset.pattern.permute.xlu0 0
      %230 = vperm.xlu0 %229, %v211
      %v231 = vpop.permute.xlu0 %230
      %234 = vset.pattern.permute.xlu0 0
      %235 = vperm.xlu0 %234, %v212
      %v236 = vpop.permute.xlu0 %235
      %v238 = vmul.f32 %v198, %v216
      %v239 = vmul.f32 %v199, %v216
      %v240 = vmul.f32 %v200, %v221
      %v241 = vmul.f32 %v201, %v221
      %v242 = vmul.f32 %v202, %v226
      %v243 = vmul.f32 %v203, %v226
      %v244 = vmul.f32 %v204, %v231
      %v245 = vmul.f32 %v205, %v231
      %v246 = vmul.f32 %v206, %v236
      %v247 = vmul.f32 %v207, %v236
      %v248 = vld [vmem:[%s2] sm:$0xff]
      %v249 = vld [vmem:[%s2 + $0x8] sm:$0xff]
      %v250 = vld [vmem:[%s2 + $0x10] sm:$0xff]
      %v251 = vld [vmem:[%s2 + $0x18] sm:$0xff]
      %v252 = vld [vmem:[%s2 + $0x20] sm:$0xff]
      %254 = vset.pattern.permute.xlu0 0
      %255 = vperm.xlu0 %254, %v248
      %v256 = vpop.permute.xlu0 %255
      %259 = vset.pattern.permute.xlu0 0
      %260 = vperm.xlu0 %259, %v249
      %v261 = vpop.permute.xlu0 %260
      %264 = vset.pattern.permute.xlu0 0
      %265 = vperm.xlu0 %264, %v250
      %v266 = vpop.permute.xlu0 %265
      %269 = vset.pattern.permute.xlu0 0
      %270 = vperm.xlu0 %269, %v251
      %v271 = vpop.permute.xlu0 %270
      %274 = vset.pattern.permute.xlu0 0
      %275 = vperm.xlu0 %274, %v252
      %v276 = vpop.permute.xlu0 %275
      %v278 = vadd.f32 %v238, %v256
      %v279 = vadd.f32 %v239, %v256
      %v280 = vadd.f32 %v240, %v261
      %v281 = vadd.f32 %v241, %v261
      %v282 = vadd.f32 %v242, %v266
      %v283 = vadd.f32 %v243, %v266
      %v284 = vadd.f32 %v244, %v271
      %v285 = vadd.f32 %v245, %v271
      %v286 = vadd.f32 %v246, %v276
      %v287 = vadd.f32 %v247, %v276
      %v288 = vmul.f32 %v278, %v278
      %v289 = vmul.f32 %v279, %v279
      %v290 = vmul.f32 %v280, %v280
      %v291 = vmul.f32 %v281, %v281
      %v292 = vmul.f32 %v282, %v282
      %v293 = vmul.f32 %v283, %v283
      %v294 = vmul.f32 %v284, %v284
      %v295 = vmul.f32 %v285, %v285
      %v296 = vmul.f32 %v286, %v286
      %v297 = vmul.f32 %v287, %v287
      %v298 = vld [vmem:[%s3] sm:$0xff]
      %v299 = vld [vmem:[%s3 + $0x8] sm:$0xff]
      %v300 = vld [vmem:[%s3 + $0x10] sm:$0xff]
      %v301 = vld [vmem:[%s3 + $0x18] sm:$0xff]
      %v302 = vld [vmem:[%s3 + $0x20] sm:$0xff]
      %v303 = vld [vmem:[%s3 + $0x28] sm:$0xff]
      %v304 = vld [vmem:[%s3 + $0x30] sm:$0xff]
      %v305 = vld [vmem:[%s3 + $0x38] sm:$0xff]
      %v306 = vld [vmem:[%s3 + $0x40] sm:$0xff]
      %v307 = vld [vmem:[%s3 + $0x48] sm:$0xff]
      %v308 = vld [vmem:[%s3 + $0x50] sm:$0xff]
      %v309 = vld [vmem:[%s3 + $0x58] sm:$0xff]
      %v310 = vld [vmem:[%s3 + $0x60] sm:$0xff]
      %v311 = vld [vmem:[%s3 + $0x68] sm:$0xff]
      %v312 = vld [vmem:[%s3 + $0x70] sm:$0xff]
      %v313 = vld [vmem:[%s3 + $0x78] sm:$0xff]
      %v314 = vld [vmem:[%s3 + $0x80] sm:$0xff]
      %v315 = vld [vmem:[%s3 + $0x88] sm:$0xff]
      %v316 = vld [vmem:[%s3 + $0x90] sm:$0xff]
      %v317 = vld [vmem:[%s3 + $0x98] sm:$0xff]
      %v318 = vld [vmem:[%s3 + $0xa0] sm:$0xff]
      %v319 = vld [vmem:[%s3 + $0xa8] sm:$0xff]
      %v320 = vld [vmem:[%s3 + $0xb0] sm:$0xff]
      %v321 = vld [vmem:[%s3 + $0xb8] sm:$0xff]
      %v322 = vld [vmem:[%s3 + $0xc0] sm:$0xff]
      %v323 = vld [vmem:[%s3 + $0xc8] sm:$0xff]
      %v324 = vld [vmem:[%s3 + $0xd0] sm:$0xff]
      %v325 = vld [vmem:[%s3 + $0xd8] sm:$0xff]
      %v326 = vld [vmem:[%s3 + $0xe0] sm:$0xff]
      %v327 = vld [vmem:[%s3 + $0xe8] sm:$0xff]
      %v328 = vld [vmem:[%s3 + $0xf0] sm:$0xff]
      %v329 = vld [vmem:[%s3 + $0xf8] sm:$0xff]
      %330 = vmatpush.msra.mxu0 %v313
      %331 = vmatpush.msra.mxu0 %v312
      %332 = vmatpush.msra.mxu0 %v311
      %333 = vmatpush.msra.mxu0 %v310
      %334 = vmatpush.msra.mxu0 %v309
      %335 = vmatpush.msra.mxu0 %v308
      %336 = vmatpush.msra.mxu0 %v307
      %337 = vmatpush.msra.mxu0 %v306
      %338 = vmatpush.msra.mxu0 %v305
      %339 = vmatpush.msra.mxu0 %v304
      %340 = vmatpush.msra.mxu0 %v303
      %341 = vmatpush.msra.mxu0 %v302
      %342 = vmatpush.msra.mxu0 %v301
      %343 = vmatpush.msra.mxu0 %v300
      %344 = vmatpush.msra.mxu0 %v299
      %345 = vmatpush.msra.mxu0 %v298
      %346 = vmatmul.f32.gmra.mxu0 %v288
      %v347 = vpop.f32.mrf.mxu0
      %v348 = vadd.f32 0.0, %v347
      %349 = vmatmul.f32.gmra.mxu0 %v290
      %v350 = vpop.f32.mrf.mxu0
      %v351 = vadd.f32 0.0, %v350
      %352 = vmatmul.f32.gmra.mxu0 %v292
      %v353 = vpop.f32.mrf.mxu0
      %v354 = vadd.f32 0.0, %v353
      %355 = vmatmul.f32.gmra.mxu0 %v294
      %v356 = vpop.f32.mrf.mxu0
      %v357 = vadd.f32 0.0, %v356
      %358 = vmatmul.f32.gmra.mxu0 %v296
      %v359 = vpop.f32.mrf.mxu0
      %v360 = vadd.f32 0.0, %v359
      %361 = vdwg.mxu0
      %362 = vmatpush.msra.mxu0 %v329
      %363 = vmatpush.msra.mxu0 %v328
      %364 = vmatpush.msra.mxu0 %v327
      %365 = vmatpush.msra.mxu0 %v326
      %366 = vmatpush.msra.mxu0 %v325
      %367 = vmatpush.msra.mxu0 %v324
      %368 = vmatpush.msra.mxu0 %v323
      %369 = vmatpush.msra.mxu0 %v322
      %370 = vmatpush.msra.mxu0 %v321
      %371 = vmatpush.msra.mxu0 %v320
      %372 = vmatpush.msra.mxu0 %v319
      %373 = vmatpush.msra.mxu0 %v318
      %374 = vmatpush.msra.mxu0 %v317
      %375 = vmatpush.msra.mxu0 %v316
      %376 = vmatpush.msra.mxu0 %v315
      %377 = vmatpush.msra.mxu0 %v314
      %378 = vmatmul.f32.gmra.mxu0 %v289
      %v379 = vpop.f32.mrf.mxu0
      %v380 = vadd.f32 %v348, %v379
      %381 = vmatmul.f32.gmra.mxu0 %v291
      %v382 = vpop.f32.mrf.mxu0
      %v383 = vadd.f32 %v351, %v382
      %384 = vmatmul.f32.gmra.mxu0 %v293
      %v385 = vpop.f32.mrf.mxu0
      %v386 = vadd.f32 %v354, %v385
      %387 = vmatmul.f32.gmra.mxu0 %v295
      %v388 = vpop.f32.mrf.mxu0
      %v389 = vadd.f32 %v357, %v388
      %390 = vmatmul.f32.gmra.mxu0 %v297
      %v391 = vpop.f32.mrf.mxu0
      %v392 = vadd.f32 %v360, %v391
      %393 = vdwg.mxu0
      %v394 = vmax.f32 %v380, 1e-06
      %v395 = vmax.f32 %v383, 1e-06
      %v396 = vmax.f32 %v386, 1e-06
      %v397 = vmax.f32 %v389, 1e-06
      %v398 = vmax.f32 %v392, 1e-06
      %v399 = vlog2.pop %v394
      %v400 = vmul.f32 %v399, 0.6931472
      %v401 = vlog2.pop %v395
      %v402 = vmul.f32 %v401, 0.6931472
      %v403 = vlog2.pop %v396
      %v404 = vmul.f32 %v403, 0.6931472
      %v405 = vlog2.pop %v397
      %v406 = vmul.f32 %v405, 0.6931472
      %v407 = vlog2.pop %v398
      %v408 = vmul.f32 %v407, 0.6931472
      %vm409 = vcmask 15360
      %410 = vst.msk [vmem:[%s197] sm:$0xff] %vm409, %v400
      %411 = vst.msk [vmem:[%s197 + $0x8] sm:$0xff] %vm409, %v402
      %412 = vst.msk [vmem:[%s197 + $0x10] sm:$0xff] %vm409, %v404
      %413 = vst.msk [vmem:[%s197 + $0x18] sm:$0xff] %vm409, %v406
      %414 = vst.msk [vmem:[%s197 + $0x20] sm:$0xff] %vm409, %v408
      %p415 = scmp.lt.s32.totalorder %s15, 1
      %s416 = scalar_select %p415, %s15, 1
      %s417 = smul.addr %s416, 5
      %s418 = smul.addr %s417, 8
      %s419 = scalar_lea.vmem %s4, %s418
      // Predicated region
      $region37: #{globalnetwork_forward.3} parent=35 // pred_check
        %p420 = pneg %p122
      $region38: #{globalnetwork_forward.3} parent=35 // pred_check_branch
        %422 = sbr.rel (%p420) target = $region40
      $region39: #{globalnetwork_forward.3} parent=35 // pred_region
        _
      $region40: #{globalnetwork_forward.3} parent=35 // pred_fallthru
        _
    $region36: #{globalnetwork_forward.3} parent=5 // pred_fallthru
      _
    %p423 = scmp.le.s32.totalorder 2, %s10
    // Predicated region
    $region41: #{globalnetwork_forward.3} parent=5 // pred_check
      %p424 = pneg %p423
    $region42: #{globalnetwork_forward.3} parent=5 // pred_check_branch
      %426 = sbr.rel (%p424) target = $region44
    $region43: #{globalnetwork_forward.3} parent=5 // pred_region
      %s427 = ssub.s32 %s10, 2
      // Predicated region
      $region45: #{globalnetwork_forward.3} parent=43 // pred_check
        %p428 = pneg %p128
      $region46: #{globalnetwork_forward.3} parent=43 // pred_check_branch
        %430 = sbr.rel (%p428) target = $region48
      $region47: #{globalnetwork_forward.3} parent=43 // pred_region
        %p431 = scmp.lt.s32.totalorder %s16, 1
        %s432 = scalar_select %p431, %s16, 1
        %s433 = smul.addr %s432, 5
        %s434 = smul.addr %s433, 8
        %s435 = scalar_lea.vmem %s4, %s434
      $region48: #{globalnetwork_forward.3} parent=43 // pred_fallthru
        _
    $region44: #{globalnetwork_forward.3} parent=5 // pred_fallthru
      _
  $region6: #{globalnetwork_forward.3} parent=0 // loop_footer
    %s14 = sadd.s32 1, %s10
  $region7: #{globalnetwork_forward.3} parent=0 // loop_footer_branch
    %9 = sbr.rel target = $region3
  $region8: #{globalnetwork_forward.3} parent=0 // loop_exit
    _

// kernel: globalnetwork_forward.2
$region0: #{globalnetwork_forward.2}
  #allocation0 [shape = 'u32[]', space=smem, size = 0x4, offset = 0x4, fixed_abs, tag = 'smem constant byte address 0x4 - core index']
  #allocation1 [shape = 'u32[72,128]{1,0:T(1,128)}', space=vmem, size = 0x9000, scoped, tag = 'internal scratch']
  %s0 = inlined_call_operand.vmem [shape: f32[2,44,384], index: 0, kind: input, shape index: {}, may-alias: {0,1}]
  %s1 = inlined_call_operand.vmem [shape: f32[2,44,384], index: 1, kind: input, shape index: {}, may-alias: {0,1}]
  %s2 = inlined_call_operand.vmem [shape: f32[50,40,44], index: 2, kind: input, shape index: {}]
  %s3 = inlined_call_operand.vmem [shape: f32[40,1], index: 3, kind: input, shape index: {}]
  %s4 = inlined_call_operand.vmem [shape: f32[2,40,256], index: 4, kind: output, shape index: {0}]
  %s5 = inlined_call_operand.vmem [shape: f32[2,2,40,2], index: 5, kind: output, shape index: {1}]
  %6 = xla_tuple %s4, %s5
  %s7 = sld [smem:[#allocation0]]
  $region167: #{globalnetwork_forward.2} parent=0
    _
  %s9 = ssub.s32 1, %s7
  %s10 = scalar_select 0, %s9, %s7
  $region1: #{globalnetwork_forward.2} parent=0
    #allocation2 [shape = 'u8[49152]{0}', space=vmem, size = 0xc000, scoped, tag = 'input window, operand 0']
    #allocation3 [shape = 'u8[49152]{0}', space=vmem, size = 0xc000, scoped, tag = 'input window, operand 1']
    #allocation4 [shape = 'u8[40960]{0}', space=vmem, size = 0xa000, scoped, tag = 'output window, operand 0']
    loop: start=0, step=1, limit=6
    $region2: #{globalnetwork_forward.2} parent=1 // loop_pre_header
      _
    $region3: #{globalnetwork_forward.2} parent=1 // loop_header
      %s12 = sphi 0, %s16
      %p13 = scmp.ge.s32.totalorder %s12, 6
      %s19 = sphi 0, %s31
      %s20 = sphi 0, %s27
      %s21 = sphi 0, %s19
      %s22 = sphi 0, %s20
      %s23 = sphi 0, %s21
      %s24 = sphi 0, %s22
      %s36 = sphi 0, %s38
      %s39 = sphi 0, %s36
      %s40 = sphi 0, %s39
      %s56 = sphi 0, %s40
      %s66 = sphi 0, %s68
      %s69 = sphi 0, %s66
      %s70 = sphi 0, %s69
      %s86 = sphi 0, %s70
      %s90 = sphi 0, %s90
      %s92 = sphi 0, %s90
      %s93 = sphi 0, %s92
      %s107 = sphi 0, %s93
      %s111 = sphi 0, %s111
      %s113 = sphi 0, %s111
      %s114 = sphi 0, %s113
      %s128 = sphi 0, %s114
      %s136 = sphi 0, %s138
      %s139 = sphi 0, %s136
      %s140 = sphi 0, %s139
      %s156 = sphi 0, %s140
      %s164 = sphi 0, %s166
      %s167 = sphi 0, %s164
      %s168 = sphi 0, %s167
      %s184 = sphi 0, %s168
    $region4: #{globalnetwork_forward.2} parent=1 // loop_header_branch
      %15 = sbr.rel (%p13) target = $region8
    $region5: #{globalnetwork_forward.2} parent=1 // loop_body
      %s17 = ssub.s32 %s12, 1
      %s18 = ssub.s32 %s12, 2
      %s25 = sadd.s32 1, %s20
      %p26 = scmp.ge.s32.totalorder %s25, 2
      %s27 = scalar_select %p26, 0, %s25
      %s28 = sadd.s32 1, %s19
      %s29 = scalar_select %p26, %s28, %s19
      %p30 = scmp.ge.s32.totalorder %s29, 2
      %s31 = scalar_select %p30, 0, %s29
      %s32 = ssub.s32 %s19, %s31
      %s33 = ssub.s32 %s20, %s27
      %s34 = sor.u32 %s32, %s33
      %p35 = scmp.eq.s32.totalorder %s34, 0
      %s37 = sadd.s32 %s36, 1
      %s38 = scalar_select %p35, %s36, %s37
      %p41 = pneg %p35
      %p42 = scmp.eq.s32.totalorder %s12, 3
      %p43 = por %p41, %p42
      %p44 = scmp.ne.s32.totalorder %s36, %s39
      %p45 = scmp.eq.s32.totalorder %s12, 0
      %p46 = por %p44, %p45
      %p47 = scmp.ne.s32.totalorder %s36, %s39
      %p48 = scmp.eq.s32.totalorder %s17, 3
      %p49 = por %p47, %p48
      %p50 = scmp.ne.s32.totalorder %s39, %s40
      %p51 = scmp.eq.s32.totalorder %s17, 0
      %p52 = por %p50, %p51
      %p53 = scmp.ne.s32.totalorder %s39, %s40
      %p54 = scmp.eq.s32.totalorder %s18, 3
      %p55 = por %p53, %p54
      %p57 = scmp.ne.s32.totalorder %s40, %s56
      %p58 = scmp.eq.s32.totalorder %s18, 0
      %p59 = por %p57, %p58
      %s60 = sadd.s32 %s20, 1
      %s61 = sadd.s32 %s27, 1
      %s62 = ssub.s32 %s19, %s31
      %s63 = ssub.s32 %s60, %s61
      %s64 = sor.u32 %s62, %s63
      %p65 = scmp.eq.s32.totalorder %s64, 0
      %s67 = sadd.s32 %s66, 1
      %s68 = scalar_select %p65, %s66, %s67
      %p71 = pneg %p65
      %p72 = scmp.eq.s32.totalorder %s12, 3
      %p73 = por %p71, %p72
      %p74 = scmp.ne.s32.totalorder %s66, %s69
      %p75 = scmp.eq.s32.totalorder %s12, 0
      %p76 = por %p74, %p75
      %p77 = scmp.ne.s32.totalorder %s66, %s69
      %p78 = scmp.eq.s32.totalorder %s17, 3
      %p79 = por %p77, %p78
      %p80 = scmp.ne.s32.totalorder %s69, %s70
      %p81 = scmp.eq.s32.totalorder %s17, 0
      %p82 = por %p80, %p81
      %p83 = scmp.ne.s32.totalorder %s69, %s70
      %p84 = scmp.eq.s32.totalorder %s18, 3
      %p85 = por %p83, %p84
      %p87 = scmp.ne.s32.totalorder %s70, %s86
      %p88 = scmp.eq.s32.totalorder %s18, 0
      %p89 = por %p87, %p88
      %s91 = sadd.s32 %s90, 1
      %p94 = scmp.eq.s32.totalorder %s12, 3
      %p95 = scmp.ne.s32.totalorder %s90, %s92
      %p96 = scmp.eq.s32.totalorder %s12, 0
      %p97 = por %p95, %p96
      %p98 = scmp.ne.s32.totalorder %s90, %s92
      %p99 = scmp.eq.s32.totalorder %s17, 3
      %p100 = por %p98, %p99
      %p101 = scmp.ne.s32.totalorder %s92, %s93
      %p102 = scmp.eq.s32.totalorder %s17, 0
      %p103 = por %p101, %p102
      %p104 = scmp.ne.s32.totalorder %s92, %s93
      %p105 = scmp.eq.s32.totalorder %s18, 3
      %p106 = por %p104, %p105
      %p108 = scmp.ne.s32.totalorder %s93, %s107
      %p109 = scmp.eq.s32.totalorder %s18, 0
      %p110 = por %p108, %p109
      %s112 = sadd.s32 %s111, 1
      %p115 = scmp.eq.s32.totalorder %s12, 3
      %p116 = scmp.ne.s32.totalorder %s111, %s113
      %p117 = scmp.eq.s32.totalorder %s12, 0
      %p118 = por %p116, %p117
      %p119 = scmp.ne.s32.totalorder %s111, %s113
      %p120 = scmp.eq.s32.totalorder %s17, 3
      %p121 = por %p119, %p120
      %p122 = scmp.ne.s32.totalorder %s113, %s114
      %p123 = scmp.eq.s32.totalorder %s17, 0
      %p124 = por %p122, %p123
      %p125 = scmp.ne.s32.totalorder %s113, %s114
      %p126 = scmp.eq.s32.totalorder %s18, 3
      %p127 = por %p125, %p126
      %p129 = scmp.ne.s32.totalorder %s114, %s128
      %p130 = scmp.eq.s32.totalorder %s18, 0
      %p131 = por %p129, %p130
      %s132 = ssub.s32 %s19, %s31
      %s133 = ssub.s32 %s20, %s27
      %s134 = sor.u32 %s132, %s133
      %p135 = scmp.eq.s32.totalorder %s134, 0
      %s137 = sadd.s32 %s136, 1
      %s138 = scalar_select %p135, %s136, %s137
      %p141 = pneg %p135
      %p142 = scmp.eq.s32.totalorder %s12, 3
      %p143 = por %p141, %p142
      %p144 = scmp.ne.s32.totalorder %s136, %s139
      %p145 = scmp.eq.s32.totalorder %s12, 0
      %p146 = por %p144, %p145
      %p147 = scmp.ne.s32.totalorder %s136, %s139
      %p148 = scmp.eq.s32.totalorder %s17, 3
      %p149 = por %p147, %p148
      %p150 = scmp.ne.s32.totalorder %s139, %s140
      %p151 = scmp.eq.s32.totalorder %s17, 0
      %p152 = por %p150, %p151
      %p153 = scmp.ne.s32.totalorder %s139, %s140
      %p154 = scmp.eq.s32.totalorder %s18, 3
      %p155 = por %p153, %p154
      %p157 = scmp.ne.s32.totalorder %s140, %s156
      %p158 = scmp.eq.s32.totalorder %s18, 0
      %p159 = por %p157, %p158
      %s160 = ssub.s32 %s19, %s31
      %s161 = ssub.s32 %s20, %s27
      %s162 = sor.u32 %s160, %s161
      %p163 = scmp.eq.s32.totalorder %s162, 0
      %s165 = sadd.s32 %s164, 1
      %s166 = scalar_select %p163, %s164, %s165
      %p169 = pneg %p163
      %p170 = scmp.eq.s32.totalorder %s12, 3
      %p171 = por %p169, %p170
      %p172 = scmp.ne.s32.totalorder %s164, %s167
      %p173 = scmp.eq.s32.totalorder %s12, 0
      %p174 = por %p172, %p173
      %p175 = scmp.ne.s32.totalorder %s164, %s167
      %p176 = scmp.eq.s32.totalorder %s17, 3
      %p177 = por %p175, %p176
      %p178 = scmp.ne.s32.totalorder %s167, %s168
      %p179 = scmp.eq.s32.totalorder %s17, 0
      %p180 = por %p178, %p179
      %p181 = scmp.ne.s32.totalorder %s167, %s168
      %p182 = scmp.eq.s32.totalorder %s18, 3
      %p183 = por %p181, %p182
      %p185 = scmp.ne.s32.totalorder %s168, %s184
      %p186 = scmp.eq.s32.totalorder %s18, 0
      %p187 = por %p185, %p186
      %p188 = scmp.le.s32.totalorder 1, %s12
      %p189 = scmp.lt.s32.totalorder %s12, 5
      %p190 = pnand %p188, %p189
      %p191 = pneg %p190
      // Predicated region
      $region9: #{globalnetwork_forward.2} parent=5 // pred_check
        _
      $region10: #{globalnetwork_forward.2} parent=5 // pred_check_branch
        %193 = sbr.rel (%p190) target = $region12
      $region11: #{globalnetwork_forward.2} parent=5 // pred_region
        %s194 = ssub.s32 %s12, 1
        // Predicated region
        $region13: #{globalnetwork_forward.2} parent=11 // pred_check
          %p195 = pneg %p103
        $region14: #{globalnetwork_forward.2} parent=11 // pred_check_branch
          %197 = sbr.rel (%p195) target = $region16
        $region15: #{globalnetwork_forward.2} parent=11 // pred_region
          _
        $region16: #{globalnetwork_forward.2} parent=11 // pred_fallthru
          _
        // Predicated region
        $region17: #{globalnetwork_forward.2} parent=11 // pred_check
          %p198 = pneg %p124
        $region18: #{globalnetwork_forward.2} parent=11 // pred_check_branch
          %200 = sbr.rel (%p198) target = $region20
        $region19: #{globalnetwork_forward.2} parent=11 // pred_region
          _
        $region20: #{globalnetwork_forward.2} parent=11 // pred_fallthru
          _
      $region12: #{globalnetwork_forward.2} parent=5 // pred_fallthru
        _
      %p201 = scmp.lt.s32.totalorder %s12, 4
      // Predicated region
      $region21: #{globalnetwork_forward.2} parent=5 // pred_check
        %p202 = pneg %p201
      $region22: #{globalnetwork_forward.2} parent=5 // pred_check_branch
        %204 = sbr.rel (%p202) target = $region24
      $region23: #{globalnetwork_forward.2} parent=5 // pred_region
        // Predicated region
        $region25: #{globalnetwork_forward.2} parent=23 // pred_check
          %p205 = pneg %p46
        $region26: #{globalnetwork_forward.2} parent=23 // pred_check_branch
          %207 = sbr.rel (%p205) target = $region28
        $region27: #{globalnetwork_forward.2} parent=23 // pred_region
          %s208 = sand.u32 %s36, 1
          %s209 = sand.u32 %s36, 1
          %s210 = smul.addr %s209, 48
          %s211 = scalar_lea.vmem [#allocation2], %s210
          %s212 = smul.addr %s19, 18
          %s213 = sadd.s32 %s20, %s212
          %s214 = smul.addr %s213, 8
          %s215 = scalar_lea.vmem %s0, %s214
          // Predicated region
          $region29: #{globalnetwork_forward.2} parent=27 // pred_check
            _
          $region30: #{globalnetwork_forward.2} parent=27 // pred_check_branch
            %217 = sbr.rel (0) target = $region32
          $region31: #{globalnetwork_forward.2} parent=27 // pred_region
            // Predicated region
            $region33: #{globalnetwork_forward.2} parent=31 // pred_check
              _
            $region34: #{globalnetwork_forward.2} parent=31 // pred_check_branch
              %219 = sbr.rel (0) target = $region36
            $region35: #{globalnetwork_forward.2} parent=31 // pred_region
              // Predicated region
              $region48: #{globalnetwork_forward.2} parent=35 // pred_check
                _
              $region49: #{globalnetwork_forward.2} parent=35 // pred_check_branch
                %245 = sbr.rel (0) target = $region51
              $region50: #{globalnetwork_forward.2} parent=35 // pred_region
                loop: start=0, step=1, limit=1
                $region52: #{globalnetwork_forward.2} parent=50 // loop_pre_header
                  _
                $region53: #{globalnetwork_forward.2} parent=50 // loop_header
                  %s247 = sphi 0, %s251
                  %p248 = scmp.ge.s32.totalorder %s247, 1
                  %s252 = sphi %s215, %s215
                  %s253 = sphi %s211, %s211
                $region54: #{globalnetwork_forward.2} parent=50 // loop_header_branch
                  %250 = sbr.rel (%p248) target = $region58
                $region55: #{globalnetwork_forward.2} parent=50 // loop_body
                  %v254 = vld [vmem:[%s252] sm:$0xff]
                  %255 = vst [vmem:[%s253] sm:$0xff] %v254
                  %v256 = vld [vmem:[%s252 + $0x18] sm:$0xff]
                  %257 = vst [vmem:[%s253 + $0x8] sm:$0xff] %v256
                  %v258 = vld [vmem:[%s252 + $0x30] sm:$0xff]
                  %259 = vst [vmem:[%s253 + $0x10] sm:$0xff] %v258
                  %v260 = vld [vmem:[%s252 + $0x48] sm:$0xff]
                  %261 = vst [vmem:[%s253 + $0x18] sm:$0xff] %v260
                  %v262 = vld [vmem:[%s252 + $0x60] sm:$0xff]
                  %263 = vst [vmem:[%s253 + $0x20] sm:$0xff] %v262
                  %v264 = vld [vmem:[%s252 + $0x78] sm:$0xff]
                  %265 = vst [vmem:[%s253 + $0x28] sm:$0xff] %v264
                $region56: #{globalnetwork_forward.2} parent=50 // loop_footer
                  %s251 = sadd.s32 1, %s247
                $region57: #{globalnetwork_forward.2} parent=50 // loop_footer_branch
                  %246 = sbr.rel target = $region53
                $region58: #{globalnetwork_forward.2} parent=50 // loop_exit
                  _
              $region51: #{globalnetwork_forward.2} parent=35 // pred_fallthru
                _
              // Predicated region
              $region59: #{globalnetwork_forward.2} parent=35 // pred_check
                _
              $region60: #{globalnetwork_forward.2} parent=35 // pred_check_branch
                %267 = sbr.rel target = $region62
              $region61: #{globalnetwork_forward.2} parent=35 // pred_region
                _
              $region62: #{globalnetwork_forward.2} parent=35 // pred_fallthru
                _
            $region36: #{globalnetwork_forward.2} parent=31 // pred_fallthru
              _
            // Predicated region
            $region37: #{globalnetwork_forward.2} parent=31 // pred_check
              _
            $region38: #{globalnetwork_forward.2} parent=31 // pred_check_branch
              %221 = sbr.rel target = $region40
            $region39: #{globalnetwork_forward.2} parent=31 // pred_region
              %s223 = ssub.s32 256, 1
              loop: start=0, step=1, limit=1
              $region41: #{globalnetwork_forward.2} parent=39 // loop_pre_header
                _
              $region42: #{globalnetwork_forward.2} parent=39 // loop_header
                %s225 = sphi 0, %s229
                %p226 = scmp.ge.s32.totalorder %s225, 1
                %s230 = sphi %s215, %s215
                %s231 = sphi %s211, %s211
              $region43: #{globalnetwork_forward.2} parent=39 // loop_header_branch
                %228 = sbr.rel (%p226) target = $region47
              $region44: #{globalnetwork_forward.2} parent=39 // loop_body
                %v232 = vld [vmem:[%s230] sm:%s223]
                %233 = vst [vmem:[%s231] sm:%s223] %v232
                %v234 = vld [vmem:[%s230 + $0x18] sm:%s223]
                %235 = vst [vmem:[%s231 + $0x8] sm:%s223] %v234
                %v236 = vld [vmem:[%s230 + $0x30] sm:%s223]
                %237 = vst [vmem:[%s231 + $0x10] sm:%s223] %v236
                %v238 = vld [vmem:[%s230 + $0x48] sm:%s223]
                %239 = vst [vmem:[%s231 + $0x18] sm:%s223] %v238
                %v240 = vld [vmem:[%s230 + $0x60] sm:%s223]
                %241 = vst [vmem:[%s231 + $0x20] sm:%s223] %v240
                %v242 = vld [vmem:[%s230 + $0x78] sm:%s223]
                %243 = vst [vmem:[%s231 + $0x28] sm:%s223] %v242
              $region45: #{globalnetwork_forward.2} parent=39 // loop_footer
                %s229 = sadd.s32 1, %s225
              $region46: #{globalnetwork_forward.2} parent=39 // loop_footer_branch
                %224 = sbr.rel target = $region42
              $region47: #{globalnetwork_forward.2} parent=39 // loop_exit
                _
            $region40: #{globalnetwork_forward.2} parent=31 // pred_fallthru
              _
          $region32: #{globalnetwork_forward.2} parent=27 // pred_fallthru
            _
          %268 = vnop
        $region28: #{globalnetwork_forward.2} parent=23 // pred_fallthru
          _
        // Predicated region
        $region63: #{globalnetwork_forward.2} parent=23 // pred_check
          %p269 = pneg %p76
        $region64: #{globalnetwork_forward.2} parent=23 // pred_check_branch
          %271 = sbr.rel (%p269) target = $region66
        $region65: #{globalnetwork_forward.2} parent=23 // pred_region
          %s272 = sand.u32 %s66, 1
          %s273 = sand.u32 %s66, 1
          %s274 = smul.addr %s273, 48
          %s275 = scalar_lea.vmem [#allocation3], %s274
          %s276 = sadd.s32 %s20, 1
          %s277 = smul.addr %s19, 18
          %s278 = sadd.s32 %s276, %s277
          %s279 = smul.addr %s278, 8
          %s280 = scalar_lea.vmem %s1, %s279
          // Predicated region
          $region67: #{globalnetwork_forward.2} parent=65 // pred_check
            _
          $region68: #{globalnetwork_forward.2} parent=65 // pred_check_branch
            %282 = sbr.rel (0) target = $region70
          $region69: #{globalnetwork_forward.2} parent=65 // pred_region
            // Predicated region
            $region71: #{globalnetwork_forward.2} parent=69 // pred_check
              _
            $region72: #{globalnetwork_forward.2} parent=69 // pred_check_branch
              %284 = sbr.rel (0) target = $region74
            $region73: #{globalnetwork_forward.2} parent=69 // pred_region
              // Predicated region
              $region86: #{globalnetwork_forward.2} parent=73 // pred_check
                _
              $region87: #{globalnetwork_forward.2} parent=73 // pred_check_branch
                %310 = sbr.rel (0) target = $region89
              $region88: #{globalnetwork_forward.2} parent=73 // pred_region
                loop: start=0, step=1, limit=1
                $region90: #{globalnetwork_forward.2} parent=88 // loop_pre_header
                  _
                $region91: #{globalnetwork_forward.2} parent=88 // loop_header
                  %s312 = sphi 0, %s316
                  %p313 = scmp.ge.s32.totalorder %s312, 1
                  %s317 = sphi %s280, %s280
                  %s318 = sphi %s275, %s275
                $region92: #{globalnetwork_forward.2} parent=88 // loop_header_branch
                  %315 = sbr.rel (%p313) target = $region96
                $region93: #{globalnetwork_forward.2} parent=88 // loop_body
                  %v319 = vld [vmem:[%s317] sm:$0xff]
                  %320 = vst [vmem:[%s318] sm:$0xff] %v319
                  %v321 = vld [vmem:[%s317 + $0x18] sm:$0xff]
                  %322 = vst [vmem:[%s318 + $0x8] sm:$0xff] %v321
                  %v323 = vld [vmem:[%s317 + $0x30] sm:$0xff]
                  %324 = vst [vmem:[%s318 + $0x10] sm:$0xff] %v323
                  %v325 = vld [vmem:[%s317 + $0x48] sm:$0xff]
                  %326 = vst [vmem:[%s318 + $0x18] sm:$0xff] %v325
                  %v327 = vld [vmem:[%s317 + $0x60] sm:$0xff]
                  %328 = vst [vmem:[%s318 + $0x20] sm:$0xff] %v327
                  %v329 = vld [vmem:[%s317 + $0x78] sm:$0xff]
                  %330 = vst [vmem:[%s318 + $0x28] sm:$0xff] %v329
                $region94: #{globalnetwork_forward.2} parent=88 // loop_footer
                  %s316 = sadd.s32 1, %s312
                $region95: #{globalnetwork_forward.2} parent=88 // loop_footer_branch
                  %311 = sbr.rel target = $region91
                $region96: #{globalnetwork_forward.2} parent=88 // loop_exit
                  _
              $region89: #{globalnetwork_forward.2} parent=73 // pred_fallthru
                _
              // Predicated region
              $region97: #{globalnetwork_forward.2} parent=73 // pred_check
                _
              $region98: #{globalnetwork_forward.2} parent=73 // pred_check_branch
                %332 = sbr.rel target = $region100
              $region99: #{globalnetwork_forward.2} parent=73 // pred_region
                _
              $region100: #{globalnetwork_forward.2} parent=73 // pred_fallthru
                _
            $region74: #{globalnetwork_forward.2} parent=69 // pred_fallthru
              _
            // Predicated region
            $region75: #{globalnetwork_forward.2} parent=69 // pred_check
              _
            $region76: #{globalnetwork_forward.2} parent=69 // pred_check_branch
              %286 = sbr.rel target = $region78
            $region77: #{globalnetwork_forward.2} parent=69 // pred_region
              %s288 = ssub.s32 256, 1
              loop: start=0, step=1, limit=1
              $region79: #{globalnetwork_forward.2} parent=77 // loop_pre_header
                _
              $region80: #{globalnetwork_forward.2} parent=77 // loop_header
                %s290 = sphi 0, %s294
                %p291 = scmp.ge.s32.totalorder %s290, 1
                %s295 = sphi %s280, %s280
                %s296 = sphi %s275, %s275
              $region81: #{globalnetwork_forward.2} parent=77 // loop_header_branch
                %293 = sbr.rel (%p291) target = $region85
              $region82: #{globalnetwork_forward.2} parent=77 // loop_body
                %v297 = vld [vmem:[%s295] sm:%s288]
                %298 = vst [vmem:[%s296] sm:%s288] %v297
                %v299 = vld [vmem:[%s295 + $0x18] sm:%s288]
                %300 = vst [vmem:[%s296 + $0x8] sm:%s288] %v299
                %v301 = vld [vmem:[%s295 + $0x30] sm:%s288]
                %302 = vst [vmem:[%s296 + $0x10] sm:%s288] %v301
                %v303 = vld [vmem:[%s295 + $0x48] sm:%s288]
                %304 = vst [vmem:[%s296 + $0x18] sm:%s288] %v303
                %v305 = vld [vmem:[%s295 + $0x60] sm:%s288]
                %306 = vst [vmem:[%s296 + $0x20] sm:%s288] %v305
                %v307 = vld [vmem:[%s295 + $0x78] sm:%s288]
                %308 = vst [vmem:[%s296 + $0x28] sm:%s288] %v307
              $region83: #{globalnetwork_forward.2} parent=77 // loop_footer
                %s294 = sadd.s32 1, %s290
              $region84: #{globalnetwork_forward.2} parent=77 // loop_footer_branch
                %289 = sbr.rel target = $region80
              $region85: #{globalnetwork_forward.2} parent=77 // loop_exit
                _
            $region78: #{globalnetwork_forward.2} parent=69 // pred_fallthru
              _
          $region70: #{globalnetwork_forward.2} parent=65 // pred_fallthru
            _
          %333 = vnop
        $region66: #{globalnetwork_forward.2} parent=23 // pred_fallthru
          _
      $region24: #{globalnetwork_forward.2} parent=5 // pred_fallthru
        _
      %p334 = scmp.le.s32.totalorder 1, %s12
      %p335 = scmp.lt.s32.totalorder %s12, 5
      %p336 = pnand %p334, %p335
      %p337 = pneg %p336
      // Predicated region
      $region101: #{globalnetwork_forward.2} parent=5 // pred_check
        _
      $region102: #{globalnetwork_forward.2} parent=5 // pred_check_branch
        %339 = sbr.rel (%p336) target = $region104
      $region103: #{globalnetwork_forward.2} parent=5 // pred_region
        %s340 = ssub.s32 %s12, 1
        %s341 = sand.u32 %s39, 1
        %s342 = sand.u32 %s39, 1
        %s343 = smul.addr %s342, 48
        %s344 = scalar_lea.vmem [#allocation2], %s343
        // Predicated region
        $region105: #{globalnetwork_forward.2} parent=103 // pred_check
          %p345 = pneg %p52
        $region106: #{globalnetwork_forward.2} parent=103 // pred_check_branch
          %347 = sbr.rel (%p345) target = $region108
        $region107: #{globalnetwork_forward.2} parent=103 // pred_region
          _
        $region108: #{globalnetwork_forward.2} parent=103 // pred_fallthru
          _
        %s348 = sand.u32 %s69, 1
        %s349 = sand.u32 %s69, 1
        %s350 = smul.addr %s349, 48
        %s351 = scalar_lea.vmem [#allocation3], %s350
        // Predicated region
        $region109: #{globalnetwork_forward.2} parent=103 // pred_check
          %p352 = pneg %p82
        $region110: #{globalnetwork_forward.2} parent=103 // pred_check_branch
          %354 = sbr.rel (%p352) target = $region112
        $region111: #{globalnetwork_forward.2} parent=103 // pred_region
          _
        $region112: #{globalnetwork_forward.2} parent=103 // pred_fallthru
          _
        %s355 = sand.u32 %s39, 1
        %s356 = sand.u32 %s39, 1
        %s357 = smul.addr %s356, 48
        %s358 = scalar_lea.vmem [#allocation2], %s357
        %p359 = pneg %p52
        %p360 = pneg %p49
        %s361 = sand.u32 %s69, 1
        %s362 = sand.u32 %s69, 1
        %s363 = smul.addr %s362, 48
        %s364 = scalar_lea.vmem [#allocation3], %s363
        %p365 = pneg %p82
        %p366 = pneg %p79
        %p367 = pneg %p103
        %p368 = pneg %p100
        %p369 = pneg %p124
        %p370 = pneg %p121
        %p371 = pneg %p152
        %p372 = pneg %p149
        %s373 = sand.u32 %s139, 1
        %s374 = sand.u32 %s139, 1
        %s375 = smul.addr %s374, 40
        %s376 = scalar_lea.vmem [#allocation4], %s375
        %p377 = pneg %p180
        %p378 = pneg %p177
        %p379 = scmp.lt.s32.totalorder %s21, 1
        %s380 = scalar_select %p379, %s21, 1
        %p381 = scmp.lt.s32.totalorder %s22, 1
        %s382 = scalar_select %p381, %s22, 1
        %s383 = smul.addr %s382, 5
        %s384 = smul.addr %s380, 10
        %s385 = sadd.s32 %s383, %s384
        %s386 = smul.addr %s385, 8
        %s387 = scalar_lea.vmem %s5, %s386
        %s388 = sadd.s32 %s22, 1
        %p389 = scmp.lt.s32.totalorder %s21, 1
        %s390 = scalar_select %p389, %s21, 1
        %p391 = scmp.lt.s32.totalorder %s22, 1
        %s392 = scalar_select %p391, %s22, 1
        %s393 = smul.addr %s392, 5
        %s394 = smul.addr %s390, 10
        %s395 = sadd.s32 %s393, %s394
        %s396 = smul.addr %s395, 8
        %s397 = scalar_lea.vmem %s5, %s396
        %v398 = vld [vmem:[%s344] sm:$0xff]
        %v399 = vld [vmem:[%s344 + $0x8] sm:$0xff]
        %v400 = vld [vmem:[%s344 + $0x10] sm:$0xff]
        %v401 = vld [vmem:[%s344 + $0x18] sm:$0xff]
        %v402 = vld [vmem:[%s344 + $0x20] sm:$0xff]
        %v403 = vld [vmem:[%s344 + $0x28] sm:$0xf]
        %v404 = vld [vmem:[%s351] sm:$0xff]
        %v405 = vld [vmem:[%s351 + $0x8] sm:$0xff]
        %v406 = vld [vmem:[%s351 + $0x10] sm:$0xff]
        %v407 = vld [vmem:[%s351 + $0x18] sm:$0xff]
        %v408 = vld [vmem:[%s351 + $0x20] sm:$0xff]
        %v409 = vld [vmem:[%s351 + $0x28] sm:$0xf]
        %v410 = vld [vmem:[%s2] sm:$0xff]
        %v411 = vld [vmem:[%s2 + $0x8] sm:$0xff]
        %v412 = vld [vmem:[%s2 + $0x10] sm:$0xff]
        %v413 = vld [vmem:[%s2 + $0x18] sm:$0xff]
        %v414 = vld [vmem:[%s2 + $0x20] sm:$0xff]
        %s415 = scalar_lea.vmem %s2, 40
        %v416 = vld [vmem:[%s415] sm:$0xff]
        %v417 = vld [vmem:[%s415 + $0x8] sm:$0xff]
        %v418 = vld [vmem:[%s415 + $0x10] sm:$0xff]
        %v419 = vld [vmem:[%s415 + $0x18] sm:$0xff]
        %v420 = vld [vmem:[%s415 + $0x20] sm:$0xff]
        %433 = vrot.lane.b32.xlu0 %v398, 127
        %v434 = vpop.permute.xlu0 %433
        %435 = vrot.lane.b32.xlu0 %v404, 127
        %v436 = vpop.permute.xlu0 %435
        %437 = vrot.lane.b32.xlu0 %v399, 127
        %v438 = vpop.permute.xlu0 %437
        %439 = vrot.lane.b32.xlu0 %v405, 127
        %v440 = vpop.permute.xlu0 %439
        %441 = vrot.lane.b32.xlu0 %v400, 127
        %v442 = vpop.permute.xlu0 %441
        %443 = vrot.lane.b32.xlu0 %v406, 127
        %v444 = vpop.permute.xlu0 %443
        %445 = vrot.lane.b32.xlu0 %v401, 127
        %v446 = vpop.permute.xlu0 %445
        %447 = vrot.lane.b32.xlu0 %v407, 127
        %v448 = vpop.permute.xlu0 %447
        %449 = vrot.lane.b32.xlu0 %v402, 127
        %v450 = vpop.permute.xlu0 %449
        %451 = vrot.lane.b32.xlu0 %v408, 127
        %v452 = vpop.permute.xlu0 %451
        %453 = vrot.lane.b32.xlu0 %v403, 127
        %v454 = vpop.permute.xlu0 %453
        %455 = vrot.lane.b32.xlu0 %v409, 127
        %v456 = vpop.permute.xlu0 %455
        %vm457 = vcmask 1039360
        %v458 = vsel %vm457, %v434, %v436
        %v459 = vsel %vm457, %v438, %v440
        %v460 = vsel %vm457, %v442, %v444
        %v461 = vsel %vm457, %v446, %v448
        %v462 = vsel %vm457, %v450, %v452
        %v463 = vsel %vm457, %v454, %v456
        %vm469 = vcmask 359424
        %v471 = vsel %vm469, %v416, 0
        %v474 = vsel %vm469, %v417, 0
        %v477 = vsel %vm469, %v418, 0
        %v480 = vsel %vm469, %v419, 0
        %v483 = vsel %vm469, %v420, 0
        %vm485 = vcmask 1043456
        %v486 = vsel %vm485, %v463, 0
        %488 = vmatpush.msra.mxu0 0.0
        %489 = vmatpush.msra.mxu0 0.0
        %490 = vmatpush.msra.mxu0 0.0
        %491 = vmatpush.msra.mxu0 0.0
        %492 = vmatpush.msra.mxu0 0.0
        %493 = vmatpush.msra.mxu0 0.0
        %494 = vmatpush.msra.mxu0 0.0
        %495 = vmatpush.msra.mxu0 0.0
        %496 = vmatpush.msra.mxu0 0.0
        %497 = vmatpush.msra.mxu0 0.0
        %498 = vmatpush.msra.mxu0 %v486
        %499 = vmatpush.msra.mxu0 %v462
        %500 = vmatpush.msra.mxu0 %v461
        %501 = vmatpush.msra.mxu0 %v460
        %502 = vmatpush.msra.mxu0 %v459
        %503 = vmatpush.msra.mxu0 %v458
        %504 = vmatmul.f32.gmra.mxu0 %v471
        %v505 = vpop.f32.mrf.mxu0
        %v506 = vadd.f32 0.0, %v505
        %507 = vmatmul.f32.gmra.mxu0 %v474
        %v508 = vpop.f32.mrf.mxu0
        %v509 = vadd.f32 0.0, %v508
        %510 = vmatmul.f32.gmra.mxu0 %v477
        %v511 = vpop.f32.mrf.mxu0
        %v512 = vadd.f32 0.0, %v511
        %513 = vmatmul.f32.gmra.mxu0 %v480
        %v514 = vpop.f32.mrf.mxu0
        %v515 = vadd.f32 0.0, %v514
        %516 = vmatmul.f32.gmra.mxu0 %v483
        %v517 = vpop.f32.mrf.mxu0
        %v518 = vadd.f32 0.0, %v517
        %519 = vdwg.mxu0
        %v521 = vsel %vm469, %v410, 0
        %v524 = vsel %vm469, %v411, 0
        %v527 = vsel %vm469, %v412, 0
        %v530 = vsel %vm469, %v413, 0
        %v533 = vsel %vm469, %v414, 0
        %v535 = vsel %vm485, %v403, 0
        %537 = vmatpush.msra.mxu0 0.0
        %538 = vmatpush.msra.mxu0 0.0
        %539 = vmatpush.msra.mxu0 0.0
        %540 = vmatpush.msra.mxu0 0.0
        %541 = vmatpush.msra.mxu0 0.0
        %542 = vmatpush.msra.mxu0 0.0
        %543 = vmatpush.msra.mxu0 0.0
        %544 = vmatpush.msra.mxu0 0.0
        %545 = vmatpush.msra.mxu0 0.0
        %546 = vmatpush.msra.mxu0 0.0
        %547 = vmatpush.msra.mxu0 %v535
        %548 = vmatpush.msra.mxu0 %v402
        %549 = vmatpush.msra.mxu0 %v401
        %550 = vmatpush.msra.mxu0 %v400
        %551 = vmatpush.msra.mxu0 %v399
        %552 = vmatpush.msra.mxu0 %v398
        %553 = vmatmul.f32.gmra.mxu0 %v521
        %v554 = vpop.f32.mrf.mxu0
        %v555 = vadd.f32 %v506, %v554
        %556 = vmatmul.f32.gmra.mxu0 %v524
        %v557 = vpop.f32.mrf.mxu0
        %v558 = vadd.f32 %v509, %v557
        %559 = vmatmul.f32.gmra.mxu0 %v527
        %v560 = vpop.f32.mrf.mxu0
        %v561 = vadd.f32 %v512, %v560
        %562 = vmatmul.f32.gmra.mxu0 %v530
        %v563 = vpop.f32.mrf.mxu0
        %v564 = vadd.f32 %v515, %v563
        %565 = vmatmul.f32.gmra.mxu0 %v533
        %v566 = vpop.f32.mrf.mxu0
        %v567 = vadd.f32 %v518, %v566
        %568 = vdwg.mxu0
        %s569 = scalar_lea.vmem %s2, 80
        %v570 = vld [vmem:[%s569] sm:$0xff]
        %v571 = vld [vmem:[%s569 + $0x8] sm:$0xff]
        %v572 = vld [vmem:[%s569 + $0x10] sm:$0xff]
        %v573 = vld [vmem:[%s569 + $0x18] sm:$0xff]
        %v574 = vld [vmem:[%s569 + $0x20] sm:$0xff]
        %575 = vrot.lane.b32.xlu0 %v398, 126
        %v576 = vpop.permute.xlu0 %575
        %577 = vrot.lane.b32.xlu0 %v404, 126
        %v578 = vpop.permute.xlu0 %577
        %579 = vrot.lane.b32.xlu0 %v399, 126
        %v580 = vpop.permute.xlu0 %579
        %581 = vrot.lane.b32.xlu0 %v405, 126
        %v582 = vpop.permute.xlu0 %581
        %583 = vrot.lane.b32.xlu0 %v400, 126
        %v584 = vpop.permute.xlu0 %583
        %585 = vrot.lane.b32.xlu0 %v406, 126
        %v586 = vpop.permute.xlu0 %585
        %587 = vrot.lane.b32.xlu0 %v401, 126
        %v588 = vpop.permute.xlu0 %587
        %589 = vrot.lane.b32.xlu0 %v407, 126
        %v590 = vpop.permute.xlu0 %589
        %591 = vrot.lane.b32.xlu0 %v402, 126
        %v592 = vpop.permute.xlu0 %591
        %593 = vrot.lane.b32.xlu0 %v408, 126
        %v594 = vpop.permute.xlu0 %593
        %595 = vrot.lane.b32.xlu0 %v403, 126
        %v596 = vpop.permute.xlu0 %595
        %597 = vrot.lane.b32.xlu0 %v409, 126
        %v598 = vpop.permute.xlu0 %597
        %vm599 = vcmask 1031168
        %v600 = vsel %vm599, %v576, %v578
        %v601 = vsel %vm599, %v580, %v582
        %v602 = vsel %vm599, %v584, %v586
        %v603 = vsel %vm599, %v588, %v590
        %v604 = vsel %vm599, %v592, %v594
        %v605 = vsel %vm599, %v596, %v598
        %v612 = vsel %vm469, %v570, 0
        %v615 = vsel %vm469, %v571, 0
        %v618 = vsel %vm469, %v572, 0
        %v621 = vsel %vm469, %v573, 0
        %v624 = vsel %vm469, %v574, 0
        %v626 = vsel %vm485, %v605, 0
        %628 = vmatpush.msra.mxu0 0.0
        %629 = vmatpush.msra.mxu0 0.0
        %630 = vmatpush.msra.mxu0 0.0
        %631 = vmatpush.msra.mxu0 0.0
        %632 = vmatpush.msra.mxu0 0.0
        %633 = vmatpush.msra.mxu0 0.0
        %634 = vmatpush.msra.mxu0 0.0
        %635 = vmatpush.msra.mxu0 0.0
        %636 = vmatpush.msra.mxu0 0.0
        %637 = vmatpush.msra.mxu0 0.0
        %638 = vmatpush.msra.mxu0 %v626
        %639 = vmatpush.msra.mxu0 %v604
        %640 = vmatpush.msra.mxu0 %v603
        %641 = vmatpush.msra.mxu0 %v602
        %642 = vmatpush.msra.mxu0 %v601
        %643 = vmatpush.msra.mxu0 %v600
        %644 = vmatmul.f32.gmra.mxu0 %v612
        %v645 = vpop.f32.mrf.mxu0
        %v646 = vadd.f32 0.0, %v645
        %647 = vmatmul.f32.gmra.mxu0 %v615
        %v648 = vpop.f32.mrf.mxu0
        %v649 = vadd.f32 0.0, %v648
        %650 = vmatmul.f32.gmra.mxu0 %v618
        %v651 = vpop.f32.mrf.mxu0
        %v652 = vadd.f32 0.0, %v651
        %653 = vmatmul.f32.gmra.mxu0 %v621
        %v654 = vpop.f32.mrf.mxu0
        %v655 = vadd.f32 0.0, %v654
        %656 = vmatmul.f32.gmra.mxu0 %v624
        %v657 = vpop.f32.mrf.mxu0
        %v658 = vadd.f32 0.0, %v657
        %659 = vdwg.mxu0
        %v660 = vadd.f32 %v555, %v646
        %v661 = vadd.f32 %v558, %v649
        %v662 = vadd.f32 %v561, %v652
        %v663 = vadd.f32 %v564, %v655
        %v664 = vadd.f32 %v567, %v658
        %s665 = scalar_lea.vmem %s2, 120
        %v666 = vld [vmem:[%s665] sm:$0xff]
        %v667 = vld [vmem:[%s665 + $0x8] sm:$0xff]
        %v668 = vld [vmem:[%s665 + $0x10] sm:$0xff]
        %v669 = vld [vmem:[%s665 + $0x18] sm:$0xff]
        %v670 = vld [vmem:[%s665 + $0x20] sm:$0xff]
        %671 = vrot.lane.b32.xlu0 %v398, 125
        %v672 = vpop.permute.xlu0 %671
        %673 = vrot.lane.b32.xlu0 %v404, 125
        %v674 = vpop.permute.xlu0 %673
        %675 = vrot.lane.b32.xlu0 %v399, 125
        %v676 = vpop.permute.xlu0 %675
        %677 = vrot.lane.b32.xlu0 %v405, 125
        %v678 = vpop.permute.xlu0 %677
        %679 = vrot.lane.b32.xlu0 %v400, 125
        %v680 = vpop.permute.xlu0 %679
        %681 = vrot.lane.b32.xlu0 %v406, 125
        %v682 = vpop.permute.xlu0 %681
        %683 = vrot.lane.b32.xlu0 %v401, 125
        %v684 = vpop.permute.xlu0 %683
        %685 = vrot.lane.b32.xlu0 %v407, 125
        %v686 = vpop.permute.xlu0 %685
        %687 = vrot.lane.b32.xlu0 %v402, 125
        %v688 = vpop.permute.xlu0 %687
        %689 = vrot.lane.b32.xlu0 %v408, 125
        %v690 = vpop.permute.xlu0 %689
        %691 = vrot.lane.b32.xlu0 %v403, 125
        %v692 = vpop.permute.xlu0 %691
        %693 = vrot.lane.b32.xlu0 %v409, 125
        %v694 = vpop.permute.xlu0 %693
        %vm695 = vcmask 1022976
        %v696 = vsel %vm695, %v672, %v674
        %v697 = vsel %vm695, %v676, %v678
        %v698 = vsel %vm695, %v680, %v682
        %v699 = vsel %vm695, %v684, %v686
        %v700 = vsel %vm695, %v688, %v690
        %v701 = vsel %vm695, %v692, %v694
        %v708 = vsel %vm469, %v666, 0
        %v711 = vsel %vm469, %v667, 0
        %v714 = vsel %vm469, %v668, 0
        %v717 = vsel %vm469, %v669, 0
        %v720 = vsel %vm469, %v670, 0
        %v722 = vsel %vm485, %v701, 0
        %724 = vmatpush.msra.mxu0 0.0
        %725 = vmatpush.msra.mxu0 0.0
        %726 = vmatpush.msra.mxu0 0.0
        %727 = vmatpush.msra.mxu0 0.0
        %728 = vmatpush.msra.mxu0 0.0
        %729 = vmatpush.msra.mxu0 0.0
        %730 = vmatpush.msra.mxu0 0.0
        %731 = vmatpush.msra.mxu0 0.0
        %732 = vmatpush.msra.mxu0 0.0
        %733 = vmatpush.msra.mxu0 0.0
        %734 = vmatpush.msra.mxu0 %v722
        %735 = vmatpush.msra.mxu0 %v700
        %736 = vmatpush.msra.mxu0 %v699
        %737 = vmatpush.msra.mxu0 %v698
        %738 = vmatpush.msra.mxu0 %v697
        %739 = vmatpush.msra.mxu0 %v696
        %740 = vmatmul.f32.gmra.mxu0 %v708
        %v741 = vpop.f32.mrf.mxu0
        %v742 = vadd.f32 0.0, %v741
        %743 = vmatmul.f32.gmra.mxu0 %v711
        %v744 = vpop.f32.mrf.mxu0
        %v745 = vadd.f32 0.0, %v744
        %746 = vmatmul.f32.gmra.mxu0 %v714
        %v747 = vpop.f32.mrf.mxu0
        %v748 = vadd.f32 0.0, %v747
        %749 = vmatmul.f32.gmra.mxu0 %v717
        %v750 = vpop.f32.mrf.mxu0
        %v751 = vadd.f32 0.0, %v750
        %752 = vmatmul.f32.gmra.mxu0 %v720
        %v753 = vpop.f32.mrf.mxu0
        %v754 = vadd.f32 0.0, %v753
        %755 = vdwg.mxu0
        %v756 = vadd.f32 %v660, %v742
        %v757 = vadd.f32 %v661, %v745
        %v758 = vadd.f32 %v662, %v748
        %v759 = vadd.f32 %v663, %v751
        %v760 = vadd.f32 %v664, %v754
        %s761 = scalar_lea.vmem %s2, 160
        %v762 = vld [vmem:[%s761] sm:$0xff]
        %v763 = vld [vmem:[%s761 + $0x8] sm:$0xff]
        %v764 = vld [vmem:[%s761 + $0x10] sm:$0xff]
        %v765 = vld [vmem:[%s761 + $0x18] sm:$0xff]
        %v766 = vld [vmem:[%s761 + $0x20] sm:$0xff]
        %767 = vrot.lane.b32.xlu0 %v398, 124
        %v768 = vpop.permute.xlu0 %767
        %769 = vrot.lane.b32.xlu0 %v404, 124
        %v770 = vpop.permute.xlu0 %769
        %771 = vrot.lane.b32.xlu0 %v399, 124
        %v772 = vpop.permute.xlu0 %771
        %773 = vrot.lane.b32.xlu0 %v405, 124
        %v774 = vpop.permute.xlu0 %773
        %775 = vrot.lane.b32.xlu0 %v400, 124
        %v776 = vpop.permute.xlu0 %775
        %777 = vrot.lane.b32.xlu0 %v406, 124
        %v778 = vpop.permute.xlu0 %777
        %779 = vrot.lane.b32.xlu0 %v401, 124
        %v780 = vpop.permute.xlu0 %779
        %781 = vrot.lane.b32.xlu0 %v407, 124
        %v782 = vpop.permute.xlu0 %781
        %783 = vrot.lane.b32.xlu0 %v402, 124
        %v784 = vpop.permute.xlu0 %783
        %785 = vrot.lane.b32.xlu0 %v408, 124
        %v786 = vpop.permute.xlu0 %785
        %787 = vrot.lane.b32.xlu0 %v403, 124
        %v788 = vpop.permute.xlu0 %787
        %789 = vrot.lane.b32.xlu0 %v409, 124
        %v790 = vpop.permute.xlu0 %789
        %vm791 = vcmask 1014784
        %v792 = vsel %vm791, %v768, %v770
        %v793 = vsel %vm791, %v772, %v774
        %v794 = vsel %vm791, %v776, %v778
        %v795 = vsel %vm791, %v780, %v782
        %v796 = vsel %vm791, %v784, %v786
        %v797 = vsel %vm791, %v788, %v790
        %v804 = vsel %vm469, %v762, 0
        %v807 = vsel %vm469, %v763, 0
        %v810 = vsel %vm469, %v764, 0
        %v813 = vsel %vm469, %v765, 0
        %v816 = vsel %vm469, %v766, 0
        %v818 = vsel %vm485, %v797, 0
        %820 = vmatpush.msra.mxu0 0.0
        %821 = vmatpush.msra.mxu0 0.0
        %822 = vmatpush.msra.mxu0 0.0
        %823 = vmatpush.msra.mxu0 0.0
        %824 = vmatpush.msra.mxu0 0.0
        %825 = vmatpush.msra.mxu0 0.0
        %826 = vmatpush.msra.mxu0 0.0
        %827 = vmatpush.msra.mxu0 0.0
        %828 = vmatpush.msra.mxu0 0.0
        %829 = vmatpush.msra.mxu0 0.0
        %830 = vmatpush.msra.mxu0 %v818
        %831 = vmatpush.msra.mxu0 %v796
        %832 = vmatpush.msra.mxu0 %v795
        %833 = vmatpush.msra.mxu0 %v794
        %834 = vmatpush.msra.mxu0 %v793
        %835 = vmatpush.msra.mxu0 %v792
        %836 = vmatmul.f32.gmra.mxu0 %v804
        %v837 = vpop.f32.mrf.mxu0
        %v838 = vadd.f32 0.0, %v837
        %839 = vmatmul.f32.gmra.mxu0 %v807
        %v840 = vpop.f32.mrf.mxu0
        %v841 = vadd.f32 0.0, %v840
        %842 = vmatmul.f32.gmra.mxu0 %v810
        %v843 = vpop.f32.mrf.mxu0
        %v844 = vadd.f32 0.0, %v843
        %845 = vmatmul.f32.gmra.mxu0 %v813
        %v846 = vpop.f32.mrf.mxu0
        %v847 = vadd.f32 0.0, %v846
        %848 = vmatmul.f32.gmra.mxu0 %v816
        %v849 = vpop.f32.mrf.mxu0
        %v850 = vadd.f32 0.0, %v849
        %851 = vdwg.mxu0
        %v852 = vadd.f32 %v756, %v838
        %v853 = vadd.f32 %v757, %v841
        %v854 = vadd.f32 %v758, %v844
        %v855 = vadd.f32 %v759, %v847
        %v856 = vadd.f32 %v760, %v850
        %s857 = scalar_lea.vmem %s2, 200
        %v858 = vld [vmem:[%s857] sm:$0xff]
        %v859 = vld [vmem:[%s857 + $0x8] sm:$0xff]
        %v860 = vld [vmem:[%s857 + $0x10] sm:$0xff]
        %v861 = vld [vmem:[%s857 + $0x18] sm:$0xff]
        %v862 = vld [vmem:[%s857 + $0x20] sm:$0xff]
        %863 = vrot.lane.b32.xlu0 %v398, 123
        %v864 = vpop.permute.xlu0 %863
        %865 = vrot.lane.b32.xlu0 %v404, 123
        %v866 = vpop.permute.xlu0 %865
        %867 = vrot.lane.b32.xlu0 %v399, 123
        %v868 = vpop.permute.xlu0 %867
        %869 = vrot.lane.b32.xlu0 %v405, 123
        %v870 = vpop.permute.xlu0 %869
        %871 = vrot.lane.b32.xlu0 %v400, 123
        %v872 = vpop.permute.xlu0 %871
        %873 = vrot.lane.b32.xlu0 %v406, 123
        %v874 = vpop.permute.xlu0 %873
        %875 = vrot.lane.b32.xlu0 %v401, 123
        %v876 = vpop.permute.xlu0 %875
        %877 = vrot.lane.b32.xlu0 %v407, 123
        %v878 = vpop.permute.xlu0 %877
        %879 = vrot.lane.b32.xlu0 %v402, 123
        %v880 = vpop.permute.xlu0 %879
        %881 = vrot.lane.b32.xlu0 %v408, 123
        %v882 = vpop.permute.xlu0 %881
        %883 = vrot.lane.b32.xlu0 %v403, 123
        %v884 = vpop.permute.xlu0 %883
        %885 = vrot.lane.b32.xlu0 %v409, 123
        %v886 = vpop.permute.xlu0 %885
        %vm887 = vcmask 1006592
        %v888 = vsel %vm887, %v864, %v866
        %v889 = vsel %vm887, %v868, %v870
        %v890 = vsel %vm887, %v872, %v874
        %v891 = vsel %vm887, %v876, %v878
        %v892 = vsel %vm887, %v880, %v882
        %v893 = vsel %vm887, %v884, %v886
        %v900 = vsel %vm469, %v858, 0
        %v903 = vsel %vm469, %v859, 0
        %v906 = vsel %vm469, %v860, 0
        %v909 = vsel %vm469, %v861, 0
        %v912 = vsel %vm469, %v862, 0
        %v914 = vsel %vm485, %v893, 0
        %916 = vmatpush.msra.mxu0 0.0
        %917 = vmatpush.msra.mxu0 0.0
        %918 = vmatpush.msra.mxu0 0.0
        %919 = vmatpush.msra.mxu0 0.0
        %920 = vmatpush.msra.mxu0 0.0
        %921 = vmatpush.msra.mxu0 0.0
        %922 = vmatpush.msra.mxu0 0.0
        %923 = vmatpush.msra.mxu0 0.0
        %924 = vmatpush.msra.mxu0 0.0
        %925 = vmatpush.msra.mxu0 0.0
        %926 = vmatpush.msra.mxu0 %v914
        %927 = vmatpush.msra.mxu0 %v892
        %928 = vmatpush.msra.mxu0 %v891
        %929 = vmatpush.msra.mxu0 %v890
        %930 = vmatpush.msra.mxu0 %v889
        %931 = vmatpush.msra.mxu0 %v888
        %932 = vmatmul.f32.gmra.mxu0 %v900
        %v933 = vpop.f32.mrf.mxu0
        %v934 = vadd.f32 0.0, %v933
        %935 = vmatmul.f32.gmra.mxu0 %v903
        %v936 = vpop.f32.mrf.mxu0
        %v937 = vadd.f32 0.0, %v936
        %938 = vmatmul.f32.gmra.mxu0 %v906
        %v939 = vpop.f32.mrf.mxu0
        %v940 = vadd.f32 0.0, %v939
        %941 = vmatmul.f32.gmra.mxu0 %v909
        %v942 = vpop.f32.mrf.mxu0
        %v943 = vadd.f32 0.0, %v942
        %944 = vmatmul.f32.gmra.mxu0 %v912
        %v945 = vpop.f32.mrf.mxu0
        %v946 = vadd.f32 0.0, %v945
        %947 = vdwg.mxu0
        %v948 = vadd.f32 %v852, %v934
        %v949 = vadd.f32 %v853, %v937
        %v950 = vadd.f32 %v854, %v940
        %v951 = vadd.f32 %v855, %v943
        %v952 = vadd.f32 %v856, %v946
        %s953 = scalar_lea.vmem %s2, 240
        %v954 = vld [vmem:[%s953] sm:$0xff]
        %v955 = vld [vmem:[%s953 + $0x8] sm:$0xff]
        %v956 = vld [vmem:[%s953 + $0x10] sm:$0xff]
        %v957 = vld [vmem:[%s953 + $0x18] sm:$0xff]
        %v958 = vld [vmem:[%s953 + $0x20] sm:$0xff]
        %959 = vrot.lane.b32.xlu0 %v398, 122
        %v960 = vpop.permute.xlu0 %959
        %961 = vrot.lane.b32.xlu0 %v404, 122
        %v962 = vpop.permute.xlu0 %961
        %963 = vrot.lane.b32.xlu0 %v399, 122
        %v964 = vpop.permute.xlu0 %963
        %965 = vrot.lane.b32.xlu0 %v405, 122
        %v966 = vpop.permute.xlu0 %965
        %967 = vrot.lane.b32.xlu0 %v400, 122
        %v968 = vpop.permute.xlu0 %967
        %969 = vrot.lane.b32.xlu0 %v406, 122
        %v970 = vpop.permute.xlu0 %969
        %971 = vrot.lane.b32.xlu0 %v401, 122
        %v972 = vpop.permute.xlu0 %971
        %973 = vrot.lane.b32.xlu0 %v407, 122
        %v974 = vpop.permute.xlu0 %973
        %975 = vrot.lane.b32.xlu0 %v402, 122
        %v976 = vpop.permute.xlu0 %975
        %977 = vrot.lane.b32.xlu0 %v408, 122
        %v978 = vpop.permute.xlu0 %977
        %979 = vrot.lane.b32.xlu0 %v403, 122
        %v980 = vpop.permute.xlu0 %979
        %981 = vrot.lane.b32.xlu0 %v409, 122
        %v982 = vpop.permute.xlu0 %981
        %vm983 = vcmask 998400
        %v984 = vsel %vm983, %v960, %v962
        %v985 = vsel %vm983, %v964, %v966
        %v986 = vsel %vm983, %v968, %v970
        %v987 = vsel %vm983, %v972, %v974
        %v988 = vsel %vm983, %v976, %v978
        %v989 = vsel %vm983, %v980, %v982
        %v996 = vsel %vm469, %v954, 0
        %v999 = vsel %vm469, %v955, 0
        %v1002 = vsel %vm469, %v956, 0
        %v1005 = vsel %vm469, %v957, 0
        %v1008 = vsel %vm469, %v958, 0
        %v1010 = vsel %vm485, %v989, 0
        %1012 = vmatpush.msra.mxu0 0.0
        %1013 = vmatpush.msra.mxu0 0.0
        %1014 = vmatpush.msra.mxu0 0.0
        %1015 = vmatpush.msra.mxu0 0.0
        %1016 = vmatpush.msra.mxu0 0.0
        %1017 = vmatpush.msra.mxu0 0.0
        %1018 = vmatpush.msra.mxu0 0.0
        %1019 = vmatpush.msra.mxu0 0.0
        %1020 = vmatpush.msra.mxu0 0.0
        %1021 = vmatpush.msra.mxu0 0.0
        %1022 = vmatpush.msra.mxu0 %v1010
        %1023 = vmatpush.msra.mxu0 %v988
        %1024 = vmatpush.msra.mxu0 %v987
        %1025 = vmatpush.msra.mxu0 %v986
        %1026 = vmatpush.msra.mxu0 %v985
        %1027 = vmatpush.msra.mxu0 %v984
        %1028 = vmatmul.f32.gmra.mxu0 %v996
        %v1029 = vpop.f32.mrf.mxu0
        %v1030 = vadd.f32 0.0, %v1029
        %1031 = vmatmul.f32.gmra.mxu0 %v999
        %v1032 = vpop.f32.mrf.mxu0
        %v1033 = vadd.f32 0.0, %v1032
        %1034 = vmatmul.f32.gmra.mxu0 %v1002
        %v1035 = vpop.f32.mrf.mxu0
        %v1036 = vadd.f32 0.0, %v1035
        %1037 = vmatmul.f32.gmra.mxu0 %v1005
        %v1038 = vpop.f32.mrf.mxu0
        %v1039 = vadd.f32 0.0, %v1038
        %1040 = vmatmul.f32.gmra.mxu0 %v1008
        %v1041 = vpop.f32.mrf.mxu0
        %v1042 = vadd.f32 0.0, %v1041
        %1043 = vdwg.mxu0
        %v1044 = vadd.f32 %v948, %v1030
        %v1045 = vadd.f32 %v949, %v1033
        %v1046 = vadd.f32 %v950, %v1036
        %v1047 = vadd.f32 %v951, %v1039
        %v1048 = vadd.f32 %v952, %v1042
        %s1049 = scalar_lea.vmem %s2, 280
        %v1050 = vld [vmem:[%s1049] sm:$0xff]
        %v1051 = vld [vmem:[%s1049 + $0x8] sm:$0xff]
        %v1052 = vld [vmem:[%s1049 + $0x10] sm:$0xff]
        %v1053 = vld [vmem:[%s1049 + $0x18] sm:$0xff]
        %v1054 = vld [vmem:[%s1049 + $0x20] sm:$0xff]
        %1055 = vrot.lane.b32.xlu0 %v398, 121
        %v1056 = vpop.permute.xlu0 %1055
        %1057 = vrot.lane.b32.xlu0 %v404, 121
        %v1058 = vpop.permute.xlu0 %1057
        %1059 = vrot.lane.b32.xlu0 %v399, 121
        %v1060 = vpop.permute.xlu0 %1059
        %1061 = vrot.lane.b32.xlu0 %v405, 121
        %v1062 = vpop.permute.xlu0 %1061
        %1063 = vrot.lane.b32.xlu0 %v400, 121
        %v1064 = vpop.permute.xlu0 %1063
        %1065 = vrot.lane.b32.xlu0 %v406, 121
        %v1066 = vpop.permute.xlu0 %1065
        %1067 = vrot.lane.b32.xlu0 %v401, 121
        %v1068 = vpop.permute.xlu0 %1067
        %1069 = vrot.lane.b32.xlu0 %v407, 121
        %v1070 = vpop.permute.xlu0 %1069
        %1071 = vrot.lane.b32.xlu0 %v402, 121
        %v1072 = vpop.permute.xlu0 %1071
        %1073 = vrot.lane.b32.xlu0 %v408, 121
        %v1074 = vpop.permute.xlu0 %1073
        %1075 = vrot.lane.b32.xlu0 %v403, 121
        %v1076 = vpop.permute.xlu0 %1075
        %1077 = vrot.lane.b32.xlu0 %v409, 121
        %v1078 = vpop.permute.xlu0 %1077
        %vm1079 = vcmask 990208
        %v1080 = vsel %vm1079, %v1056, %v1058
        %v1081 = vsel %vm1079, %v1060, %v1062
        %v1082 = vsel %vm1079, %v1064, %v1066
        %v1083 = vsel %vm1079, %v1068, %v1070
        %v1084 = vsel %vm1079, %v1072, %v1074
        %v1085 = vsel %vm1079, %v1076, %v1078
        %v1092 = vsel %vm469, %v1050, 0
        %v1095 = vsel %vm469, %v1051, 0
        %v1098 = vsel %vm469, %v1052, 0
        %v1101 = vsel %vm469, %v1053, 0
        %v1104 = vsel %vm469, %v1054, 0
        %v1106 = vsel %vm485, %v1085, 0
        %1108 = vmatpush.msra.mxu0 0.0
        %1109 = vmatpush.msra.mxu0 0.0
        %1110 = vmatpush.msra.mxu0 0.0
        %1111 = vmatpush.msra.mxu0 0.0
        %1112 = vmatpush.msra.mxu0 0.0
        %1113 = vmatpush.msra.mxu0 0.0
        %1114 = vmatpush.msra.mxu0 0.0
        %1115 = vmatpush.msra.mxu0 0.0
        %1116 = vmatpush.msra.mxu0 0.0
        %1117 = vmatpush.msra.mxu0 0.0
        %1118 = vmatpush.msra.mxu0 %v1106
        %1119 = vmatpush.msra.mxu0 %v1084
        %1120 = vmatpush.msra.mxu0 %v1083
        %1121 = vmatpush.msra.mxu0 %v1082
        %1122 = vmatpush.msra.mxu0 %v1081
        %1123 = vmatpush.msra.mxu0 %v1080
        %1124 = vmatmul.f32.gmra.mxu0 %v1092
        %v1125 = vpop.f32.mrf.mxu0
        %v1126 = vadd.f32 0.0, %v1125
        %1127 = vmatmul.f32.gmra.mxu0 %v1095
        %v1128 = vpop.f32.mrf.mxu0
        %v1129 = vadd.f32 0.0, %v1128
        %1130 = vmatmul.f32.gmra.mxu0 %v1098
        %v1131 = vpop.f32.mrf.mxu0
        %v1132 = vadd.f32 0.0, %v1131
        %1133 = vmatmul.f32.gmra.mxu0 %v1101
        %v1134 = vpop.f32.mrf.mxu0
        %v1135 = vadd.f32 0.0, %v1134
        %1136 = vmatmul.f32.gmra.mxu0 %v1104
        %v1137 = vpop.f32.mrf.mxu0
        %v1138 = vadd.f32 0.0, %v1137
        %1139 = vdwg.mxu0
        %v1140 = vadd.f32 %v1044, %v1126
        %v1141 = vadd.f32 %v1045, %v1129
        %v1142 = vadd.f32 %v1046, %v1132
        %v1143 = vadd.f32 %v1047, %v1135
        %v1144 = vadd.f32 %v1048, %v1138
        %s1145 = scalar_lea.vmem %s2, 320
        %v1146 = vld [vmem:[%s1145] sm:$0xff]
        %v1147 = vld [vmem:[%s1145 + $0x8] sm:$0xff]
        %v1148 = vld [vmem:[%s1145 + $0x10] sm:$0xff]
        %v1149 = vld [vmem:[%s1145 + $0x18] sm:$0xff]
        %v1150 = vld [vmem:[%s1145 + $0x20] sm:$0xff]
        %1151 = vrot.lane.b32.xlu0 %v398, 120
        %v1152 = vpop.permute.xlu0 %1151
        %1153 = vrot.lane.b32.xlu0 %v404, 120
        %v1154 = vpop.permute.xlu0 %1153
        %1155 = vrot.lane.b32.xlu0 %v399, 120
        %v1156 = vpop.permute.xlu0 %1155
        %1157 = vrot.lane.b32.xlu0 %v405, 120
        %v1158 = vpop.permute.xlu0 %1157
        %1159 = vrot.lane.b32.xlu0 %v400, 120
        %v1160 = vpop.permute.xlu0 %1159
        %1161 = vrot.lane.b32.xlu0 %v406, 120
        %v1162 = vpop.permute.xlu0 %1161
        %1163 = vrot.lane.b32.xlu0 %v401, 120
        %v1164 = vpop.permute.xlu0 %1163
        %1165 = vrot.lane.b32.xlu0 %v407, 120
        %v1166 = vpop.permute.xlu0 %1165
        %1167 = vrot.lane.b32.xlu0 %v402, 120
        %v1168 = vpop.permute.xlu0 %1167
        %1169 = vrot.lane.b32.xlu0 %v408, 120
        %v1170 = vpop.permute.xlu0 %1169
        %1171 = vrot.lane.b32.xlu0 %v403, 120
        %v1172 = vpop.permute.xlu0 %1171
        %1173 = vrot.lane.b32.xlu0 %v409, 120
        %v1174 = vpop.permute.xlu0 %1173
        %vm1175 = vcmask 982016
        %v1176 = vsel %vm1175, %v1152, %v1154
        %v1177 = vsel %vm1175, %v1156, %v1158
        %v1178 = vsel %vm1175, %v1160, %v1162
        %v1179 = vsel %vm1175, %v1164, %v1166
        %v1180 = vsel %vm1175, %v1168, %v1170
        %v1181 = vsel %vm1175, %v1172, %v1174
        %v1188 = vsel %vm469, %v1146, 0
        %v1191 = vsel %vm469, %v1147, 0
        %v1194 = vsel %vm469, %v1148, 0
        %v1197 = vsel %vm469, %v1149, 0
        %v1200 = vsel %vm469, %v1150, 0
        %v1202 = vsel %vm485, %v1181, 0
        %1204 = vmatpush.msra.mxu0 0.0
        %1205 = vmatpush.msra.mxu0 0.0
        %1206 = vmatpush.msra.mxu0 0.0
        %1207 = vmatpush.msra.mxu0 0.0
        %1208 = vmatpush.msra.mxu0 0.0
        %1209 = vmatpush.msra.mxu0 0.0
        %1210 = vmatpush.msra.mxu0 0.0
        %1211 = vmatpush.msra.mxu0 0.0
        %1212 = vmatpush.msra.mxu0 0.0
        %1213 = vmatpush.msra.mxu0 0.0
        %1214 = vmatpush.msra.mxu0 %v1202
        %1215 = vmatpush.msra.mxu0 %v1180
        %1216 = vmatpush.msra.mxu0 %v1179
        %1217 = vmatpush.msra.mxu0 %v1178
        %1218 = vmatpush.msra.mxu0 %v1177
        %1219 = vmatpush.msra.mxu0 %v1176
        %1220 = vmatmul.f32.gmra.mxu0 %v1188
        %v1221 = vpop.f32.mrf.mxu0
        %v1222 = vadd.f32 0.0, %v1221
        %1223 = vmatmul.f32.gmra.mxu0 %v1191
        %v1224 = vpop.f32.mrf.mxu0
        %v1225 = vadd.f32 0.0, %v1224
        %1226 = vmatmul.f32.gmra.mxu0 %v1194
        %v1227 = vpop.f32.mrf.mxu0
        %v1228 = vadd.f32 0.0, %v1227
        %1229 = vmatmul.f32.gmra.mxu0 %v1197
        %v1230 = vpop.f32.mrf.mxu0
        %v1231 = vadd.f32 0.0, %v1230
        %1232 = vmatmul.f32.gmra.mxu0 %v1200
        %v1233 = vpop.f32.mrf.mxu0
        %v1234 = vadd.f32 0.0, %v1233
        %1235 = vdwg.mxu0
        %v1236 = vadd.f32 %v1140, %v1222
        %v1237 = vadd.f32 %v1141, %v1225
        %v1238 = vadd.f32 %v1142, %v1228
        %v1239 = vadd.f32 %v1143, %v1231
        %v1240 = vadd.f32 %v1144, %v1234
        %s1241 = scalar_lea.vmem %s2, 360
        %v1242 = vld [vmem:[%s1241] sm:$0xff]
        %v1243 = vld [vmem:[%s1241 + $0x8] sm:$0xff]
        %v1244 = vld [vmem:[%s1241 + $0x10] sm:$0xff]
        %v1245 = vld [vmem:[%s1241 + $0x18] sm:$0xff]
        %v1246 = vld [vmem:[%s1241 + $0x20] sm:$0xff]
        %1247 = vrot.lane.b32.xlu0 %v398, 119
        %v1248 = vpop.permute.xlu0 %1247
        %1249 = vrot.lane.b32.xlu0 %v404, 119
        %v1250 = vpop.permute.xlu0 %1249
        %1251 = vrot.lane.b32.xlu0 %v399, 119
        %v1252 = vpop.permute.xlu0 %1251
        %1253 = vrot.lane.b32.xlu0 %v405, 119
        %v1254 = vpop.permute.xlu0 %1253
        %1255 = vrot.lane.b32.xlu0 %v400, 119
        %v1256 = vpop.permute.xlu0 %1255
        %1257 = vrot.lane.b32.xlu0 %v406, 119
        %v1258 = vpop.permute.xlu0 %1257
        %1259 = vrot.lane.b32.xlu0 %v401, 119
        %v1260 = vpop.permute.xlu0 %1259
        %1261 = vrot.lane.b32.xlu0 %v407, 119
        %v1262 = vpop.permute.xlu0 %1261
        %1263 = vrot.lane.b32.xlu0 %v402, 119
        %v1264 = vpop.permute.xlu0 %1263
        %1265 = vrot.lane.b32.xlu0 %v408, 119
        %v1266 = vpop.permute.xlu0 %1265
        %1267 = vrot.lane.b32.xlu0 %v403, 119
        %v1268 = vpop.permute.xlu0 %1267
        %1269 = vrot.lane.b32.xlu0 %v409, 119
        %v1270 = vpop.permute.xlu0 %1269
        %vm1271 = vcmask 973824
        %v1272 = vsel %vm1271, %v1248, %v1250
        %v1273 = vsel %vm1271, %v1252, %v1254
        %v1274 = vsel %vm1271, %v1256, %v1258
        %v1275 = vsel %vm1271, %v1260, %v1262
        %v1276 = vsel %vm1271, %v1264, %v1266
        %v1277 = vsel %vm1271, %v1268, %v1270
        %v1284 = vsel %vm469, %v1242, 0
        %v1287 = vsel %vm469, %v1243, 0
        %v1290 = vsel %vm469, %v1244, 0
        %v1293 = vsel %vm469, %v1245, 0
        %v1296 = vsel %vm469, %v1246, 0
        %v1298 = vsel %vm485, %v1277, 0
        %1300 = vmatpush.msra.mxu0 0.0
        %1301 = vmatpush.msra.mxu0 0.0
        %1302 = vmatpush.msra.mxu0 0.0
        %1303 = vmatpush.msra.mxu0 0.0
        %1304 = vmatpush.msra.mxu0 0.0
        %1305 = vmatpush.msra.mxu0 0.0
        %1306 = vmatpush.msra.mxu0 0.0
        %1307 = vmatpush.msra.mxu0 0.0
        %1308 = vmatpush.msra.mxu0 0.0
        %1309 = vmatpush.msra.mxu0 0.0
        %1310 = vmatpush.msra.mxu0 %v1298
        %1311 = vmatpush.msra.mxu0 %v1276
        %1312 = vmatpush.msra.mxu0 %v1275
        %1313 = vmatpush.msra.mxu0 %v1274
        %1314 = vmatpush.msra.mxu0 %v1273
        %1315 = vmatpush.msra.mxu0 %v1272
        %1316 = vmatmul.f32.gmra.mxu0 %v1284
        %v1317 = vpop.f32.mrf.mxu0
        %v1318 = vadd.f32 0.0, %v1317
        %1319 = vmatmul.f32.gmra.mxu0 %v1287
        %v1320 = vpop.f32.mrf.mxu0
        %v1321 = vadd.f32 0.0, %v1320
        %1322 = vmatmul.f32.gmra.mxu0 %v1290
        %v1323 = vpop.f32.mrf.mxu0
        %v1324 = vadd.f32 0.0, %v1323
        %1325 = vmatmul.f32.gmra.mxu0 %v1293
        %v1326 = vpop.f32.mrf.mxu0
        %v1327 = vadd.f32 0.0, %v1326
        %1328 = vmatmul.f32.gmra.mxu0 %v1296
        %v1329 = vpop.f32.mrf.mxu0
        %v1330 = vadd.f32 0.0, %v1329
        %1331 = vdwg.mxu0
        %v1332 = vadd.f32 %v1236, %v1318
        %v1333 = vadd.f32 %v1237, %v1321
        %v1334 = vadd.f32 %v1238, %v1324
        %v1335 = vadd.f32 %v1239, %v1327
        %v1336 = vadd.f32 %v1240, %v1330
        %s1337 = scalar_lea.vmem %s2, 400
        %v1338 = vld [vmem:[%s1337] sm:$0xff]
        %v1339 = vld [vmem:[%s1337 + $0x8] sm:$0xff]
        %v1340 = vld [vmem:[%s1337 + $0x10] sm:$0xff]
        %v1341 = vld [vmem:[%s1337 + $0x18] sm:$0xff]
        %v1342 = vld [vmem:[%s1337 + $0x20] sm:$0xff]
        %1343 = vrot.lane.b32.xlu0 %v398, 118
        %v1344 = vpop.permute.xlu0 %1343
        %1345 = vrot.lane.b32.xlu0 %v404, 118
        %v1346 = vpop.permute.xlu0 %1345
        %1347 = vrot.lane.b32.xlu0 %v399, 118
        %v1348 = vpop.permute.xlu0 %1347
        %1349 = vrot.lane.b32.xlu0 %v405, 118
        %v1350 = vpop.permute.xlu0 %1349
        %1351 = vrot.lane.b32.xlu0 %v400, 118
        %v1352 = vpop.permute.xlu0 %1351
        %1353 = vrot.lane.b32.xlu0 %v406, 118
        %v1354 = vpop.permute.xlu0 %1353
        %1355 = vrot.lane.b32.xlu0 %v401, 118
        %v1356 = vpop.permute.xlu0 %1355
        %1357 = vrot.lane.b32.xlu0 %v407, 118
        %v1358 = vpop.permute.xlu0 %1357
        %1359 = vrot.lane.b32.xlu0 %v402, 118
        %v1360 = vpop.permute.xlu0 %1359
        %1361 = vrot.lane.b32.xlu0 %v408, 118
        %v1362 = vpop.permute.xlu0 %1361
        %1363 = vrot.lane.b32.xlu0 %v403, 118
        %v1364 = vpop.permute.xlu0 %1363
        %1365 = vrot.lane.b32.xlu0 %v409, 118
        %v1366 = vpop.permute.xlu0 %1365
        %vm1367 = vcmask 965632
        %v1368 = vsel %vm1367, %v1344, %v1346
        %v1369 = vsel %vm1367, %v1348, %v1350
        %v1370 = vsel %vm1367, %v1352, %v1354
        %v1371 = vsel %vm1367, %v1356, %v1358
        %v1372 = vsel %vm1367, %v1360, %v1362
        %v1373 = vsel %vm1367, %v1364, %v1366
        %v1380 = vsel %vm469, %v1338, 0
        %v1383 = vsel %vm469, %v1339, 0
        %v1386 = vsel %vm469, %v1340, 0
        %v1389 = vsel %vm469, %v1341, 0
        %v1392 = vsel %vm469, %v1342, 0
        %v1394 = vsel %vm485, %v1373, 0
        %1396 = vmatpush.msra.mxu0 0.0
        %1397 = vmatpush.msra.mxu0 0.0
        %1398 = vmatpush.msra.mxu0 0.0
        %1399 = vmatpush.msra.mxu0 0.0
        %1400 = vmatpush.msra.mxu0 0.0
        %1401 = vmatpush.msra.mxu0 0.0
        %1402 = vmatpush.msra.mxu0 0.0
        %1403 = vmatpush.msra.mxu0 0.0
        %1404 = vmatpush.msra.mxu0 0.0
        %1405 = vmatpush.msra.mxu0 0.0
        %1406 = vmatpush.msra.mxu0 %v1394
        %1407 = vmatpush.msra.mxu0 %v1372
        %1408 = vmatpush.msra.mxu0 %v1371
        %1409 = vmatpush.msra.mxu0 %v1370
        %1410 = vmatpush.msra.mxu0 %v1369
        %1411 = vmatpush.msra.mxu0 %v1368
        %1412 = vmatmul.f32.gmra.mxu0 %v1380
        %v1413 = vpop.f32.mrf.mxu0
        %v1414 = vadd.f32 0.0, %v1413
        %1415 = vmatmul.f32.gmra.mxu0 %v1383
        %v1416 = vpop.f32.mrf.mxu0
        %v1417 = vadd.f32 0.0, %v1416
        %1418 = vmatmul.f32.gmra.mxu0 %v1386
        %v1419 = vpop.f32.mrf.mxu0
        %v1420 = vadd.f32 0.0, %v1419
        %1421 = vmatmul.f32.gmra.mxu0 %v1389
        %v1422 = vpop.f32.mrf.mxu0
        %v1423 = vadd.f32 0.0, %v1422
        %1424 = vmatmul.f32.gmra.mxu0 %v1392
        %v1425 = vpop.f32.mrf.mxu0
        %v1426 = vadd.f32 0.0, %v1425
        %1427 = vdwg.mxu0
        %v1428 = vadd.f32 %v1332, %v1414
        %v1429 = vadd.f32 %v1333, %v1417
        %v1430 = vadd.f32 %v1334, %v1420
        %v1431 = vadd.f32 %v1335, %v1423
        %v1432 = vadd.f32 %v1336, %v1426
        %s1433 = scalar_lea.vmem %s2, 440
        %v1434 = vld [vmem:[%s1433] sm:$0xff]
        %v1435 = vld [vmem:[%s1433 + $0x8] sm:$0xff]
        %v1436 = vld [vmem:[%s1433 + $0x10] sm:$0xff]
        %v1437 = vld [vmem:[%s1433 + $0x18] sm:$0xff]
        %v1438 = vld [vmem:[%s1433 + $0x20] sm:$0xff]
        %1439 = vrot.lane.b32.xlu0 %v398, 117
        %v1440 = vpop.permute.xlu0 %1439
        %1441 = vrot.lane.b32.xlu0 %v404, 117
        %v1442 = vpop.permute.xlu0 %1441
        %1443 = vrot.lane.b32.xlu0 %v399, 117
        %v1444 = vpop.permute.xlu0 %1443
        %1445 = vrot.lane.b32.xlu0 %v405, 117
        %v1446 = vpop.permute.xlu0 %1445
        %1447 = vrot.lane.b32.xlu0 %v400, 117
        %v1448 = vpop.permute.xlu0 %1447
        %1449 = vrot.lane.b32.xlu0 %v406, 117
        %v1450 = vpop.permute.xlu0 %1449
        %1451 = vrot.lane.b32.xlu0 %v401, 117
        %v1452 = vpop.permute.xlu0 %1451
        %1453 = vrot.lane.b32.xlu0 %v407, 117
        %v1454 = vpop.permute.xlu0 %1453
        %1455 = vrot.lane.b32.xlu0 %v402, 117
        %v1456 = vpop.permute.xlu0 %1455
        %1457 = vrot.lane.b32.xlu0 %v408, 117
        %v1458 = vpop.permute.xlu0 %1457
        %1459 = vrot.lane.b32.xlu0 %v403, 117
        %v1460 = vpop.permute.xlu0 %1459
        %1461 = vrot.lane.b32.xlu0 %v409, 117
        %v1462 = vpop.permute.xlu0 %1461
        %vm1463 = vcmask 957440
        %v1464 = vsel %vm1463, %v1440, %v1442
        %v1465 = vsel %vm1463, %v1444, %v1446
        %v1466 = vsel %vm1463, %v1448, %v1450
        %v1467 = vsel %vm1463, %v1452, %v1454
        %v1468 = vsel %vm1463, %v1456, %v1458
        %v1469 = vsel %vm1463, %v1460, %v1462
        %v1476 = vsel %vm469, %v1434, 0
        %v1479 = vsel %vm469, %v1435, 0
        %v1482 = vsel %vm469, %v1436, 0
        %v1485 = vsel %vm469, %v1437, 0
        %v1488 = vsel %vm469, %v1438, 0
        %v1490 = vsel %vm485, %v1469, 0
        %1492 = vmatpush.msra.mxu0 0.0
        %1493 = vmatpush.msra.mxu0 0.0
        %1494 = vmatpush.msra.mxu0 0.0
        %1495 = vmatpush.msra.mxu0 0.0
        %1496 = vmatpush.msra.mxu0 0.0
        %1497 = vmatpush.msra.mxu0 0.0
        %1498 = vmatpush.msra.mxu0 0.0
        %1499 = vmatpush.msra.mxu0 0.0
        %1500 = vmatpush.msra.mxu0 0.0
        %1501 = vmatpush.msra.mxu0 0.0
        %1502 = vmatpush.msra.mxu0 %v1490
        %1503 = vmatpush.msra.mxu0 %v1468
        %1504 = vmatpush.msra.mxu0 %v1467
        %1505 = vmatpush.msra.mxu0 %v1466
        %1506 = vmatpush.msra.mxu0 %v1465
        %1507 = vmatpush.msra.mxu0 %v1464
        %1508 = vmatmul.f32.gmra.mxu0 %v1476
        %v1509 = vpop.f32.mrf.mxu0
        %v1510 = vadd.f32 0.0, %v1509
        %1511 = vmatmul.f32.gmra.mxu0 %v1479
        %v1512 = vpop.f32.mrf.mxu0
        %v1513 = vadd.f32 0.0, %v1512
        %1514 = vmatmul.f32.gmra.mxu0 %v1482
        %v1515 = vpop.f32.mrf.mxu0
        %v1516 = vadd.f32 0.0, %v1515
        %1517 = vmatmul.f32.gmra.mxu0 %v1485
        %v1518 = vpop.f32.mrf.mxu0
        %v1519 = vadd.f32 0.0, %v1518
        %1520 = vmatmul.f32.gmra.mxu0 %v1488
        %v1521 = vpop.f32.mrf.mxu0
        %v1522 = vadd.f32 0.0, %v1521
        %1523 = vdwg.mxu0
        %v1524 = vadd.f32 %v1428, %v1510
        %v1525 = vadd.f32 %v1429, %v1513
        %v1526 = vadd.f32 %v1430, %v1516
        %v1527 = vadd.f32 %v1431, %v1519
        %v1528 = vadd.f32 %v1432, %v1522
        %s1529 = scalar_lea.vmem %s2, 480
        %v1530 = vld [vmem:[%s1529] sm:$0xff]
        %v1531 = vld [vmem:[%s1529 + $0x8] sm:$0xff]
        %v1532 = vld [vmem:[%s1529 + $0x10] sm:$0xff]
        %v1533 = vld [vmem:[%s1529 + $0x18] sm:$0xff]
        %v1534 = vld [vmem:[%s1529 + $0x20] sm:$0xff]
        %1535 = vrot.lane.b32.xlu0 %v398, 116
        %v1536 = vpop.permute.xlu0 %1535
        %1537 = vrot.lane.b32.xlu0 %v404, 116
        %v1538 = vpop.permute.xlu0 %1537
        %1539 = vrot.lane.b32.xlu0 %v399, 116
        %v1540 = vpop.permute.xlu0 %1539
        %1541 = vrot.lane.b32.xlu0 %v405, 116
        %v1542 = vpop.permute.xlu0 %1541
        %1543 = vrot.lane.b32.xlu0 %v400, 116
        %v1544 = vpop.permute.xlu0 %1543
        %1545 = vrot.lane.b32.xlu0 %v406, 116
        %v1546 = vpop.permute.xlu0 %1545
        %1547 = vrot.lane.b32.xlu0 %v401, 116
        %v1548 = vpop.permute.xlu0 %1547
        %1549 = vrot.lane.b32.xlu0 %v407, 116
        %v1550 = vpop.permute.xlu0 %1549
        %1551 = vrot.lane.b32.xlu0 %v402, 116
        %v1552 = vpop.permute.xlu0 %1551
        %1553 = vrot.lane.b32.xlu0 %v408, 116
        %v1554 = vpop.permute.xlu0 %1553
        %1555 = vrot.lane.b32.xlu0 %v403, 116
        %v1556 = vpop.permute.xlu0 %1555
        %1557 = vrot.lane.b32.xlu0 %v409, 116
        %v1558 = vpop.permute.xlu0 %1557
        %vm1559 = vcmask 949248
        %v1560 = vsel %vm1559, %v1536, %v1538
        %v1561 = vsel %vm1559, %v1540, %v1542
        %v1562 = vsel %vm1559, %v1544, %v1546
        %v1563 = vsel %vm1559, %v1548, %v1550
        %v1564 = vsel %vm1559, %v1552, %v1554
        %v1565 = vsel %vm1559, %v1556, %v1558
        %v1572 = vsel %vm469, %v1530, 0
        %v1575 = vsel %vm469, %v1531, 0
        %v1578 = vsel %vm469, %v1532, 0
        %v1581 = vsel %vm469, %v1533, 0
        %v1584 = vsel %vm469, %v1534, 0
        %v1586 = vsel %vm485, %v1565, 0
        %1588 = vmatpush.msra.mxu0 0.0
        %1589 = vmatpush.msra.mxu0 0.0
        %1590 = vmatpush.msra.mxu0 0.0
        %1591 = vmatpush.msra.mxu0 0.0
        %1592 = vmatpush.msra.mxu0 0.0
        %1593 = vmatpush.msra.mxu0 0.0
        %1594 = vmatpush.msra.mxu0 0.0
        %1595 = vmatpush.msra.mxu0 0.0
        %1596 = vmatpush.msra.mxu0 0.0
        %1597 = vmatpush.msra.mxu0 0.0
        %1598 = vmatpush.msra.mxu0 %v1586
        %1599 = vmatpush.msra.mxu0 %v1564
        %1600 = vmatpush.msra.mxu0 %v1563
        %1601 = vmatpush.msra.mxu0 %v1562
        %1602 = vmatpush.msra.mxu0 %v1561
        %1603 = vmatpush.msra.mxu0 %v1560
        %1604 = vmatmul.f32.gmra.mxu0 %v1572
        %v1605 = vpop.f32.mrf.mxu0
        %v1606 = vadd.f32 0.0, %v1605
        %1607 = vmatmul.f32.gmra.mxu0 %v1575
        %v1608 = vpop.f32.mrf.mxu0
        %v1609 = vadd.f32 0.0, %v1608
        %1610 = vmatmul.f32.gmra.mxu0 %v1578
        %v1611 = vpop.f32.mrf.mxu0
        %v1612 = vadd.f32 0.0, %v1611
        %1613 = vmatmul.f32.gmra.mxu0 %v1581
        %v1614 = vpop.f32.mrf.mxu0
        %v1615 = vadd.f32 0.0, %v1614
        %1616 = vmatmul.f32.gmra.mxu0 %v1584
        %v1617 = vpop.f32.mrf.mxu0
        %v1618 = vadd.f32 0.0, %v1617
        %1619 = vdwg.mxu0
        %v1620 = vadd.f32 %v1524, %v1606
        %v1621 = vadd.f32 %v1525, %v1609
        %v1622 = vadd.f32 %v1526, %v1612
        %v1623 = vadd.f32 %v1527, %v1615
        %v1624 = vadd.f32 %v1528, %v1618
        %s1625 = scalar_lea.vmem %s2, 520
        %v1626 = vld [vmem:[%s1625] sm:$0xff]
        %v1627 = vld [vmem:[%s1625 + $0x8] sm:$0xff]
        %v1628 = vld [vmem:[%s1625 + $0x10] sm:$0xff]
        %v1629 = vld [vmem:[%s1625 + $0x18] sm:$0xff]
        %v1630 = vld [vmem:[%s1625 + $0x20] sm:$0xff]
        %1631 = vrot.lane.b32.xlu0 %v398, 115
        %v1632 = vpop.permute.xlu0 %1631
        %1633 = vrot.lane.b32.xlu0 %v404, 115
        %v1634 = vpop.permute.xlu0 %1633
        %1635 = vrot.lane.b32.xlu0 %v399, 115
        %v1636 = vpop.permute.xlu0 %1635
        %1637 = vrot.lane.b32.xlu0 %v405, 115
        %v1638 = vpop.permute.xlu0 %1637
        %1639 = vrot.lane.b32.xlu0 %v400, 115
        %v1640 = vpop.permute.xlu0 %1639
        %1641 = vrot.lane.b32.xlu0 %v406, 115
        %v1642 = vpop.permute.xlu0 %1641
        %1643 = vrot.lane.b32.xlu0 %v401, 115
        %v1644 = vpop.permute.xlu0 %1643
        %1645 = vrot.lane.b32.xlu0 %v407, 115
        %v1646 = vpop.permute.xlu0 %1645
        %1647 = vrot.lane.b32.xlu0 %v402, 115
        %v1648 = vpop.permute.xlu0 %1647
        %1649 = vrot.lane.b32.xlu0 %v408, 115
        %v1650 = vpop.permute.xlu0 %1649
        %1651 = vrot.lane.b32.xlu0 %v403, 115
        %v1652 = vpop.permute.xlu0 %1651
        %1653 = vrot.lane.b32.xlu0 %v409, 115
        %v1654 = vpop.permute.xlu0 %1653
        %vm1655 = vcmask 941056
        %v1656 = vsel %vm1655, %v1632, %v1634
        %v1657 = vsel %vm1655, %v1636, %v1638
        %v1658 = vsel %vm1655, %v1640, %v1642
        %v1659 = vsel %vm1655, %v1644, %v1646
        %v1660 = vsel %vm1655, %v1648, %v1650
        %v1661 = vsel %vm1655, %v1652, %v1654
        %v1668 = vsel %vm469, %v1626, 0
        %v1671 = vsel %vm469, %v1627, 0
        %v1674 = vsel %vm469, %v1628, 0
        %v1677 = vsel %vm469, %v1629, 0
        %v1680 = vsel %vm469, %v1630, 0
        %v1682 = vsel %vm485, %v1661, 0
        %1684 = vmatpush.msra.mxu0 0.0
        %1685 = vmatpush.msra.mxu0 0.0
        %1686 = vmatpush.msra.mxu0 0.0
        %1687 = vmatpush.msra.mxu0 0.0
        %1688 = vmatpush.msra.mxu0 0.0
        %1689 = vmatpush.msra.mxu0 0.0
        %1690 = vmatpush.msra.mxu0 0.0
        %1691 = vmatpush.msra.mxu0 0.0
        %1692 = vmatpush.msra.mxu0 0.0
        %1693 = vmatpush.msra.mxu0 0.0
        %1694 = vmatpush.msra.mxu0 %v1682
        %1695 = vmatpush.msra.mxu0 %v1660
        %1696 = vmatpush.msra.mxu0 %v1659
        %1697 = vmatpush.msra.mxu0 %v1658
        %1698 = vmatpush.msra.mxu0 %v1657
        %1699 = vmatpush.msra.mxu0 %v1656
        %1700 = vmatmul.f32.gmra.mxu0 %v1668
        %v1701 = vpop.f32.mrf.mxu0
        %v1702 = vadd.f32 0.0, %v1701
        %1703 = vmatmul.f32.gmra.mxu0 %v1671
        %v1704 = vpop.f32.mrf.mxu0
        %v1705 = vadd.f32 0.0, %v1704
        %1706 = vmatmul.f32.gmra.mxu0 %v1674
        %v1707 = vpop.f32.mrf.mxu0
        %v1708 = vadd.f32 0.0, %v1707
        %1709 = vmatmul.f32.gmra.mxu0 %v1677
        %v1710 = vpop.f32.mrf.mxu0
        %v1711 = vadd.f32 0.0, %v1710
        %1712 = vmatmul.f32.gmra.mxu0 %v1680
        %v1713 = vpop.f32.mrf.mxu0
        %v1714 = vadd.f32 0.0, %v1713
        %1715 = vdwg.mxu0
        %v1716 = vadd.f32 %v1620, %v1702
        %v1717 = vadd.f32 %v1621, %v1705
        %v1718 = vadd.f32 %v1622, %v1708
        %v1719 = vadd.f32 %v1623, %v1711
        %v1720 = vadd.f32 %v1624, %v1714
        %s1721 = scalar_lea.vmem %s2, 560
        %v1722 = vld [vmem:[%s1721] sm:$0xff]
        %v1723 = vld [vmem:[%s1721 + $0x8] sm:$0xff]
        %v1724 = vld [vmem:[%s1721 + $0x10] sm:$0xff]
        %v1725 = vld [vmem:[%s1721 + $0x18] sm:$0xff]
        %v1726 = vld [vmem:[%s1721 + $0x20] sm:$0xff]
        %1727 = vrot.lane.b32.xlu0 %v398, 114
        %v1728 = vpop.permute.xlu0 %1727
        %1729 = vrot.lane.b32.xlu0 %v404, 114
        %v1730 = vpop.permute.xlu0 %1729
        %1731 = vrot.lane.b32.xlu0 %v399, 114
        %v1732 = vpop.permute.xlu0 %1731
        %1733 = vrot.lane.b32.xlu0 %v405, 114
        %v1734 = vpop.permute.xlu0 %1733
        %1735 = vrot.lane.b32.xlu0 %v400, 114
        %v1736 = vpop.permute.xlu0 %1735
        %1737 = vrot.lane.b32.xlu0 %v406, 114
        %v1738 = vpop.permute.xlu0 %1737
        %1739 = vrot.lane.b32.xlu0 %v401, 114
        %v1740 = vpop.permute.xlu0 %1739
        %1741 = vrot.lane.b32.xlu0 %v407, 114
        %v1742 = vpop.permute.xlu0 %1741
        %1743 = vrot.lane.b32.xlu0 %v402, 114
        %v1744 = vpop.permute.xlu0 %1743
        %1745 = vrot.lane.b32.xlu0 %v408, 114
        %v1746 = vpop.permute.xlu0 %1745
        %1747 = vrot.lane.b32.xlu0 %v403, 114
        %v1748 = vpop.permute.xlu0 %1747
        %1749 = vrot.lane.b32.xlu0 %v409, 114
        %v1750 = vpop.permute.xlu0 %1749
        %vm1751 = vcmask 932864
        %v1752 = vsel %vm1751, %v1728, %v1730
        %v1753 = vsel %vm1751, %v1732, %v1734
        %v1754 = vsel %vm1751, %v1736, %v1738
        %v1755 = vsel %vm1751, %v1740, %v1742
        %v1756 = vsel %vm1751, %v1744, %v1746
        %v1757 = vsel %vm1751, %v1748, %v1750
        %v1764 = vsel %vm469, %v1722, 0
        %v1767 = vsel %vm469, %v1723, 0
        %v1770 = vsel %vm469, %v1724, 0
        %v1773 = vsel %vm469, %v1725, 0
        %v1776 = vsel %vm469, %v1726, 0
        %v1778 = vsel %vm485, %v1757, 0
        %1780 = vmatpush.msra.mxu0 0.0
        %1781 = vmatpush.msra.mxu0 0.0
        %1782 = vmatpush.msra.mxu0 0.0
        %1783 = vmatpush.msra.mxu0 0.0
        %1784 = vmatpush.msra.mxu0 0.0
        %1785 = vmatpush.msra.mxu0 0.0
        %1786 = vmatpush.msra.mxu0 0.0
        %1787 = vmatpush.msra.mxu0 0.0
        %1788 = vmatpush.msra.mxu0 0.0
        %1789 = vmatpush.msra.mxu0 0.0
        %1790 = vmatpush.msra.mxu0 %v1778
        %1791 = vmatpush.msra.mxu0 %v1756
        %1792 = vmatpush.msra.mxu0 %v1755
        %1793 = vmatpush.msra.mxu0 %v1754
        %1794 = vmatpush.msra.mxu0 %v1753
        %1795 = vmatpush.msra.mxu0 %v1752
        %1796 = vmatmul.f32.gmra.mxu0 %v1764
        %v1797 = vpop.f32.mrf.mxu0
        %v1798 = vadd.f32 0.0, %v1797
        %1799 = vmatmul.f32.gmra.mxu0 %v1767
        %v1800 = vpop.f32.mrf.mxu0
        %v1801 = vadd.f32 0.0, %v1800
        %1802 = vmatmul.f32.gmra.mxu0 %v1770
        %v1803 = vpop.f32.mrf.mxu0
        %v1804 = vadd.f32 0.0, %v1803
        %1805 = vmatmul.f32.gmra.mxu0 %v1773
        %v1806 = vpop.f32.mrf.mxu0
        %v1807 = vadd.f32 0.0, %v1806
        %1808 = vmatmul.f32.gmra.mxu0 %v1776
        %v1809 = vpop.f32.mrf.mxu0
        %v1810 = vadd.f32 0.0, %v1809
        %1811 = vdwg.mxu0
        %v1812 = vadd.f32 %v1716, %v1798
        %v1813 = vadd.f32 %v1717, %v1801
        %v1814 = vadd.f32 %v1718, %v1804
        %v1815 = vadd.f32 %v1719, %v1807
        %v1816 = vadd.f32 %v1720, %v1810
        %s1817 = scalar_lea.vmem %s2, 600
        %v1818 = vld [vmem:[%s1817] sm:$0xff]
        %v1819 = vld [vmem:[%s1817 + $0x8] sm:$0xff]
        %v1820 = vld [vmem:[%s1817 + $0x10] sm:$0xff]
        %v1821 = vld [vmem:[%s1817 + $0x18] sm:$0xff]
        %v1822 = vld [vmem:[%s1817 + $0x20] sm:$0xff]
        %1823 = vrot.lane.b32.xlu0 %v398, 113
        %v1824 = vpop.permute.xlu0 %1823
        %1825 = vrot.lane.b32.xlu0 %v404, 113
        %v1826 = vpop.permute.xlu0 %1825
        %1827 = vrot.lane.b32.xlu0 %v399, 113
        %v1828 = vpop.permute.xlu0 %1827
        %1829 = vrot.lane.b32.xlu0 %v405, 113
        %v1830 = vpop.permute.xlu0 %1829
        %1831 = vrot.lane.b32.xlu0 %v400, 113
        %v1832 = vpop.permute.xlu0 %1831
        %1833 = vrot.lane.b32.xlu0 %v406, 113
        %v1834 = vpop.permute.xlu0 %1833
        %1835 = vrot.lane.b32.xlu0 %v401, 113
        %v1836 = vpop.permute.xlu0 %1835
        %1837 = vrot.lane.b32.xlu0 %v407, 113
        %v1838 = vpop.permute.xlu0 %1837
        %1839 = vrot.lane.b32.xlu0 %v402, 113
        %v1840 = vpop.permute.xlu0 %1839
        %1841 = vrot.lane.b32.xlu0 %v408, 113
        %v1842 = vpop.permute.xlu0 %1841
        %1843 = vrot.lane.b32.xlu0 %v403, 113
        %v1844 = vpop.permute.xlu0 %1843
        %1845 = vrot.lane.b32.xlu0 %v409, 113
        %v1846 = vpop.permute.xlu0 %1845
        %vm1847 = vcmask 924672
        %v1848 = vsel %vm1847, %v1824, %v1826
        %v1849 = vsel %vm1847, %v1828, %v1830
        %v1850 = vsel %vm1847, %v1832, %v1834
        %v1851 = vsel %vm1847, %v1836, %v1838
        %v1852 = vsel %vm1847, %v1840, %v1842
        %v1853 = vsel %vm1847, %v1844, %v1846
        %v1860 = vsel %vm469, %v1818, 0
        %v1863 = vsel %vm469, %v1819, 0
        %v1866 = vsel %vm469, %v1820, 0
        %v1869 = vsel %vm469, %v1821, 0
        %v1872 = vsel %vm469, %v1822, 0
        %v1874 = vsel %vm485, %v1853, 0
        %1876 = vmatpush.msra.mxu0 0.0
        %1877 = vmatpush.msra.mxu0 0.0
        %1878 = vmatpush.msra.mxu0 0.0
        %1879 = vmatpush.msra.mxu0 0.0
        %1880 = vmatpush.msra.mxu0 0.0
        %1881 = vmatpush.msra.mxu0 0.0
        %1882 = vmatpush.msra.mxu0 0.0
        %1883 = vmatpush.msra.mxu0 0.0
        %1884 = vmatpush.msra.mxu0 0.0
        %1885 = vmatpush.msra.mxu0 0.0
        %1886 = vmatpush.msra.mxu0 %v1874
        %1887 = vmatpush.msra.mxu0 %v1852
        %1888 = vmatpush.msra.mxu0 %v1851
        %1889 = vmatpush.msra.mxu0 %v1850
        %1890 = vmatpush.msra.mxu0 %v1849
        %1891 = vmatpush.msra.mxu0 %v1848
        %1892 = vmatmul.f32.gmra.mxu0 %v1860
        %v1893 = vpop.f32.mrf.mxu0
        %v1894 = vadd.f32 0.0, %v1893
        %1895 = vmatmul.f32.gmra.mxu0 %v1863
        %v1896 = vpop.f32.mrf.mxu0
        %v1897 = vadd.f32 0.0, %v1896
        %1898 = vmatmul.f32.gmra.mxu0 %v1866
        %v1899 = vpop.f32.mrf.mxu0
        %v1900 = vadd.f32 0.0, %v1899
        %1901 = vmatmul.f32.gmra.mxu0 %v1869
        %v1902 = vpop.f32.mrf.mxu0
        %v1903 = vadd.f32 0.0, %v1902
        %1904 = vmatmul.f32.gmra.mxu0 %v1872
        %v1905 = vpop.f32.mrf.mxu0
        %v1906 = vadd.f32 0.0, %v1905
        %1907 = vdwg.mxu0
        %v1908 = vadd.f32 %v1812, %v1894
        %v1909 = vadd.f32 %v1813, %v1897
        %v1910 = vadd.f32 %v1814, %v1900
        %v1911 = vadd.f32 %v1815, %v1903
        %v1912 = vadd.f32 %v1816, %v1906
        %s1913 = scalar_lea.vmem %s2, 640
        %v1914 = vld [vmem:[%s1913] sm:$0xff]
        %v1915 = vld [vmem:[%s1913 + $0x8] sm:$0xff]
        %v1916 = vld [vmem:[%s1913 + $0x10] sm:$0xff]
        %v1917 = vld [vmem:[%s1913 + $0x18] sm:$0xff]
        %v1918 = vld [vmem:[%s1913 + $0x20] sm:$0xff]
        %1919 = vrot.lane.b32.xlu0 %v398, 112
        %v1920 = vpop.permute.xlu0 %1919
        %1921 = vrot.lane.b32.xlu0 %v404, 112
        %v1922 = vpop.permute.xlu0 %1921
        %1923 = vrot.lane.b32.xlu0 %v399, 112
        %v1924 = vpop.permute.xlu0 %1923
        %1925 = vrot.lane.b32.xlu0 %v405, 112
        %v1926 = vpop.permute.xlu0 %1925
        %1927 = vrot.lane.b32.xlu0 %v400, 112
        %v1928 = vpop.permute.xlu0 %1927
        %1929 = vrot.lane.b32.xlu0 %v406, 112
        %v1930 = vpop.permute.xlu0 %1929
        %1931 = vrot.lane.b32.xlu0 %v401, 112
        %v1932 = vpop.permute.xlu0 %1931
        %1933 = vrot.lane.b32.xlu0 %v407, 112
        %v1934 = vpop.permute.xlu0 %1933
        %1935 = vrot.lane.b32.xlu0 %v402, 112
        %v1936 = vpop.permute.xlu0 %1935
        %1937 = vrot.lane.b32.xlu0 %v408, 112
        %v1938 = vpop.permute.xlu0 %1937
        %1939 = vrot.lane.b32.xlu0 %v403, 112
        %v1940 = vpop.permute.xlu0 %1939
        %1941 = vrot.lane.b32.xlu0 %v409, 112
        %v1942 = vpop.permute.xlu0 %1941
        %vm1943 = vcmask 916480
        %v1944 = vsel %vm1943, %v1920, %v1922
        %v1945 = vsel %vm1943, %v1924, %v1926
        %v1946 = vsel %vm1943, %v1928, %v1930
        %v1947 = vsel %vm1943, %v1932, %v1934
        %v1948 = vsel %vm1943, %v1936, %v1938
        %v1949 = vsel %vm1943, %v1940, %v1942
        %v1956 = vsel %vm469, %v1914, 0
        %v1959 = vsel %vm469, %v1915, 0
        %v1962 = vsel %vm469, %v1916, 0
        %v1965 = vsel %vm469, %v1917, 0
        %v1968 = vsel %vm469, %v1918, 0
        %v1970 = vsel %vm485, %v1949, 0
        %1972 = vmatpush.msra.mxu0 0.0
        %1973 = vmatpush.msra.mxu0 0.0
        %1974 = vmatpush.msra.mxu0 0.0
        %1975 = vmatpush.msra.mxu0 0.0
        %1976 = vmatpush.msra.mxu0 0.0
        %1977 = vmatpush.msra.mxu0 0.0
        %1978 = vmatpush.msra.mxu0 0.0
        %1979 = vmatpush.msra.mxu0 0.0
        %1980 = vmatpush.msra.mxu0 0.0
        %1981 = vmatpush.msra.mxu0 0.0
        %1982 = vmatpush.msra.mxu0 %v1970
        %1983 = vmatpush.msra.mxu0 %v1948
        %1984 = vmatpush.msra.mxu0 %v1947
        %1985 = vmatpush.msra.mxu0 %v1946
        %1986 = vmatpush.msra.mxu0 %v1945
        %1987 = vmatpush.msra.mxu0 %v1944
        %1988 = vmatmul.f32.gmra.mxu0 %v1956
        %v1989 = vpop.f32.mrf.mxu0
        %v1990 = vadd.f32 0.0, %v1989
        %1991 = vmatmul.f32.gmra.mxu0 %v1959
        %v1992 = vpop.f32.mrf.mxu0
        %v1993 = vadd.f32 0.0, %v1992
        %1994 = vmatmul.f32.gmra.mxu0 %v1962
        %v1995 = vpop.f32.mrf.mxu0
        %v1996 = vadd.f32 0.0, %v1995
        %1997 = vmatmul.f32.gmra.mxu0 %v1965
        %v1998 = vpop.f32.mrf.mxu0
        %v1999 = vadd.f32 0.0, %v1998
        %2000 = vmatmul.f32.gmra.mxu0 %v1968
        %v2001 = vpop.f32.mrf.mxu0
        %v2002 = vadd.f32 0.0, %v2001
        %2003 = vdwg.mxu0
        %v2004 = vadd.f32 %v1908, %v1990
        %v2005 = vadd.f32 %v1909, %v1993
        %v2006 = vadd.f32 %v1910, %v1996
        %v2007 = vadd.f32 %v1911, %v1999
        %v2008 = vadd.f32 %v1912, %v2002
        %s2009 = scalar_lea.vmem %s2, 680
        %v2010 = vld [vmem:[%s2009] sm:$0xff]
        %v2011 = vld [vmem:[%s2009 + $0x8] sm:$0xff]
        %v2012 = vld [vmem:[%s2009 + $0x10] sm:$0xff]
        %v2013 = vld [vmem:[%s2009 + $0x18] sm:$0xff]
        %v2014 = vld [vmem:[%s2009 + $0x20] sm:$0xff]
        %2015 = vrot.lane.b32.xlu0 %v398, 111
        %v2016 = vpop.permute.xlu0 %2015
        %2017 = vrot.lane.b32.xlu0 %v404, 111
        %v2018 = vpop.permute.xlu0 %2017
        %2019 = vrot.lane.b32.xlu0 %v399, 111
        %v2020 = vpop.permute.xlu0 %2019
        %2021 = vrot.lane.b32.xlu0 %v405, 111
        %v2022 = vpop.permute.xlu0 %2021
        %2023 = vrot.lane.b32.xlu0 %v400, 111
        %v2024 = vpop.permute.xlu0 %2023
        %2025 = vrot.lane.b32.xlu0 %v406, 111
        %v2026 = vpop.permute.xlu0 %2025
        %2027 = vrot.lane.b32.xlu0 %v401, 111
        %v2028 = vpop.permute.xlu0 %2027
        %2029 = vrot.lane.b32.xlu0 %v407, 111
        %v2030 = vpop.permute.xlu0 %2029
        %2031 = vrot.lane.b32.xlu0 %v402, 111
        %v2032 = vpop.permute.xlu0 %2031
        %2033 = vrot.lane.b32.xlu0 %v408, 111
        %v2034 = vpop.permute.xlu0 %2033
        %2035 = vrot.lane.b32.xlu0 %v403, 111
        %v2036 = vpop.permute.xlu0 %2035
        %2037 = vrot.lane.b32.xlu0 %v409, 111
        %v2038 = vpop.permute.xlu0 %2037
        %vm2039 = vcmask 908288
        %v2040 = vsel %vm2039, %v2016, %v2018
        %v2041 = vsel %vm2039, %v2020, %v2022
        %v2042 = vsel %vm2039, %v2024, %v2026
        %v2043 = vsel %vm2039, %v2028, %v2030
        %v2044 = vsel %vm2039, %v2032, %v2034
        %v2045 = vsel %vm2039, %v2036, %v2038
        %v2052 = vsel %vm469, %v2010, 0
        %v2055 = vsel %vm469, %v2011, 0
        %v2058 = vsel %vm469, %v2012, 0
        %v2061 = vsel %vm469, %v2013, 0
        %v2064 = vsel %vm469, %v2014, 0
        %v2066 = vsel %vm485, %v2045, 0
        %2068 = vmatpush.msra.mxu0 0.0
        %2069 = vmatpush.msra.mxu0 0.0
        %2070 = vmatpush.msra.mxu0 0.0
        %2071 = vmatpush.msra.mxu0 0.0
        %2072 = vmatpush.msra.mxu0 0.0
        %2073 = vmatpush.msra.mxu0 0.0
        %2074 = vmatpush.msra.mxu0 0.0
        %2075 = vmatpush.msra.mxu0 0.0
        %2076 = vmatpush.msra.mxu0 0.0
        %2077 = vmatpush.msra.mxu0 0.0
        %2078 = vmatpush.msra.mxu0 %v2066
        %2079 = vmatpush.msra.mxu0 %v2044
        %2080 = vmatpush.msra.mxu0 %v2043
        %2081 = vmatpush.msra.mxu0 %v2042
        %2082 = vmatpush.msra.mxu0 %v2041
        %2083 = vmatpush.msra.mxu0 %v2040
        %2084 = vmatmul.f32.gmra.mxu0 %v2052
        %v2085 = vpop.f32.mrf.mxu0
        %v2086 = vadd.f32 0.0, %v2085
        %2087 = vmatmul.f32.gmra.mxu0 %v2055
        %v2088 = vpop.f32.mrf.mxu0
        %v2089 = vadd.f32 0.0, %v2088
        %2090 = vmatmul.f32.gmra.mxu0 %v2058
        %v2091 = vpop.f32.mrf.mxu0
        %v2092 = vadd.f32 0.0, %v2091
        %2093 = vmatmul.f32.gmra.mxu0 %v2061
        %v2094 = vpop.f32.mrf.mxu0
        %v2095 = vadd.f32 0.0, %v2094
        %2096 = vmatmul.f32.gmra.mxu0 %v2064
        %v2097 = vpop.f32.mrf.mxu0
        %v2098 = vadd.f32 0.0, %v2097
        %2099 = vdwg.mxu0
        %v2100 = vadd.f32 %v2004, %v2086
        %v2101 = vadd.f32 %v2005, %v2089
        %v2102 = vadd.f32 %v2006, %v2092
        %v2103 = vadd.f32 %v2007, %v2095
        %v2104 = vadd.f32 %v2008, %v2098
        %s2105 = scalar_lea.vmem %s2, 720
        %v2106 = vld [vmem:[%s2105] sm:$0xff]
        %v2107 = vld [vmem:[%s2105 + $0x8] sm:$0xff]
        %v2108 = vld [vmem:[%s2105 + $0x10] sm:$0xff]
        %v2109 = vld [vmem:[%s2105 + $0x18] sm:$0xff]
        %v2110 = vld [vmem:[%s2105 + $0x20] sm:$0xff]
        %2111 = vrot.lane.b32.xlu0 %v398, 110
        %v2112 = vpop.permute.xlu0 %2111
        %2113 = vrot.lane.b32.xlu0 %v404, 110
        %v2114 = vpop.permute.xlu0 %2113
        %2115 = vrot.lane.b32.xlu0 %v399, 110
        %v2116 = vpop.permute.xlu0 %2115
        %2117 = vrot.lane.b32.xlu0 %v405, 110
        %v2118 = vpop.permute.xlu0 %2117
        %2119 = vrot.lane.b32.xlu0 %v400, 110
        %v2120 = vpop.permute.xlu0 %2119
        %2121 = vrot.lane.b32.xlu0 %v406, 110
        %v2122 = vpop.permute.xlu0 %2121
        %2123 = vrot.lane.b32.xlu0 %v401, 110
        %v2124 = vpop.permute.xlu0 %2123
        %2125 = vrot.lane.b32.xlu0 %v407, 110
        %v2126 = vpop.permute.xlu0 %2125
        %2127 = vrot.lane.b32.xlu0 %v402, 110
        %v2128 = vpop.permute.xlu0 %2127
        %2129 = vrot.lane.b32.xlu0 %v408, 110
        %v2130 = vpop.permute.xlu0 %2129
        %2131 = vrot.lane.b32.xlu0 %v403, 110
        %v2132 = vpop.permute.xlu0 %2131
        %2133 = vrot.lane.b32.xlu0 %v409, 110
        %v2134 = vpop.permute.xlu0 %2133
        %vm2135 = vcmask 900096
        %v2136 = vsel %vm2135, %v2112, %v2114
        %v2137 = vsel %vm2135, %v2116, %v2118
        %v2138 = vsel %vm2135, %v2120, %v2122
        %v2139 = vsel %vm2135, %v2124, %v2126
        %v2140 = vsel %vm2135, %v2128, %v2130
        %v2141 = vsel %vm2135, %v2132, %v2134
        %v2148 = vsel %vm469, %v2106, 0
        %v2151 = vsel %vm469, %v2107, 0
        %v2154 = vsel %vm469, %v2108, 0
        %v2157 = vsel %vm469, %v2109, 0
        %v2160 = vsel %vm469, %v2110, 0
        %v2162 = vsel %vm485, %v2141, 0
        %2164 = vmatpush.msra.mxu0 0.0
        %2165 = vmatpush.msra.mxu0 0.0
        %2166 = vmatpush.msra.mxu0 0.0
        %2167 = vmatpush.msra.mxu0 0.0
        %2168 = vmatpush.msra.mxu0 0.0
        %2169 = vmatpush.msra.mxu0 0.0
        %2170 = vmatpush.msra.mxu0 0.0
        %2171 = vmatpush.msra.mxu0 0.0
        %2172 = vmatpush.msra.mxu0 0.0
        %2173 = vmatpush.msra.mxu0 0.0
        %2174 = vmatpush.msra.mxu0 %v2162
        %2175 = vmatpush.msra.mxu0 %v2140
        %2176 = vmatpush.msra.mxu0 %v2139
        %2177 = vmatpush.msra.mxu0 %v2138
        %2178 = vmatpush.msra.mxu0 %v2137
        %2179 = vmatpush.msra.mxu0 %v2136
        %2180 = vmatmul.f32.gmra.mxu0 %v2148
        %v2181 = vpop.f32.mrf.mxu0
        %v2182 = vadd.f32 0.0, %v2181
        %2183 = vmatmul.f32.gmra.mxu0 %v2151
        %v2184 = vpop.f32.mrf.mxu0
        %v2185 = vadd.f32 0.0, %v2184
        %2186 = vmatmul.f32.gmra.mxu0 %v2154
        %v2187 = vpop.f32.mrf.mxu0
        %v2188 = vadd.f32 0.0, %v2187
        %2189 = vmatmul.f32.gmra.mxu0 %v2157
        %v2190 = vpop.f32.mrf.mxu0
        %v2191 = vadd.f32 0.0, %v2190
        %2192 = vmatmul.f32.gmra.mxu0 %v2160
        %v2193 = vpop.f32.mrf.mxu0
        %v2194 = vadd.f32 0.0, %v2193
        %2195 = vdwg.mxu0
        %v2196 = vadd.f32 %v2100, %v2182
        %v2197 = vadd.f32 %v2101, %v2185
        %v2198 = vadd.f32 %v2102, %v2188
        %v2199 = vadd.f32 %v2103, %v2191
        %v2200 = vadd.f32 %v2104, %v2194
        %s2201 = scalar_lea.vmem %s2, 760
        %v2202 = vld [vmem:[%s2201] sm:$0xff]
        %v2203 = vld [vmem:[%s2201 + $0x8] sm:$0xff]
        %v2204 = vld [vmem:[%s2201 + $0x10] sm:$0xff]
        %v2205 = vld [vmem:[%s2201 + $0x18] sm:$0xff]
        %v2206 = vld [vmem:[%s2201 + $0x20] sm:$0xff]
        %2207 = vrot.lane.b32.xlu0 %v398, 109
        %v2208 = vpop.permute.xlu0 %2207
        %2209 = vrot.lane.b32.xlu0 %v404, 109
        %v2210 = vpop.permute.xlu0 %2209
        %2211 = vrot.lane.b32.xlu0 %v399, 109
        %v2212 = vpop.permute.xlu0 %2211
        %2213 = vrot.lane.b32.xlu0 %v405, 109
        %v2214 = vpop.permute.xlu0 %2213
        %2215 = vrot.lane.b32.xlu0 %v400, 109
        %v2216 = vpop.permute.xlu0 %2215
        %2217 = vrot.lane.b32.xlu0 %v406, 109
        %v2218 = vpop.permute.xlu0 %2217
        %2219 = vrot.lane.b32.xlu0 %v401, 109
        %v2220 = vpop.permute.xlu0 %2219
        %2221 = vrot.lane.b32.xlu0 %v407, 109
        %v2222 = vpop.permute.xlu0 %2221
        %2223 = vrot.lane.b32.xlu0 %v402, 109
        %v2224 = vpop.permute.xlu0 %2223
        %2225 = vrot.lane.b32.xlu0 %v408, 109
        %v2226 = vpop.permute.xlu0 %2225
        %2227 = vrot.lane.b32.xlu0 %v403, 109
        %v2228 = vpop.permute.xlu0 %2227
        %2229 = vrot.lane.b32.xlu0 %v409, 109
        %v2230 = vpop.permute.xlu0 %2229
        %vm2231 = vcmask 891904
        %v2232 = vsel %vm2231, %v2208, %v2210
        %v2233 = vsel %vm2231, %v2212, %v2214
        %v2234 = vsel %vm2231, %v2216, %v2218
        %v2235 = vsel %vm2231, %v2220, %v2222
        %v2236 = vsel %vm2231, %v2224, %v2226
        %v2237 = vsel %vm2231, %v2228, %v2230
        %v2244 = vsel %vm469, %v2202, 0
        %v2247 = vsel %vm469, %v2203, 0
        %v2250 = vsel %vm469, %v2204, 0
        %v2253 = vsel %vm469, %v2205, 0
        %v2256 = vsel %vm469, %v2206, 0
        %v2258 = vsel %vm485, %v2237, 0
        %2260 = vmatpush.msra.mxu0 0.0
        %2261 = vmatpush.msra.mxu0 0.0
        %2262 = vmatpush.msra.mxu0 0.0
        %2263 = vmatpush.msra.mxu0 0.0
        %2264 = vmatpush.msra.mxu0 0.0
        %2265 = vmatpush.msra.mxu0 0.0
        %2266 = vmatpush.msra.mxu0 0.0
        %2267 = vmatpush.msra.mxu0 0.0
        %2268 = vmatpush.msra.mxu0 0.0
        %2269 = vmatpush.msra.mxu0 0.0
        %2270 = vmatpush.msra.mxu0 %v2258
        %2271 = vmatpush.msra.mxu0 %v2236
        %2272 = vmatpush.msra.mxu0 %v2235
        %2273 = vmatpush.msra.mxu0 %v2234
        %2274 = vmatpush.msra.mxu0 %v2233
        %2275 = vmatpush.msra.mxu0 %v2232
        %2276 = vmatmul.f32.gmra.mxu0 %v2244
        %v2277 = vpop.f32.mrf.mxu0
        %v2278 = vadd.f32 0.0, %v2277
        %2279 = vmatmul.f32.gmra.mxu0 %v2247
        %v2280 = vpop.f32.mrf.mxu0
        %v2281 = vadd.f32 0.0, %v2280
        %2282 = vmatmul.f32.gmra.mxu0 %v2250
        %v2283 = vpop.f32.mrf.mxu0
        %v2284 = vadd.f32 0.0, %v2283
        %2285 = vmatmul.f32.gmra.mxu0 %v2253
        %v2286 = vpop.f32.mrf.mxu0
        %v2287 = vadd.f32 0.0, %v2286
        %2288 = vmatmul.f32.gmra.mxu0 %v2256
        %v2289 = vpop.f32.mrf.mxu0
        %v2290 = vadd.f32 0.0, %v2289
        %2291 = vdwg.mxu0
        %v2292 = vadd.f32 %v2196, %v2278
        %v2293 = vadd.f32 %v2197, %v2281
        %v2294 = vadd.f32 %v2198, %v2284
        %v2295 = vadd.f32 %v2199, %v2287
        %v2296 = vadd.f32 %v2200, %v2290
        %s2297 = scalar_lea.vmem %s2, 800
        %v2298 = vld [vmem:[%s2297] sm:$0xff]
        %v2299 = vld [vmem:[%s2297 + $0x8] sm:$0xff]
        %v2300 = vld [vmem:[%s2297 + $0x10] sm:$0xff]
        %v2301 = vld [vmem:[%s2297 + $0x18] sm:$0xff]
        %v2302 = vld [vmem:[%s2297 + $0x20] sm:$0xff]
        %2303 = vrot.lane.b32.xlu0 %v398, 108
        %v2304 = vpop.permute.xlu0 %2303
        %2305 = vrot.lane.b32.xlu0 %v404, 108
        %v2306 = vpop.permute.xlu0 %2305
        %2307 = vrot.lane.b32.xlu0 %v399, 108
        %v2308 = vpop.permute.xlu0 %2307
        %2309 = vrot.lane.b32.xlu0 %v405, 108
        %v2310 = vpop.permute.xlu0 %2309
        %2311 = vrot.lane.b32.xlu0 %v400, 108
        %v2312 = vpop.permute.xlu0 %2311
        %2313 = vrot.lane.b32.xlu0 %v406, 108
        %v2314 = vpop.permute.xlu0 %2313
        %2315 = vrot.lane.b32.xlu0 %v401, 108
        %v2316 = vpop.permute.xlu0 %2315
        %2317 = vrot.lane.b32.xlu0 %v407, 108
        %v2318 = vpop.permute.xlu0 %2317
        %2319 = vrot.lane.b32.xlu0 %v402, 108
        %v2320 = vpop.permute.xlu0 %2319
        %2321 = vrot.lane.b32.xlu0 %v408, 108
        %v2322 = vpop.permute.xlu0 %2321
        %2323 = vrot.lane.b32.xlu0 %v403, 108
        %v2324 = vpop.permute.xlu0 %2323
        %2325 = vrot.lane.b32.xlu0 %v409, 108
        %v2326 = vpop.permute.xlu0 %2325
        %vm2327 = vcmask 883712
        %v2328 = vsel %vm2327, %v2304, %v2306
        %v2329 = vsel %vm2327, %v2308, %v2310
        %v2330 = vsel %vm2327, %v2312, %v2314
        %v2331 = vsel %vm2327, %v2316, %v2318
        %v2332 = vsel %vm2327, %v2320, %v2322
        %v2333 = vsel %vm2327, %v2324, %v2326
        %v2340 = vsel %vm469, %v2298, 0
        %v2343 = vsel %vm469, %v2299, 0
        %v2346 = vsel %vm469, %v2300, 0
        %v2349 = vsel %vm469, %v2301, 0
        %v2352 = vsel %vm469, %v2302, 0
        %v2354 = vsel %vm485, %v2333, 0
        %2356 = vmatpush.msra.mxu0 0.0
        %2357 = vmatpush.msra.mxu0 0.0
        %2358 = vmatpush.msra.mxu0 0.0
        %2359 = vmatpush.msra.mxu0 0.0
        %2360 = vmatpush.msra.mxu0 0.0
        %2361 = vmatpush.msra.mxu0 0.0
        %2362 = vmatpush.msra.mxu0 0.0
        %2363 = vmatpush.msra.mxu0 0.0
        %2364 = vmatpush.msra.mxu0 0.0
        %2365 = vmatpush.msra.mxu0 0.0
        %2366 = vmatpush.msra.mxu0 %v2354
        %2367 = vmatpush.msra.mxu0 %v2332
        %2368 = vmatpush.msra.mxu0 %v2331
        %2369 = vmatpush.msra.mxu0 %v2330
        %2370 = vmatpush.msra.mxu0 %v2329
        %2371 = vmatpush.msra.mxu0 %v2328
        %2372 = vmatmul.f32.gmra.mxu0 %v2340
        %v2373 = vpop.f32.mrf.mxu0
        %v2374 = vadd.f32 0.0, %v2373
        %2375 = vmatmul.f32.gmra.mxu0 %v2343
        %v2376 = vpop.f32.mrf.mxu0
        %v2377 = vadd.f32 0.0, %v2376
        %2378 = vmatmul.f32.gmra.mxu0 %v2346
        %v2379 = vpop.f32.mrf.mxu0
        %v2380 = vadd.f32 0.0, %v2379
        %2381 = vmatmul.f32.gmra.mxu0 %v2349
        %v2382 = vpop.f32.mrf.mxu0
        %v2383 = vadd.f32 0.0, %v2382
        %2384 = vmatmul.f32.gmra.mxu0 %v2352
        %v2385 = vpop.f32.mrf.mxu0
        %v2386 = vadd.f32 0.0, %v2385
        %2387 = vdwg.mxu0
        %v2388 = vadd.f32 %v2292, %v2374
        %v2389 = vadd.f32 %v2293, %v2377
        %v2390 = vadd.f32 %v2294, %v2380
        %v2391 = vadd.f32 %v2295, %v2383
        %v2392 = vadd.f32 %v2296, %v2386
        %s2393 = scalar_lea.vmem %s2, 840
        %v2394 = vld [vmem:[%s2393] sm:$0xff]
        %v2395 = vld [vmem:[%s2393 + $0x8] sm:$0xff]
        %v2396 = vld [vmem:[%s2393 + $0x10] sm:$0xff]
        %v2397 = vld [vmem:[%s2393 + $0x18] sm:$0xff]
        %v2398 = vld [vmem:[%s2393 + $0x20] sm:$0xff]
        %2399 = vrot.lane.b32.xlu0 %v398, 107
        %v2400 = vpop.permute.xlu0 %2399
        %2401 = vrot.lane.b32.xlu0 %v404, 107
        %v2402 = vpop.permute.xlu0 %2401
        %2403 = vrot.lane.b32.xlu0 %v399, 107
        %v2404 = vpop.permute.xlu0 %2403
        %2405 = vrot.lane.b32.xlu0 %v405, 107
        %v2406 = vpop.permute.xlu0 %2405
        %2407 = vrot.lane.b32.xlu0 %v400, 107
        %v2408 = vpop.permute.xlu0 %2407
        %2409 = vrot.lane.b32.xlu0 %v406, 107
        %v2410 = vpop.permute.xlu0 %2409
        %2411 = vrot.lane.b32.xlu0 %v401, 107
        %v2412 = vpop.permute.xlu0 %2411
        %2413 = vrot.lane.b32.xlu0 %v407, 107
        %v2414 = vpop.permute.xlu0 %2413
        %2415 = vrot.lane.b32.xlu0 %v402, 107
        %v2416 = vpop.permute.xlu0 %2415
        %2417 = vrot.lane.b32.xlu0 %v408, 107
        %v2418 = vpop.permute.xlu0 %2417
        %2419 = vrot.lane.b32.xlu0 %v403, 107
        %v2420 = vpop.permute.xlu0 %2419
        %2421 = vrot.lane.b32.xlu0 %v409, 107
        %v2422 = vpop.permute.xlu0 %2421
        %vm2423 = vcmask 875520
        %v2424 = vsel %vm2423, %v2400, %v2402
        %v2425 = vsel %vm2423, %v2404, %v2406
        %v2426 = vsel %vm2423, %v2408, %v2410
        %v2427 = vsel %vm2423, %v2412, %v2414
        %v2428 = vsel %vm2423, %v2416, %v2418
        %v2429 = vsel %vm2423, %v2420, %v2422
        %v2436 = vsel %vm469, %v2394, 0
        %v2439 = vsel %vm469, %v2395, 0
        %v2442 = vsel %vm469, %v2396, 0
        %v2445 = vsel %vm469, %v2397, 0
        %v2448 = vsel %vm469, %v2398, 0
        %v2450 = vsel %vm485, %v2429, 0
        %2452 = vmatpush.msra.mxu0 0.0
        %2453 = vmatpush.msra.mxu0 0.0
        %2454 = vmatpush.msra.mxu0 0.0
        %2455 = vmatpush.msra.mxu0 0.0
        %2456 = vmatpush.msra.mxu0 0.0
        %2457 = vmatpush.msra.mxu0 0.0
        %2458 = vmatpush.msra.mxu0 0.0
        %2459 = vmatpush.msra.mxu0 0.0
        %2460 = vmatpush.msra.mxu0 0.0
        %2461 = vmatpush.msra.mxu0 0.0
        %2462 = vmatpush.msra.mxu0 %v2450
        %2463 = vmatpush.msra.mxu0 %v2428
        %2464 = vmatpush.msra.mxu0 %v2427
        %2465 = vmatpush.msra.mxu0 %v2426
        %2466 = vmatpush.msra.mxu0 %v2425
        %2467 = vmatpush.msra.mxu0 %v2424
        %2468 = vmatmul.f32.gmra.mxu0 %v2436
        %v2469 = vpop.f32.mrf.mxu0
        %v2470 = vadd.f32 0.0, %v2469
        %2471 = vmatmul.f32.gmra.mxu0 %v2439
        %v2472 = vpop.f32.mrf.mxu0
        %v2473 = vadd.f32 0.0, %v2472
        %2474 = vmatmul.f32.gmra.mxu0 %v2442
        %v2475 = vpop.f32.mrf.mxu0
        %v2476 = vadd.f32 0.0, %v2475
        %2477 = vmatmul.f32.gmra.mxu0 %v2445
        %v2478 = vpop.f32.mrf.mxu0
        %v2479 = vadd.f32 0.0, %v2478
        %2480 = vmatmul.f32.gmra.mxu0 %v2448
        %v2481 = vpop.f32.mrf.mxu0
        %v2482 = vadd.f32 0.0, %v2481
        %2483 = vdwg.mxu0
        %v2484 = vadd.f32 %v2388, %v2470
        %v2485 = vadd.f32 %v2389, %v2473
        %v2486 = vadd.f32 %v2390, %v2476
        %v2487 = vadd.f32 %v2391, %v2479
        %v2488 = vadd.f32 %v2392, %v2482
        %s2489 = scalar_lea.vmem %s2, 880
        %v2490 = vld [vmem:[%s2489] sm:$0xff]
        %v2491 = vld [vmem:[%s2489 + $0x8] sm:$0xff]
        %v2492 = vld [vmem:[%s2489 + $0x10] sm:$0xff]
        %v2493 = vld [vmem:[%s2489 + $0x18] sm:$0xff]
        %v2494 = vld [vmem:[%s2489 + $0x20] sm:$0xff]
        %2495 = vrot.lane.b32.xlu0 %v398, 106
        %v2496 = vpop.permute.xlu0 %2495
        %2497 = vrot.lane.b32.xlu0 %v404, 106
        %v2498 = vpop.permute.xlu0 %2497
        %2499 = vrot.lane.b32.xlu0 %v399, 106
        %v2500 = vpop.permute.xlu0 %2499
        %2501 = vrot.lane.b32.xlu0 %v405, 106
        %v2502 = vpop.permute.xlu0 %2501
        %2503 = vrot.lane.b32.xlu0 %v400, 106
        %v2504 = vpop.permute.xlu0 %2503
        %2505 = vrot.lane.b32.xlu0 %v406, 106
        %v2506 = vpop.permute.xlu0 %2505
        %2507 = vrot.lane.b32.xlu0 %v401, 106
        %v2508 = vpop.permute.xlu0 %2507
        %2509 = vrot.lane.b32.xlu0 %v407, 106
        %v2510 = vpop.permute.xlu0 %2509
        %2511 = vrot.lane.b32.xlu0 %v402, 106
        %v2512 = vpop.permute.xlu0 %2511
        %2513 = vrot.lane.b32.xlu0 %v408, 106
        %v2514 = vpop.permute.xlu0 %2513
        %2515 = vrot.lane.b32.xlu0 %v403, 106
        %v2516 = vpop.permute.xlu0 %2515
        %2517 = vrot.lane.b32.xlu0 %v409, 106
        %v2518 = vpop.permute.xlu0 %2517
        %vm2519 = vcmask 867328
        %v2520 = vsel %vm2519, %v2496, %v2498
        %v2521 = vsel %vm2519, %v2500, %v2502
        %v2522 = vsel %vm2519, %v2504, %v2506
        %v2523 = vsel %vm2519, %v2508, %v2510
        %v2524 = vsel %vm2519, %v2512, %v2514
        %v2525 = vsel %vm2519, %v2516, %v2518
        %v2532 = vsel %vm469, %v2490, 0
        %v2535 = vsel %vm469, %v2491, 0
        %v2538 = vsel %vm469, %v2492, 0
        %v2541 = vsel %vm469, %v2493, 0
        %v2544 = vsel %vm469, %v2494, 0
        %v2546 = vsel %vm485, %v2525, 0
        %2548 = vmatpush.msra.mxu0 0.0
        %2549 = vmatpush.msra.mxu0 0.0
        %2550 = vmatpush.msra.mxu0 0.0
        %2551 = vmatpush.msra.mxu0 0.0
        %2552 = vmatpush.msra.mxu0 0.0
        %2553 = vmatpush.msra.mxu0 0.0
        %2554 = vmatpush.msra.mxu0 0.0
        %2555 = vmatpush.msra.mxu0 0.0
        %2556 = vmatpush.msra.mxu0 0.0
        %2557 = vmatpush.msra.mxu0 0.0
        %2558 = vmatpush.msra.mxu0 %v2546
        %2559 = vmatpush.msra.mxu0 %v2524
        %2560 = vmatpush.msra.mxu0 %v2523
        %2561 = vmatpush.msra.mxu0 %v2522
        %2562 = vmatpush.msra.mxu0 %v2521
        %2563 = vmatpush.msra.mxu0 %v2520
        %2564 = vmatmul.f32.gmra.mxu0 %v2532
        %v2565 = vpop.f32.mrf.mxu0
        %v2566 = vadd.f32 0.0, %v2565
        %2567 = vmatmul.f32.gmra.mxu0 %v2535
        %v2568 = vpop.f32.mrf.mxu0
        %v2569 = vadd.f32 0.0, %v2568
        %2570 = vmatmul.f32.gmra.mxu0 %v2538
        %v2571 = vpop.f32.mrf.mxu0
        %v2572 = vadd.f32 0.0, %v2571
        %2573 = vmatmul.f32.gmra.mxu0 %v2541
        %v2574 = vpop.f32.mrf.mxu0
        %v2575 = vadd.f32 0.0, %v2574
        %2576 = vmatmul.f32.gmra.mxu0 %v2544
        %v2577 = vpop.f32.mrf.mxu0
        %v2578 = vadd.f32 0.0, %v2577
        %2579 = vdwg.mxu0
        %v2580 = vadd.f32 %v2484, %v2566
        %v2581 = vadd.f32 %v2485, %v2569
        %v2582 = vadd.f32 %v2486, %v2572
        %v2583 = vadd.f32 %v2487, %v2575
        %v2584 = vadd.f32 %v2488, %v2578
        %s2585 = scalar_lea.vmem %s2, 920
        %v2586 = vld [vmem:[%s2585] sm:$0xff]
        %v2587 = vld [vmem:[%s2585 + $0x8] sm:$0xff]
        %v2588 = vld [vmem:[%s2585 + $0x10] sm:$0xff]
        %v2589 = vld [vmem:[%s2585 + $0x18] sm:$0xff]
        %v2590 = vld [vmem:[%s2585 + $0x20] sm:$0xff]
        %2591 = vrot.lane.b32.xlu0 %v398, 105
        %v2592 = vpop.permute.xlu0 %2591
        %2593 = vrot.lane.b32.xlu0 %v404, 105
        %v2594 = vpop.permute.xlu0 %2593
        %2595 = vrot.lane.b32.xlu0 %v399, 105
        %v2596 = vpop.permute.xlu0 %2595
        %2597 = vrot.lane.b32.xlu0 %v405, 105
        %v2598 = vpop.permute.xlu0 %2597
        %2599 = vrot.lane.b32.xlu0 %v400, 105
        %v2600 = vpop.permute.xlu0 %2599
        %2601 = vrot.lane.b32.xlu0 %v406, 105
        %v2602 = vpop.permute.xlu0 %2601
        %2603 = vrot.lane.b32.xlu0 %v401, 105
        %v2604 = vpop.permute.xlu0 %2603
        %2605 = vrot.lane.b32.xlu0 %v407, 105
        %v2606 = vpop.permute.xlu0 %2605
        %2607 = vrot.lane.b32.xlu0 %v402, 105
        %v2608 = vpop.permute.xlu0 %2607
        %2609 = vrot.lane.b32.xlu0 %v408, 105
        %v2610 = vpop.permute.xlu0 %2609
        %2611 = vrot.lane.b32.xlu0 %v403, 105
        %v2612 = vpop.permute.xlu0 %2611
        %2613 = vrot.lane.b32.xlu0 %v409, 105
        %v2614 = vpop.permute.xlu0 %2613
        %vm2615 = vcmask 859136
        %v2616 = vsel %vm2615, %v2592, %v2594
        %v2617 = vsel %vm2615, %v2596, %v2598
        %v2618 = vsel %vm2615, %v2600, %v2602
        %v2619 = vsel %vm2615, %v2604, %v2606
        %v2620 = vsel %vm2615, %v2608, %v2610
        %v2621 = vsel %vm2615, %v2612, %v2614
        %v2628 = vsel %vm469, %v2586, 0
        %v2631 = vsel %vm469, %v2587, 0
        %v2634 = vsel %vm469, %v2588, 0
        %v2637 = vsel %vm469, %v2589, 0
        %v2640 = vsel %vm469, %v2590, 0
        %v2642 = vsel %vm485, %v2621, 0
        %2644 = vmatpush.msra.mxu0 0.0
        %2645 = vmatpush.msra.mxu0 0.0
        %2646 = vmatpush.msra.mxu0 0.0
        %2647 = vmatpush.msra.mxu0 0.0
        %2648 = vmatpush.msra.mxu0 0.0
        %2649 = vmatpush.msra.mxu0 0.0
        %2650 = vmatpush.msra.mxu0 0.0
        %2651 = vmatpush.msra.mxu0 0.0
        %2652 = vmatpush.msra.mxu0 0.0
        %2653 = vmatpush.msra.mxu0 0.0
        %2654 = vmatpush.msra.mxu0 %v2642
        %2655 = vmatpush.msra.mxu0 %v2620
        %2656 = vmatpush.msra.mxu0 %v2619
        %2657 = vmatpush.msra.mxu0 %v2618
        %2658 = vmatpush.msra.mxu0 %v2617
        %2659 = vmatpush.msra.mxu0 %v2616
        %2660 = vmatmul.f32.gmra.mxu0 %v2628
        %v2661 = vpop.f32.mrf.mxu0
        %v2662 = vadd.f32 0.0, %v2661
        %2663 = vmatmul.f32.gmra.mxu0 %v2631
        %v2664 = vpop.f32.mrf.mxu0
        %v2665 = vadd.f32 0.0, %v2664
        %2666 = vmatmul.f32.gmra.mxu0 %v2634
        %v2667 = vpop.f32.mrf.mxu0
        %v2668 = vadd.f32 0.0, %v2667
        %2669 = vmatmul.f32.gmra.mxu0 %v2637
        %v2670 = vpop.f32.mrf.mxu0
        %v2671 = vadd.f32 0.0, %v2670
        %2672 = vmatmul.f32.gmra.mxu0 %v2640
        %v2673 = vpop.f32.mrf.mxu0
        %v2674 = vadd.f32 0.0, %v2673
        %2675 = vdwg.mxu0
        %v2676 = vadd.f32 %v2580, %v2662
        %v2677 = vadd.f32 %v2581, %v2665
        %v2678 = vadd.f32 %v2582, %v2668
        %v2679 = vadd.f32 %v2583, %v2671
        %v2680 = vadd.f32 %v2584, %v2674
        %s2681 = scalar_lea.vmem %s2, 960
        %v2682 = vld [vmem:[%s2681] sm:$0xff]
        %v2683 = vld [vmem:[%s2681 + $0x8] sm:$0xff]
        %v2684 = vld [vmem:[%s2681 + $0x10] sm:$0xff]
        %v2685 = vld [vmem:[%s2681 + $0x18] sm:$0xff]
        %v2686 = vld [vmem:[%s2681 + $0x20] sm:$0xff]
        %2687 = vrot.lane.b32.xlu0 %v398, 104
        %v2688 = vpop.permute.xlu0 %2687
        %2689 = vrot.lane.b32.xlu0 %v404, 104
        %v2690 = vpop.permute.xlu0 %2689
        %2691 = vrot.lane.b32.xlu0 %v399, 104
        %v2692 = vpop.permute.xlu0 %2691
        %2693 = vrot.lane.b32.xlu0 %v405, 104
        %v2694 = vpop.permute.xlu0 %2693
        %2695 = vrot.lane.b32.xlu0 %v400, 104
        %v2696 = vpop.permute.xlu0 %2695
        %2697 = vrot.lane.b32.xlu0 %v406, 104
        %v2698 = vpop.permute.xlu0 %2697
        %2699 = vrot.lane.b32.xlu0 %v401, 104
        %v2700 = vpop.permute.xlu0 %2699
        %2701 = vrot.lane.b32.xlu0 %v407, 104
        %v2702 = vpop.permute.xlu0 %2701
        %2703 = vrot.lane.b32.xlu0 %v402, 104
        %v2704 = vpop.permute.xlu0 %2703
        %2705 = vrot.lane.b32.xlu0 %v408, 104
        %v2706 = vpop.permute.xlu0 %2705
        %2707 = vrot.lane.b32.xlu0 %v403, 104
        %v2708 = vpop.permute.xlu0 %2707
        %2709 = vrot.lane.b32.xlu0 %v409, 104
        %v2710 = vpop.permute.xlu0 %2709
        %vm2711 = vcmask 850944
        %v2712 = vsel %vm2711, %v2688, %v2690
        %v2713 = vsel %vm2711, %v2692, %v2694
        %v2714 = vsel %vm2711, %v2696, %v2698
        %v2715 = vsel %vm2711, %v2700, %v2702
        %v2716 = vsel %vm2711, %v2704, %v2706
        %v2717 = vsel %vm2711, %v2708, %v2710
        %v2724 = vsel %vm469, %v2682, 0
        %v2727 = vsel %vm469, %v2683, 0
        %v2730 = vsel %vm469, %v2684, 0
        %v2733 = vsel %vm469, %v2685, 0
        %v2736 = vsel %vm469, %v2686, 0
        %v2738 = vsel %vm485, %v2717, 0
        %2740 = vmatpush.msra.mxu0 0.0
        %2741 = vmatpush.msra.mxu0 0.0
        %2742 = vmatpush.msra.mxu0 0.0
        %2743 = vmatpush.msra.mxu0 0.0
        %2744 = vmatpush.msra.mxu0 0.0
        %2745 = vmatpush.msra.mxu0 0.0
        %2746 = vmatpush.msra.mxu0 0.0
        %2747 = vmatpush.msra.mxu0 0.0
        %2748 = vmatpush.msra.mxu0 0.0
        %2749 = vmatpush.msra.mxu0 0.0
        %2750 = vmatpush.msra.mxu0 %v2738
        %2751 = vmatpush.msra.mxu0 %v2716
        %2752 = vmatpush.msra.mxu0 %v2715
        %2753 = vmatpush.msra.mxu0 %v2714
        %2754 = vmatpush.msra.mxu0 %v2713
        %2755 = vmatpush.msra.mxu0 %v2712
        %2756 = vmatmul.f32.gmra.mxu0 %v2724
        %v2757 = vpop.f32.mrf.mxu0
        %v2758 = vadd.f32 0.0, %v2757
        %2759 = vmatmul.f32.gmra.mxu0 %v2727
        %v2760 = vpop.f32.mrf.mxu0
        %v2761 = vadd.f32 0.0, %v2760
        %2762 = vmatmul.f32.gmra.mxu0 %v2730
        %v2763 = vpop.f32.mrf.mxu0
        %v2764 = vadd.f32 0.0, %v2763
        %2765 = vmatmul.f32.gmra.mxu0 %v2733
        %v2766 = vpop.f32.mrf.mxu0
        %v2767 = vadd.f32 0.0, %v2766
        %2768 = vmatmul.f32.gmra.mxu0 %v2736
        %v2769 = vpop.f32.mrf.mxu0
        %v2770 = vadd.f32 0.0, %v2769
        %2771 = vdwg.mxu0
        %v2772 = vadd.f32 %v2676, %v2758
        %v2773 = vadd.f32 %v2677, %v2761
        %v2774 = vadd.f32 %v2678, %v2764
        %v2775 = vadd.f32 %v2679, %v2767
        %v2776 = vadd.f32 %v2680, %v2770
        %s2777 = scalar_lea.vmem %s2, 1000
        %v2778 = vld [vmem:[%s2777] sm:$0xff]
        %v2779 = vld [vmem:[%s2777 + $0x8] sm:$0xff]
        %v2780 = vld [vmem:[%s2777 + $0x10] sm:$0xff]
        %v2781 = vld [vmem:[%s2777 + $0x18] sm:$0xff]
        %v2782 = vld [vmem:[%s2777 + $0x20] sm:$0xff]
        %2783 = vrot.lane.b32.xlu0 %v398, 103
        %v2784 = vpop.permute.xlu0 %2783
        %2785 = vrot.lane.b32.xlu0 %v404, 103
        %v2786 = vpop.permute.xlu0 %2785
        %2787 = vrot.lane.b32.xlu0 %v399, 103
        %v2788 = vpop.permute.xlu0 %2787
        %2789 = vrot.lane.b32.xlu0 %v405, 103
        %v2790 = vpop.permute.xlu0 %2789
        %2791 = vrot.lane.b32.xlu0 %v400, 103
        %v2792 = vpop.permute.xlu0 %2791
        %2793 = vrot.lane.b32.xlu0 %v406, 103
        %v2794 = vpop.permute.xlu0 %2793
        %2795 = vrot.lane.b32.xlu0 %v401, 103
        %v2796 = vpop.permute.xlu0 %2795
        %2797 = vrot.lane.b32.xlu0 %v407, 103
        %v2798 = vpop.permute.xlu0 %2797
        %2799 = vrot.lane.b32.xlu0 %v402, 103
        %v2800 = vpop.permute.xlu0 %2799
        %2801 = vrot.lane.b32.xlu0 %v408, 103
        %v2802 = vpop.permute.xlu0 %2801
        %2803 = vrot.lane.b32.xlu0 %v403, 103
        %v2804 = vpop.permute.xlu0 %2803
        %2805 = vrot.lane.b32.xlu0 %v409, 103
        %v2806 = vpop.permute.xlu0 %2805
        %vm2807 = vcmask 842752
        %v2808 = vsel %vm2807, %v2784, %v2786
        %v2809 = vsel %vm2807, %v2788, %v2790
        %v2810 = vsel %vm2807, %v2792, %v2794
        %v2811 = vsel %vm2807, %v2796, %v2798
        %v2812 = vsel %vm2807, %v2800, %v2802
        %v2813 = vsel %vm2807, %v2804, %v2806
        %v2820 = vsel %vm469, %v2778, 0
        %v2823 = vsel %vm469, %v2779, 0
        %v2826 = vsel %vm469, %v2780, 0
        %v2829 = vsel %vm469, %v2781, 0
        %v2832 = vsel %vm469, %v2782, 0
        %v2834 = vsel %vm485, %v2813, 0
        %2836 = vmatpush.msra.mxu0 0.0
        %2837 = vmatpush.msra.mxu0 0.0
        %2838 = vmatpush.msra.mxu0 0.0
        %2839 = vmatpush.msra.mxu0 0.0
        %2840 = vmatpush.msra.mxu0 0.0
        %2841 = vmatpush.msra.mxu0 0.0
        %2842 = vmatpush.msra.mxu0 0.0
        %2843 = vmatpush.msra.mxu0 0.0
        %2844 = vmatpush.msra.mxu0 0.0
        %2845 = vmatpush.msra.mxu0 0.0
        %2846 = vmatpush.msra.mxu0 %v2834
        %2847 = vmatpush.msra.mxu0 %v2812
        %2848 = vmatpush.msra.mxu0 %v2811
        %2849 = vmatpush.msra.mxu0 %v2810
        %2850 = vmatpush.msra.mxu0 %v2809
        %2851 = vmatpush.msra.mxu0 %v2808
        %2852 = vmatmul.f32.gmra.mxu0 %v2820
        %v2853 = vpop.f32.mrf.mxu0
        %v2854 = vadd.f32 0.0, %v2853
        %2855 = vmatmul.f32.gmra.mxu0 %v2823
        %v2856 = vpop.f32.mrf.mxu0
        %v2857 = vadd.f32 0.0, %v2856
        %2858 = vmatmul.f32.gmra.mxu0 %v2826
        %v2859 = vpop.f32.mrf.mxu0
        %v2860 = vadd.f32 0.0, %v2859
        %2861 = vmatmul.f32.gmra.mxu0 %v2829
        %v2862 = vpop.f32.mrf.mxu0
        %v2863 = vadd.f32 0.0, %v2862
        %2864 = vmatmul.f32.gmra.mxu0 %v2832
        %v2865 = vpop.f32.mrf.mxu0
        %v2866 = vadd.f32 0.0, %v2865
        %2867 = vdwg.mxu0
        %v2868 = vadd.f32 %v2772, %v2854
        %v2869 = vadd.f32 %v2773, %v2857
        %v2870 = vadd.f32 %v2774, %v2860
        %v2871 = vadd.f32 %v2775, %v2863
        %v2872 = vadd.f32 %v2776, %v2866
        %s2873 = scalar_lea.vmem %s2, 1040
        %v2874 = vld [vmem:[%s2873] sm:$0xff]
        %v2875 = vld [vmem:[%s2873 + $0x8] sm:$0xff]
        %v2876 = vld [vmem:[%s2873 + $0x10] sm:$0xff]
        %v2877 = vld [vmem:[%s2873 + $0x18] sm:$0xff]
        %v2878 = vld [vmem:[%s2873 + $0x20] sm:$0xff]
        %2879 = vrot.lane.b32.xlu0 %v398, 102
        %v2880 = vpop.permute.xlu0 %2879
        %2881 = vrot.lane.b32.xlu0 %v404, 102
        %v2882 = vpop.permute.xlu0 %2881
        %2883 = vrot.lane.b32.xlu0 %v399, 102
        %v2884 = vpop.permute.xlu0 %2883
        %2885 = vrot.lane.b32.xlu0 %v405, 102
        %v2886 = vpop.permute.xlu0 %2885
        %2887 = vrot.lane.b32.xlu0 %v400, 102
        %v2888 = vpop.permute.xlu0 %2887
        %2889 = vrot.lane.b32.xlu0 %v406, 102
        %v2890 = vpop.permute.xlu0 %2889
        %2891 = vrot.lane.b32.xlu0 %v401, 102
        %v2892 = vpop.permute.xlu0 %2891
        %2893 = vrot.lane.b32.xlu0 %v407, 102
        %v2894 = vpop.permute.xlu0 %2893
        %2895 = vrot.lane.b32.xlu0 %v402, 102
        %v2896 = vpop.permute.xlu0 %2895
        %2897 = vrot.lane.b32.xlu0 %v408, 102
        %v2898 = vpop.permute.xlu0 %2897
        %2899 = vrot.lane.b32.xlu0 %v403, 102
        %v2900 = vpop.permute.xlu0 %2899
        %2901 = vrot.lane.b32.xlu0 %v409, 102
        %v2902 = vpop.permute.xlu0 %2901
        %vm2903 = vcmask 834560
        %v2904 = vsel %vm2903, %v2880, %v2882
        %v2905 = vsel %vm2903, %v2884, %v2886
        %v2906 = vsel %vm2903, %v2888, %v2890
        %v2907 = vsel %vm2903, %v2892, %v2894
        %v2908 = vsel %vm2903, %v2896, %v2898
        %v2909 = vsel %vm2903, %v2900, %v2902
        %v2916 = vsel %vm469, %v2874, 0
        %v2919 = vsel %vm469, %v2875, 0
        %v2922 = vsel %vm469, %v2876, 0
        %v2925 = vsel %vm469, %v2877, 0
        %v2928 = vsel %vm469, %v2878, 0
        %v2930 = vsel %vm485, %v2909, 0
        %2932 = vmatpush.msra.mxu0 0.0
        %2933 = vmatpush.msra.mxu0 0.0
        %2934 = vmatpush.msra.mxu0 0.0
        %2935 = vmatpush.msra.mxu0 0.0
        %2936 = vmatpush.msra.mxu0 0.0
        %2937 = vmatpush.msra.mxu0 0.0
        %2938 = vmatpush.msra.mxu0 0.0
        %2939 = vmatpush.msra.mxu0 0.0
        %2940 = vmatpush.msra.mxu0 0.0
        %2941 = vmatpush.msra.mxu0 0.0
        %2942 = vmatpush.msra.mxu0 %v2930
        %2943 = vmatpush.msra.mxu0 %v2908
        %2944 = vmatpush.msra.mxu0 %v2907
        %2945 = vmatpush.msra.mxu0 %v2906
        %2946 = vmatpush.msra.mxu0 %v2905
        %2947 = vmatpush.msra.mxu0 %v2904
        %2948 = vmatmul.f32.gmra.mxu0 %v2916
        %v2949 = vpop.f32.mrf.mxu0
        %v2950 = vadd.f32 0.0, %v2949
        %2951 = vmatmul.f32.gmra.mxu0 %v2919
        %v2952 = vpop.f32.mrf.mxu0
        %v2953 = vadd.f32 0.0, %v2952
        %2954 = vmatmul.f32.gmra.mxu0 %v2922
        %v2955 = vpop.f32.mrf.mxu0
        %v2956 = vadd.f32 0.0, %v2955
        %2957 = vmatmul.f32.gmra.mxu0 %v2925
        %v2958 = vpop.f32.mrf.mxu0
        %v2959 = vadd.f32 0.0, %v2958
        %2960 = vmatmul.f32.gmra.mxu0 %v2928
        %v2961 = vpop.f32.mrf.mxu0
        %v2962 = vadd.f32 0.0, %v2961
        %2963 = vdwg.mxu0
        %v2964 = vadd.f32 %v2868, %v2950
        %v2965 = vadd.f32 %v2869, %v2953
        %v2966 = vadd.f32 %v2870, %v2956
        %v2967 = vadd.f32 %v2871, %v2959
        %v2968 = vadd.f32 %v2872, %v2962
        %s2969 = scalar_lea.vmem %s2, 1080
        %v2970 = vld [vmem:[%s2969] sm:$0xff]
        %v2971 = vld [vmem:[%s2969 + $0x8] sm:$0xff]
        %v2972 = vld [vmem:[%s2969 + $0x10] sm:$0xff]
        %v2973 = vld [vmem:[%s2969 + $0x18] sm:$0xff]
        %v2974 = vld [vmem:[%s2969 + $0x20] sm:$0xff]
        %2975 = vrot.lane.b32.xlu0 %v398, 101
        %v2976 = vpop.permute.xlu0 %2975
        %2977 = vrot.lane.b32.xlu0 %v404, 101
        %v2978 = vpop.permute.xlu0 %2977
        %2979 = vrot.lane.b32.xlu0 %v399, 101
        %v2980 = vpop.permute.xlu0 %2979
        %2981 = vrot.lane.b32.xlu0 %v405, 101
        %v2982 = vpop.permute.xlu0 %2981
        %2983 = vrot.lane.b32.xlu0 %v400, 101
        %v2984 = vpop.permute.xlu0 %2983
        %2985 = vrot.lane.b32.xlu0 %v406, 101
        %v2986 = vpop.permute.xlu0 %2985
        %2987 = vrot.lane.b32.xlu0 %v401, 101
        %v2988 = vpop.permute.xlu0 %2987
        %2989 = vrot.lane.b32.xlu0 %v407, 101
        %v2990 = vpop.permute.xlu0 %2989
        %2991 = vrot.lane.b32.xlu0 %v402, 101
        %v2992 = vpop.permute.xlu0 %2991
        %2993 = vrot.lane.b32.xlu0 %v408, 101
        %v2994 = vpop.permute.xlu0 %2993
        %2995 = vrot.lane.b32.xlu0 %v403, 101
        %v2996 = vpop.permute.xlu0 %2995
        %2997 = vrot.lane.b32.xlu0 %v409, 101
        %v2998 = vpop.permute.xlu0 %2997
        %vm2999 = vcmask 826368
        %v3000 = vsel %vm2999, %v2976, %v2978
        %v3001 = vsel %vm2999, %v2980, %v2982
        %v3002 = vsel %vm2999, %v2984, %v2986
        %v3003 = vsel %vm2999, %v2988, %v2990
        %v3004 = vsel %vm2999, %v2992, %v2994
        %v3005 = vsel %vm2999, %v2996, %v2998
        %v3012 = vsel %vm469, %v2970, 0
        %v3015 = vsel %vm469, %v2971, 0
        %v3018 = vsel %vm469, %v2972, 0
        %v3021 = vsel %vm469, %v2973, 0
        %v3024 = vsel %vm469, %v2974, 0
        %v3026 = vsel %vm485, %v3005, 0
        %3028 = vmatpush.msra.mxu0 0.0
        %3029 = vmatpush.msra.mxu0 0.0
        %3030 = vmatpush.msra.mxu0 0.0
        %3031 = vmatpush.msra.mxu0 0.0
        %3032 = vmatpush.msra.mxu0 0.0
        %3033 = vmatpush.msra.mxu0 0.0
        %3034 = vmatpush.msra.mxu0 0.0
        %3035 = vmatpush.msra.mxu0 0.0
        %3036 = vmatpush.msra.mxu0 0.0
        %3037 = vmatpush.msra.mxu0 0.0
        %3038 = vmatpush.msra.mxu0 %v3026
        %3039 = vmatpush.msra.mxu0 %v3004
        %3040 = vmatpush.msra.mxu0 %v3003
        %3041 = vmatpush.msra.mxu0 %v3002
        %3042 = vmatpush.msra.mxu0 %v3001
        %3043 = vmatpush.msra.mxu0 %v3000
        %3044 = vmatmul.f32.gmra.mxu0 %v3012
        %v3045 = vpop.f32.mrf.mxu0
        %v3046 = vadd.f32 0.0, %v3045
        %3047 = vmatmul.f32.gmra.mxu0 %v3015
        %v3048 = vpop.f32.mrf.mxu0
        %v3049 = vadd.f32 0.0, %v3048
        %3050 = vmatmul.f32.gmra.mxu0 %v3018
        %v3051 = vpop.f32.mrf.mxu0
        %v3052 = vadd.f32 0.0, %v3051
        %3053 = vmatmul.f32.gmra.mxu0 %v3021
        %v3054 = vpop.f32.mrf.mxu0
        %v3055 = vadd.f32 0.0, %v3054
        %3056 = vmatmul.f32.gmra.mxu0 %v3024
        %v3057 = vpop.f32.mrf.mxu0
        %v3058 = vadd.f32 0.0, %v3057
        %3059 = vdwg.mxu0
        %v3060 = vadd.f32 %v2964, %v3046
        %v3061 = vadd.f32 %v2965, %v3049
        %v3062 = vadd.f32 %v2966, %v3052
        %v3063 = vadd.f32 %v2967, %v3055
        %v3064 = vadd.f32 %v2968, %v3058
        %s3065 = scalar_lea.vmem %s2, 1120
        %v3066 = vld [vmem:[%s3065] sm:$0xff]
        %v3067 = vld [vmem:[%s3065 + $0x8] sm:$0xff]
        %v3068 = vld [vmem:[%s3065 + $0x10] sm:$0xff]
        %v3069 = vld [vmem:[%s3065 + $0x18] sm:$0xff]
        %v3070 = vld [vmem:[%s3065 + $0x20] sm:$0xff]
        %3071 = vrot.lane.b32.xlu0 %v398, 100
        %v3072 = vpop.permute.xlu0 %3071
        %3073 = vrot.lane.b32.xlu0 %v404, 100
        %v3074 = vpop.permute.xlu0 %3073
        %3075 = vrot.lane.b32.xlu0 %v399, 100
        %v3076 = vpop.permute.xlu0 %3075
        %3077 = vrot.lane.b32.xlu0 %v405, 100
        %v3078 = vpop.permute.xlu0 %3077
        %3079 = vrot.lane.b32.xlu0 %v400, 100
        %v3080 = vpop.permute.xlu0 %3079
        %3081 = vrot.lane.b32.xlu0 %v406, 100
        %v3082 = vpop.permute.xlu0 %3081
        %3083 = vrot.lane.b32.xlu0 %v401, 100
        %v3084 = vpop.permute.xlu0 %3083
        %3085 = vrot.lane.b32.xlu0 %v407, 100
        %v3086 = vpop.permute.xlu0 %3085
        %3087 = vrot.lane.b32.xlu0 %v402, 100
        %v3088 = vpop.permute.xlu0 %3087
        %3089 = vrot.lane.b32.xlu0 %v408, 100
        %v3090 = vpop.permute.xlu0 %3089
        %3091 = vrot.lane.b32.xlu0 %v403, 100
        %v3092 = vpop.permute.xlu0 %3091
        %3093 = vrot.lane.b32.xlu0 %v409, 100
        %v3094 = vpop.permute.xlu0 %3093
        %vm3095 = vcmask 818176
        %v3096 = vsel %vm3095, %v3072, %v3074
        %v3097 = vsel %vm3095, %v3076, %v3078
        %v3098 = vsel %vm3095, %v3080, %v3082
        %v3099 = vsel %vm3095, %v3084, %v3086
        %v3100 = vsel %vm3095, %v3088, %v3090
        %v3101 = vsel %vm3095, %v3092, %v3094
        %v3108 = vsel %vm469, %v3066, 0
        %v3111 = vsel %vm469, %v3067, 0
        %v3114 = vsel %vm469, %v3068, 0
        %v3117 = vsel %vm469, %v3069, 0
        %v3120 = vsel %vm469, %v3070, 0
        %v3122 = vsel %vm485, %v3101, 0
        %3124 = vmatpush.msra.mxu0 0.0
        %3125 = vmatpush.msra.mxu0 0.0
        %3126 = vmatpush.msra.mxu0 0.0
        %3127 = vmatpush.msra.mxu0 0.0
        %3128 = vmatpush.msra.mxu0 0.0
        %3129 = vmatpush.msra.mxu0 0.0
        %3130 = vmatpush.msra.mxu0 0.0
        %3131 = vmatpush.msra.mxu0 0.0
        %3132 = vmatpush.msra.mxu0 0.0
        %3133 = vmatpush.msra.mxu0 0.0
        %3134 = vmatpush.msra.mxu0 %v3122
        %3135 = vmatpush.msra.mxu0 %v3100
        %3136 = vmatpush.msra.mxu0 %v3099
        %3137 = vmatpush.msra.mxu0 %v3098
        %3138 = vmatpush.msra.mxu0 %v3097
        %3139 = vmatpush.msra.mxu0 %v3096
        %3140 = vmatmul.f32.gmra.mxu0 %v3108
        %v3141 = vpop.f32.mrf.mxu0
        %v3142 = vadd.f32 0.0, %v3141
        %3143 = vmatmul.f32.gmra.mxu0 %v3111
        %v3144 = vpop.f32.mrf.mxu0
        %v3145 = vadd.f32 0.0, %v3144
        %3146 = vmatmul.f32.gmra.mxu0 %v3114
        %v3147 = vpop.f32.mrf.mxu0
        %v3148 = vadd.f32 0.0, %v3147
        %3149 = vmatmul.f32.gmra.mxu0 %v3117
        %v3150 = vpop.f32.mrf.mxu0
        %v3151 = vadd.f32 0.0, %v3150
        %3152 = vmatmul.f32.gmra.mxu0 %v3120
        %v3153 = vpop.f32.mrf.mxu0
        %v3154 = vadd.f32 0.0, %v3153
        %3155 = vdwg.mxu0
        %v3156 = vadd.f32 %v3060, %v3142
        %v3157 = vadd.f32 %v3061, %v3145
        %v3158 = vadd.f32 %v3062, %v3148
        %v3159 = vadd.f32 %v3063, %v3151
        %v3160 = vadd.f32 %v3064, %v3154
        %s3161 = scalar_lea.vmem %s2, 1160
        %v3162 = vld [vmem:[%s3161] sm:$0xff]
        %v3163 = vld [vmem:[%s3161 + $0x8] sm:$0xff]
        %v3164 = vld [vmem:[%s3161 + $0x10] sm:$0xff]
        %v3165 = vld [vmem:[%s3161 + $0x18] sm:$0xff]
        %v3166 = vld [vmem:[%s3161 + $0x20] sm:$0xff]
        %3167 = vrot.lane.b32.xlu0 %v398, 99
        %v3168 = vpop.permute.xlu0 %3167
        %3169 = vrot.lane.b32.xlu0 %v404, 99
        %v3170 = vpop.permute.xlu0 %3169
        %3171 = vrot.lane.b32.xlu0 %v399, 99
        %v3172 = vpop.permute.xlu0 %3171
        %3173 = vrot.lane.b32.xlu0 %v405, 99
        %v3174 = vpop.permute.xlu0 %3173
        %3175 = vrot.lane.b32.xlu0 %v400, 99
        %v3176 = vpop.permute.xlu0 %3175
        %3177 = vrot.lane.b32.xlu0 %v406, 99
        %v3178 = vpop.permute.xlu0 %3177
        %3179 = vrot.lane.b32.xlu0 %v401, 99
        %v3180 = vpop.permute.xlu0 %3179
        %3181 = vrot.lane.b32.xlu0 %v407, 99
        %v3182 = vpop.permute.xlu0 %3181
        %3183 = vrot.lane.b32.xlu0 %v402, 99
        %v3184 = vpop.permute.xlu0 %3183
        %3185 = vrot.lane.b32.xlu0 %v408, 99
        %v3186 = vpop.permute.xlu0 %3185
        %3187 = vrot.lane.b32.xlu0 %v403, 99
        %v3188 = vpop.permute.xlu0 %3187
        %3189 = vrot.lane.b32.xlu0 %v409, 99
        %v3190 = vpop.permute.xlu0 %3189
        %vm3191 = vcmask 809984
        %v3192 = vsel %vm3191, %v3168, %v3170
        %v3193 = vsel %vm3191, %v3172, %v3174
        %v3194 = vsel %vm3191, %v3176, %v3178
        %v3195 = vsel %vm3191, %v3180, %v3182
        %v3196 = vsel %vm3191, %v3184, %v3186
        %v3197 = vsel %vm3191, %v3188, %v3190
        %v3204 = vsel %vm469, %v3162, 0
        %v3207 = vsel %vm469, %v3163, 0
        %v3210 = vsel %vm469, %v3164, 0
        %v3213 = vsel %vm469, %v3165, 0
        %v3216 = vsel %vm469, %v3166, 0
        %v3218 = vsel %vm485, %v3197, 0
        %3220 = vmatpush.msra.mxu0 0.0
        %3221 = vmatpush.msra.mxu0 0.0
        %3222 = vmatpush.msra.mxu0 0.0
        %3223 = vmatpush.msra.mxu0 0.0
        %3224 = vmatpush.msra.mxu0 0.0
        %3225 = vmatpush.msra.mxu0 0.0
        %3226 = vmatpush.msra.mxu0 0.0
        %3227 = vmatpush.msra.mxu0 0.0
        %3228 = vmatpush.msra.mxu0 0.0
        %3229 = vmatpush.msra.mxu0 0.0
        %3230 = vmatpush.msra.mxu0 %v3218
        %3231 = vmatpush.msra.mxu0 %v3196
        %3232 = vmatpush.msra.mxu0 %v3195
        %3233 = vmatpush.msra.mxu0 %v3194
        %3234 = vmatpush.msra.mxu0 %v3193
        %3235 = vmatpush.msra.mxu0 %v3192
        %3236 = vmatmul.f32.gmra.mxu0 %v3204
        %v3237 = vpop.f32.mrf.mxu0
        %v3238 = vadd.f32 0.0, %v3237
        %3239 = vmatmul.f32.gmra.mxu0 %v3207
        %v3240 = vpop.f32.mrf.mxu0
        %v3241 = vadd.f32 0.0, %v3240
        %3242 = vmatmul.f32.gmra.mxu0 %v3210
        %v3243 = vpop.f32.mrf.mxu0
        %v3244 = vadd.f32 0.0, %v3243
        %3245 = vmatmul.f32.gmra.mxu0 %v3213
        %v3246 = vpop.f32.mrf.mxu0
        %v3247 = vadd.f32 0.0, %v3246
        %3248 = vmatmul.f32.gmra.mxu0 %v3216
        %v3249 = vpop.f32.mrf.mxu0
        %v3250 = vadd.f32 0.0, %v3249
        %3251 = vdwg.mxu0
        %v3252 = vadd.f32 %v3156, %v3238
        %v3253 = vadd.f32 %v3157, %v3241
        %v3254 = vadd.f32 %v3158, %v3244
        %v3255 = vadd.f32 %v3159, %v3247
        %v3256 = vadd.f32 %v3160, %v3250
        %s3257 = scalar_lea.vmem %s2, 1200
        %v3258 = vld [vmem:[%s3257] sm:$0xff]
        %v3259 = vld [vmem:[%s3257 + $0x8] sm:$0xff]
        %v3260 = vld [vmem:[%s3257 + $0x10] sm:$0xff]
        %v3261 = vld [vmem:[%s3257 + $0x18] sm:$0xff]
        %v3262 = vld [vmem:[%s3257 + $0x20] sm:$0xff]
        %3263 = vrot.lane.b32.xlu0 %v398, 98
        %v3264 = vpop.permute.xlu0 %3263
        %3265 = vrot.lane.b32.xlu0 %v404, 98
        %v3266 = vpop.permute.xlu0 %3265
        %3267 = vrot.lane.b32.xlu0 %v399, 98
        %v3268 = vpop.permute.xlu0 %3267
        %3269 = vrot.lane.b32.xlu0 %v405, 98
        %v3270 = vpop.permute.xlu0 %3269
        %3271 = vrot.lane.b32.xlu0 %v400, 98
        %v3272 = vpop.permute.xlu0 %3271
        %3273 = vrot.lane.b32.xlu0 %v406, 98
        %v3274 = vpop.permute.xlu0 %3273
        %3275 = vrot.lane.b32.xlu0 %v401, 98
        %v3276 = vpop.permute.xlu0 %3275
        %3277 = vrot.lane.b32.xlu0 %v407, 98
        %v3278 = vpop.permute.xlu0 %3277
        %3279 = vrot.lane.b32.xlu0 %v402, 98
        %v3280 = vpop.permute.xlu0 %3279
        %3281 = vrot.lane.b32.xlu0 %v408, 98
        %v3282 = vpop.permute.xlu0 %3281
        %3283 = vrot.lane.b32.xlu0 %v403, 98
        %v3284 = vpop.permute.xlu0 %3283
        %3285 = vrot.lane.b32.xlu0 %v409, 98
        %v3286 = vpop.permute.xlu0 %3285
        %vm3287 = vcmask 801792
        %v3288 = vsel %vm3287, %v3264, %v3266
        %v3289 = vsel %vm3287, %v3268, %v3270
        %v3290 = vsel %vm3287, %v3272, %v3274
        %v3291 = vsel %vm3287, %v3276, %v3278
        %v3292 = vsel %vm3287, %v3280, %v3282
        %v3293 = vsel %vm3287, %v3284, %v3286
        %v3300 = vsel %vm469, %v3258, 0
        %v3303 = vsel %vm469, %v3259, 0
        %v3306 = vsel %vm469, %v3260, 0
        %v3309 = vsel %vm469, %v3261, 0
        %v3312 = vsel %vm469, %v3262, 0
        %v3314 = vsel %vm485, %v3293, 0
        %3316 = vmatpush.msra.mxu0 0.0
        %3317 = vmatpush.msra.mxu0 0.0
        %3318 = vmatpush.msra.mxu0 0.0
        %3319 = vmatpush.msra.mxu0 0.0
        %3320 = vmatpush.msra.mxu0 0.0
        %3321 = vmatpush.msra.mxu0 0.0
        %3322 = vmatpush.msra.mxu0 0.0
        %3323 = vmatpush.msra.mxu0 0.0
        %3324 = vmatpush.msra.mxu0 0.0
        %3325 = vmatpush.msra.mxu0 0.0
        %3326 = vmatpush.msra.mxu0 %v3314
        %3327 = vmatpush.msra.mxu0 %v3292
        %3328 = vmatpush.msra.mxu0 %v3291
        %3329 = vmatpush.msra.mxu0 %v3290
        %3330 = vmatpush.msra.mxu0 %v3289
        %3331 = vmatpush.msra.mxu0 %v3288
        %3332 = vmatmul.f32.gmra.mxu0 %v3300
        %v3333 = vpop.f32.mrf.mxu0
        %v3334 = vadd.f32 0.0, %v3333
        %3335 = vmatmul.f32.gmra.mxu0 %v3303
        %v3336 = vpop.f32.mrf.mxu0
        %v3337 = vadd.f32 0.0, %v3336
        %3338 = vmatmul.f32.gmra.mxu0 %v3306
        %v3339 = vpop.f32.mrf.mxu0
        %v3340 = vadd.f32 0.0, %v3339
        %3341 = vmatmul.f32.gmra.mxu0 %v3309
        %v3342 = vpop.f32.mrf.mxu0
        %v3343 = vadd.f32 0.0, %v3342
        %3344 = vmatmul.f32.gmra.mxu0 %v3312
        %v3345 = vpop.f32.mrf.mxu0
        %v3346 = vadd.f32 0.0, %v3345
        %3347 = vdwg.mxu0
        %v3348 = vadd.f32 %v3252, %v3334
        %v3349 = vadd.f32 %v3253, %v3337
        %v3350 = vadd.f32 %v3254, %v3340
        %v3351 = vadd.f32 %v3255, %v3343
        %v3352 = vadd.f32 %v3256, %v3346
        %s3353 = scalar_lea.vmem %s2, 1240
        %v3354 = vld [vmem:[%s3353] sm:$0xff]
        %v3355 = vld [vmem:[%s3353 + $0x8] sm:$0xff]
        %v3356 = vld [vmem:[%s3353 + $0x10] sm:$0xff]
        %v3357 = vld [vmem:[%s3353 + $0x18] sm:$0xff]
        %v3358 = vld [vmem:[%s3353 + $0x20] sm:$0xff]
        %3359 = vrot.lane.b32.xlu0 %v398, 97
        %v3360 = vpop.permute.xlu0 %3359
        %3361 = vrot.lane.b32.xlu0 %v404, 97
        %v3362 = vpop.permute.xlu0 %3361
        %3363 = vrot.lane.b32.xlu0 %v399, 97
        %v3364 = vpop.permute.xlu0 %3363
        %3365 = vrot.lane.b32.xlu0 %v405, 97
        %v3366 = vpop.permute.xlu0 %3365
        %3367 = vrot.lane.b32.xlu0 %v400, 97
        %v3368 = vpop.permute.xlu0 %3367
        %3369 = vrot.lane.b32.xlu0 %v406, 97
        %v3370 = vpop.permute.xlu0 %3369
        %3371 = vrot.lane.b32.xlu0 %v401, 97
        %v3372 = vpop.permute.xlu0 %3371
        %3373 = vrot.lane.b32.xlu0 %v407, 97
        %v3374 = vpop.permute.xlu0 %3373
        %3375 = vrot.lane.b32.xlu0 %v402, 97
        %v3376 = vpop.permute.xlu0 %3375
        %3377 = vrot.lane.b32.xlu0 %v408, 97
        %v3378 = vpop.permute.xlu0 %3377
        %3379 = vrot.lane.b32.xlu0 %v403, 97
        %v3380 = vpop.permute.xlu0 %3379
        %3381 = vrot.lane.b32.xlu0 %v409, 97
        %v3382 = vpop.permute.xlu0 %3381
        %vm3383 = vcmask 793600
        %v3384 = vsel %vm3383, %v3360, %v3362
        %v3385 = vsel %vm3383, %v3364, %v3366
        %v3386 = vsel %vm3383, %v3368, %v3370
        %v3387 = vsel %vm3383, %v3372, %v3374
        %v3388 = vsel %vm3383, %v3376, %v3378
        %v3389 = vsel %vm3383, %v3380, %v3382
        %v3396 = vsel %vm469, %v3354, 0
        %v3399 = vsel %vm469, %v3355, 0
        %v3402 = vsel %vm469, %v3356, 0
        %v3405 = vsel %vm469, %v3357, 0
        %v3408 = vsel %vm469, %v3358, 0
        %v3410 = vsel %vm485, %v3389, 0
        %3412 = vmatpush.msra.mxu0 0.0
        %3413 = vmatpush.msra.mxu0 0.0
        %3414 = vmatpush.msra.mxu0 0.0
        %3415 = vmatpush.msra.mxu0 0.0
        %3416 = vmatpush.msra.mxu0 0.0
        %3417 = vmatpush.msra.mxu0 0.0
        %3418 = vmatpush.msra.mxu0 0.0
        %3419 = vmatpush.msra.mxu0 0.0
        %3420 = vmatpush.msra.mxu0 0.0
        %3421 = vmatpush.msra.mxu0 0.0
        %3422 = vmatpush.msra.mxu0 %v3410
        %3423 = vmatpush.msra.mxu0 %v3388
        %3424 = vmatpush.msra.mxu0 %v3387
        %3425 = vmatpush.msra.mxu0 %v3386
        %3426 = vmatpush.msra.mxu0 %v3385
        %3427 = vmatpush.msra.mxu0 %v3384
        %3428 = vmatmul.f32.gmra.mxu0 %v3396
        %v3429 = vpop.f32.mrf.mxu0
        %v3430 = vadd.f32 0.0, %v3429
        %3431 = vmatmul.f32.gmra.mxu0 %v3399
        %v3432 = vpop.f32.mrf.mxu0
        %v3433 = vadd.f32 0.0, %v3432
        %3434 = vmatmul.f32.gmra.mxu0 %v3402
        %v3435 = vpop.f32.mrf.mxu0
        %v3436 = vadd.f32 0.0, %v3435
        %3437 = vmatmul.f32.gmra.mxu0 %v3405
        %v3438 = vpop.f32.mrf.mxu0
        %v3439 = vadd.f32 0.0, %v3438
        %3440 = vmatmul.f32.gmra.mxu0 %v3408
        %v3441 = vpop.f32.mrf.mxu0
        %v3442 = vadd.f32 0.0, %v3441
        %3443 = vdwg.mxu0
        %v3444 = vadd.f32 %v3348, %v3430
        %v3445 = vadd.f32 %v3349, %v3433
        %v3446 = vadd.f32 %v3350, %v3436
        %v3447 = vadd.f32 %v3351, %v3439
        %v3448 = vadd.f32 %v3352, %v3442
        %s3449 = scalar_lea.vmem %s2, 1280
        %v3450 = vld [vmem:[%s3449] sm:$0xff]
        %v3451 = vld [vmem:[%s3449 + $0x8] sm:$0xff]
        %v3452 = vld [vmem:[%s3449 + $0x10] sm:$0xff]
        %v3453 = vld [vmem:[%s3449 + $0x18] sm:$0xff]
        %v3454 = vld [vmem:[%s3449 + $0x20] sm:$0xff]
        %3455 = vrot.lane.b32.xlu0 %v398, 96
        %v3456 = vpop.permute.xlu0 %3455
        %3457 = vrot.lane.b32.xlu0 %v404, 96
        %v3458 = vpop.permute.xlu0 %3457
        %3459 = vrot.lane.b32.xlu0 %v399, 96
        %v3460 = vpop.permute.xlu0 %3459
        %3461 = vrot.lane.b32.xlu0 %v405, 96
        %v3462 = vpop.permute.xlu0 %3461
        %3463 = vrot.lane.b32.xlu0 %v400, 96
        %v3464 = vpop.permute.xlu0 %3463
        %3465 = vrot.lane.b32.xlu0 %v406, 96
        %v3466 = vpop.permute.xlu0 %3465
        %3467 = vrot.lane.b32.xlu0 %v401, 96
        %v3468 = vpop.permute.xlu0 %3467
        %3469 = vrot.lane.b32.xlu0 %v407, 96
        %v3470 = vpop.permute.xlu0 %3469
        %3471 = vrot.lane.b32.xlu0 %v402, 96
        %v3472 = vpop.permute.xlu0 %3471
        %3473 = vrot.lane.b32.xlu0 %v408, 96
        %v3474 = vpop.permute.xlu0 %3473
        %3475 = vrot.lane.b32.xlu0 %v403, 96
        %v3476 = vpop.permute.xlu0 %3475
        %3477 = vrot.lane.b32.xlu0 %v409, 96
        %v3478 = vpop.permute.xlu0 %3477
        %vm3479 = vcmask 785408
        %v3480 = vsel %vm3479, %v3456, %v3458
        %v3481 = vsel %vm3479, %v3460, %v3462
        %v3482 = vsel %vm3479, %v3464, %v3466
        %v3483 = vsel %vm3479, %v3468, %v3470
        %v3484 = vsel %vm3479, %v3472, %v3474
        %v3485 = vsel %vm3479, %v3476, %v3478
        %v3492 = vsel %vm469, %v3450, 0
        %v3495 = vsel %vm469, %v3451, 0
        %v3498 = vsel %vm469, %v3452, 0
        %v3501 = vsel %vm469, %v3453, 0
        %v3504 = vsel %vm469, %v3454, 0
        %v3506 = vsel %vm485, %v3485, 0
        %3508 = vmatpush.msra.mxu0 0.0
        %3509 = vmatpush.msra.mxu0 0.0
        %3510 = vmatpush.msra.mxu0 0.0
        %3511 = vmatpush.msra.mxu0 0.0
        %3512 = vmatpush.msra.mxu0 0.0
        %3513 = vmatpush.msra.mxu0 0.0
        %3514 = vmatpush.msra.mxu0 0.0
        %3515 = vmatpush.msra.mxu0 0.0
        %3516 = vmatpush.msra.mxu0 0.0
        %3517 = vmatpush.msra.mxu0 0.0
        %3518 = vmatpush.msra.mxu0 %v3506
        %3519 = vmatpush.msra.mxu0 %v3484
        %3520 = vmatpush.msra.mxu0 %v3483
        %3521 = vmatpush.msra.mxu0 %v3482
        %3522 = vmatpush.msra.mxu0 %v3481
        %3523 = vmatpush.msra.mxu0 %v3480
        %3524 = vmatmul.f32.gmra.mxu0 %v3492
        %v3525 = vpop.f32.mrf.mxu0
        %v3526 = vadd.f32 0.0, %v3525
        %3527 = vmatmul.f32.gmra.mxu0 %v3495
        %v3528 = vpop.f32.mrf.mxu0
        %v3529 = vadd.f32 0.0, %v3528
        %3530 = vmatmul.f32.gmra.mxu0 %v3498
        %v3531 = vpop.f32.mrf.mxu0
        %v3532 = vadd.f32 0.0, %v3531
        %3533 = vmatmul.f32.gmra.mxu0 %v3501
        %v3534 = vpop.f32.mrf.mxu0
        %v3535 = vadd.f32 0.0, %v3534
        %3536 = vmatmul.f32.gmra.mxu0 %v3504
        %v3537 = vpop.f32.mrf.mxu0
        %v3538 = vadd.f32 0.0, %v3537
        %3539 = vdwg.mxu0
        %v3540 = vadd.f32 %v3444, %v3526
        %v3541 = vadd.f32 %v3445, %v3529
        %v3542 = vadd.f32 %v3446, %v3532
        %v3543 = vadd.f32 %v3447, %v3535
        %v3544 = vadd.f32 %v3448, %v3538
        %s3545 = scalar_lea.vmem %s2, 1320
        %v3546 = vld [vmem:[%s3545] sm:$0xff]
        %v3547 = vld [vmem:[%s3545 + $0x8] sm:$0xff]
        %v3548 = vld [vmem:[%s3545 + $0x10] sm:$0xff]
        %v3549 = vld [vmem:[%s3545 + $0x18] sm:$0xff]
        %v3550 = vld [vmem:[%s3545 + $0x20] sm:$0xff]
        %3551 = vrot.lane.b32.xlu0 %v398, 95
        %v3552 = vpop.permute.xlu0 %3551
        %3553 = vrot.lane.b32.xlu0 %v404, 95
        %v3554 = vpop.permute.xlu0 %3553
        %3555 = vrot.lane.b32.xlu0 %v399, 95
        %v3556 = vpop.permute.xlu0 %3555
        %3557 = vrot.lane.b32.xlu0 %v405, 95
        %v3558 = vpop.permute.xlu0 %3557
        %3559 = vrot.lane.b32.xlu0 %v400, 95
        %v3560 = vpop.permute.xlu0 %3559
        %3561 = vrot.lane.b32.xlu0 %v406, 95
        %v3562 = vpop.permute.xlu0 %3561
        %3563 = vrot.lane.b32.xlu0 %v401, 95
        %v3564 = vpop.permute.xlu0 %3563
        %3565 = vrot.lane.b32.xlu0 %v407, 95
        %v3566 = vpop.permute.xlu0 %3565
        %3567 = vrot.lane.b32.xlu0 %v402, 95
        %v3568 = vpop.permute.xlu0 %3567
        %3569 = vrot.lane.b32.xlu0 %v408, 95
        %v3570 = vpop.permute.xlu0 %3569
        %3571 = vrot.lane.b32.xlu0 %v403, 95
        %v3572 = vpop.permute.xlu0 %3571
        %3573 = vrot.lane.b32.xlu0 %v409, 95
        %v3574 = vpop.permute.xlu0 %3573
        %vm3575 = vcmask 777216
        %v3576 = vsel %vm3575, %v3552, %v3554
        %v3577 = vsel %vm3575, %v3556, %v3558
        %v3578 = vsel %vm3575, %v3560, %v3562
        %v3579 = vsel %vm3575, %v3564, %v3566
        %v3580 = vsel %vm3575, %v3568, %v3570
        %v3581 = vsel %vm3575, %v3572, %v3574
        %v3588 = vsel %vm469, %v3546, 0
        %v3591 = vsel %vm469, %v3547, 0
        %v3594 = vsel %vm469, %v3548, 0
        %v3597 = vsel %vm469, %v3549, 0
        %v3600 = vsel %vm469, %v3550, 0
        %v3602 = vsel %vm485, %v3581, 0
        %3604 = vmatpush.msra.mxu0 0.0
        %3605 = vmatpush.msra.mxu0 0.0
        %3606 = vmatpush.msra.mxu0 0.0
        %3607 = vmatpush.msra.mxu0 0.0
        %3608 = vmatpush.msra.mxu0 0.0
        %3609 = vmatpush.msra.mxu0 0.0
        %3610 = vmatpush.msra.mxu0 0.0
        %3611 = vmatpush.msra.mxu0 0.0
        %3612 = vmatpush.msra.mxu0 0.0
        %3613 = vmatpush.msra.mxu0 0.0
        %3614 = vmatpush.msra.mxu0 %v3602
        %3615 = vmatpush.msra.mxu0 %v3580
        %3616 = vmatpush.msra.mxu0 %v3579
        %3617 = vmatpush.msra.mxu0 %v3578
        %3618 = vmatpush.msra.mxu0 %v3577
        %3619 = vmatpush.msra.mxu0 %v3576
        %3620 = vmatmul.f32.gmra.mxu0 %v3588
        %v3621 = vpop.f32.mrf.mxu0
        %v3622 = vadd.f32 0.0, %v3621
        %3623 = vmatmul.f32.gmra.mxu0 %v3591
        %v3624 = vpop.f32.mrf.mxu0
        %v3625 = vadd.f32 0.0, %v3624
        %3626 = vmatmul.f32.gmra.mxu0 %v3594
        %v3627 = vpop.f32.mrf.mxu0
        %v3628 = vadd.f32 0.0, %v3627
        %3629 = vmatmul.f32.gmra.mxu0 %v3597
        %v3630 = vpop.f32.mrf.mxu0
        %v3631 = vadd.f32 0.0, %v3630
        %3632 = vmatmul.f32.gmra.mxu0 %v3600
        %v3633 = vpop.f32.mrf.mxu0
        %v3634 = vadd.f32 0.0, %v3633
        %3635 = vdwg.mxu0
        %v3636 = vadd.f32 %v3540, %v3622
        %v3637 = vadd.f32 %v3541, %v3625
        %v3638 = vadd.f32 %v3542, %v3628
        %v3639 = vadd.f32 %v3543, %v3631
        %v3640 = vadd.f32 %v3544, %v3634
        %s3641 = scalar_lea.vmem %s2, 1360
        %v3642 = vld [vmem:[%s3641] sm:$0xff]
        %v3643 = vld [vmem:[%s3641 + $0x8] sm:$0xff]
        %v3644 = vld [vmem:[%s3641 + $0x10] sm:$0xff]
        %v3645 = vld [vmem:[%s3641 + $0x18] sm:$0xff]
        %v3646 = vld [vmem:[%s3641 + $0x20] sm:$0xff]
        %3647 = vrot.lane.b32.xlu0 %v398, 94
        %v3648 = vpop.permute.xlu0 %3647
        %3649 = vrot.lane.b32.xlu0 %v404, 94
        %v3650 = vpop.permute.xlu0 %3649
        %3651 = vrot.lane.b32.xlu0 %v399, 94
        %v3652 = vpop.permute.xlu0 %3651
        %3653 = vrot.lane.b32.xlu0 %v405, 94
        %v3654 = vpop.permute.xlu0 %3653
        %3655 = vrot.lane.b32.xlu0 %v400, 94
        %v3656 = vpop.permute.xlu0 %3655
        %3657 = vrot.lane.b32.xlu0 %v406, 94
        %v3658 = vpop.permute.xlu0 %3657
        %3659 = vrot.lane.b32.xlu0 %v401, 94
        %v3660 = vpop.permute.xlu0 %3659
        %3661 = vrot.lane.b32.xlu0 %v407, 94
        %v3662 = vpop.permute.xlu0 %3661
        %3663 = vrot.lane.b32.xlu0 %v402, 94
        %v3664 = vpop.permute.xlu0 %3663
        %3665 = vrot.lane.b32.xlu0 %v408, 94
        %v3666 = vpop.permute.xlu0 %3665
        %3667 = vrot.lane.b32.xlu0 %v403, 94
        %v3668 = vpop.permute.xlu0 %3667
        %3669 = vrot.lane.b32.xlu0 %v409, 94
        %v3670 = vpop.permute.xlu0 %3669
        %vm3671 = vcmask 769024
        %v3672 = vsel %vm3671, %v3648, %v3650
        %v3673 = vsel %vm3671, %v3652, %v3654
        %v3674 = vsel %vm3671, %v3656, %v3658
        %v3675 = vsel %vm3671, %v3660, %v3662
        %v3676 = vsel %vm3671, %v3664, %v3666
        %v3677 = vsel %vm3671, %v3668, %v3670
        %v3684 = vsel %vm469, %v3642, 0
        %v3687 = vsel %vm469, %v3643, 0
        %v3690 = vsel %vm469, %v3644, 0
        %v3693 = vsel %vm469, %v3645, 0
        %v3696 = vsel %vm469, %v3646, 0
        %v3698 = vsel %vm485, %v3677, 0
        %3700 = vmatpush.msra.mxu0 0.0
        %3701 = vmatpush.msra.mxu0 0.0
        %3702 = vmatpush.msra.mxu0 0.0
        %3703 = vmatpush.msra.mxu0 0.0
        %3704 = vmatpush.msra.mxu0 0.0
        %3705 = vmatpush.msra.mxu0 0.0
        %3706 = vmatpush.msra.mxu0 0.0
        %3707 = vmatpush.msra.mxu0 0.0
        %3708 = vmatpush.msra.mxu0 0.0
        %3709 = vmatpush.msra.mxu0 0.0
        %3710 = vmatpush.msra.mxu0 %v3698
        %3711 = vmatpush.msra.mxu0 %v3676
        %3712 = vmatpush.msra.mxu0 %v3675
        %3713 = vmatpush.msra.mxu0 %v3674
        %3714 = vmatpush.msra.mxu0 %v3673
        %3715 = vmatpush.msra.mxu0 %v3672
        %3716 = vmatmul.f32.gmra.mxu0 %v3684
        %v3717 = vpop.f32.mrf.mxu0
        %v3718 = vadd.f32 0.0, %v3717
        %3719 = vmatmul.f32.gmra.mxu0 %v3687
        %v3720 = vpop.f32.mrf.mxu0
        %v3721 = vadd.f32 0.0, %v3720
        %3722 = vmatmul.f32.gmra.mxu0 %v3690
        %v3723 = vpop.f32.mrf.mxu0
        %v3724 = vadd.f32 0.0, %v3723
        %3725 = vmatmul.f32.gmra.mxu0 %v3693
        %v3726 = vpop.f32.mrf.mxu0
        %v3727 = vadd.f32 0.0, %v3726
        %3728 = vmatmul.f32.gmra.mxu0 %v3696
        %v3729 = vpop.f32.mrf.mxu0
        %v3730 = vadd.f32 0.0, %v3729
        %3731 = vdwg.mxu0
        %v3732 = vadd.f32 %v3636, %v3718
        %v3733 = vadd.f32 %v3637, %v3721
        %v3734 = vadd.f32 %v3638, %v3724
        %v3735 = vadd.f32 %v3639, %v3727
        %v3736 = vadd.f32 %v3640, %v3730
        %s3737 = scalar_lea.vmem %s2, 1400
        %v3738 = vld [vmem:[%s3737] sm:$0xff]
        %v3739 = vld [vmem:[%s3737 + $0x8] sm:$0xff]
        %v3740 = vld [vmem:[%s3737 + $0x10] sm:$0xff]
        %v3741 = vld [vmem:[%s3737 + $0x18] sm:$0xff]
        %v3742 = vld [vmem:[%s3737 + $0x20] sm:$0xff]
        %3743 = vrot.lane.b32.xlu0 %v398, 93
        %v3744 = vpop.permute.xlu0 %3743
        %3745 = vrot.lane.b32.xlu0 %v404, 93
        %v3746 = vpop.permute.xlu0 %3745
        %3747 = vrot.lane.b32.xlu0 %v399, 93
        %v3748 = vpop.permute.xlu0 %3747
        %3749 = vrot.lane.b32.xlu0 %v405, 93
        %v3750 = vpop.permute.xlu0 %3749
        %3751 = vrot.lane.b32.xlu0 %v400, 93
        %v3752 = vpop.permute.xlu0 %3751
        %3753 = vrot.lane.b32.xlu0 %v406, 93
        %v3754 = vpop.permute.xlu0 %3753
        %3755 = vrot.lane.b32.xlu0 %v401, 93
        %v3756 = vpop.permute.xlu0 %3755
        %3757 = vrot.lane.b32.xlu0 %v407, 93
        %v3758 = vpop.permute.xlu0 %3757
        %3759 = vrot.lane.b32.xlu0 %v402, 93
        %v3760 = vpop.permute.xlu0 %3759
        %3761 = vrot.lane.b32.xlu0 %v408, 93
        %v3762 = vpop.permute.xlu0 %3761
        %3763 = vrot.lane.b32.xlu0 %v403, 93
        %v3764 = vpop.permute.xlu0 %3763
        %3765 = vrot.lane.b32.xlu0 %v409, 93
        %v3766 = vpop.permute.xlu0 %3765
        %vm3767 = vcmask 760832
        %v3768 = vsel %vm3767, %v3744, %v3746
        %v3769 = vsel %vm3767, %v3748, %v3750
        %v3770 = vsel %vm3767, %v3752, %v3754
        %v3771 = vsel %vm3767, %v3756, %v3758
        %v3772 = vsel %vm3767, %v3760, %v3762
        %v3773 = vsel %vm3767, %v3764, %v3766
        %v3780 = vsel %vm469, %v3738, 0
        %v3783 = vsel %vm469, %v3739, 0
        %v3786 = vsel %vm469, %v3740, 0
        %v3789 = vsel %vm469, %v3741, 0
        %v3792 = vsel %vm469, %v3742, 0
        %v3794 = vsel %vm485, %v3773, 0
        %3796 = vmatpush.msra.mxu0 0.0
        %3797 = vmatpush.msra.mxu0 0.0
        %3798 = vmatpush.msra.mxu0 0.0
        %3799 = vmatpush.msra.mxu0 0.0
        %3800 = vmatpush.msra.mxu0 0.0
        %3801 = vmatpush.msra.mxu0 0.0
        %3802 = vmatpush.msra.mxu0 0.0
        %3803 = vmatpush.msra.mxu0 0.0
        %3804 = vmatpush.msra.mxu0 0.0
        %3805 = vmatpush.msra.mxu0 0.0
        %3806 = vmatpush.msra.mxu0 %v3794
        %3807 = vmatpush.msra.mxu0 %v3772
        %3808 = vmatpush.msra.mxu0 %v3771
        %3809 = vmatpush.msra.mxu0 %v3770
        %3810 = vmatpush.msra.mxu0 %v3769
        %3811 = vmatpush.msra.mxu0 %v3768
        %3812 = vmatmul.f32.gmra.mxu0 %v3780
        %v3813 = vpop.f32.mrf.mxu0
        %v3814 = vadd.f32 0.0, %v3813
        %3815 = vmatmul.f32.gmra.mxu0 %v3783
        %v3816 = vpop.f32.mrf.mxu0
        %v3817 = vadd.f32 0.0, %v3816
        %3818 = vmatmul.f32.gmra.mxu0 %v3786
        %v3819 = vpop.f32.mrf.mxu0
        %v3820 = vadd.f32 0.0, %v3819
        %3821 = vmatmul.f32.gmra.mxu0 %v3789
        %v3822 = vpop.f32.mrf.mxu0
        %v3823 = vadd.f32 0.0, %v3822
        %3824 = vmatmul.f32.gmra.mxu0 %v3792
        %v3825 = vpop.f32.mrf.mxu0
        %v3826 = vadd.f32 0.0, %v3825
        %3827 = vdwg.mxu0
        %v3828 = vadd.f32 %v3732, %v3814
        %v3829 = vadd.f32 %v3733, %v3817
        %v3830 = vadd.f32 %v3734, %v3820
        %v3831 = vadd.f32 %v3735, %v3823
        %v3832 = vadd.f32 %v3736, %v3826
        %s3833 = scalar_lea.vmem %s2, 1440
        %v3834 = vld [vmem:[%s3833] sm:$0xff]
        %v3835 = vld [vmem:[%s3833 + $0x8] sm:$0xff]
        %v3836 = vld [vmem:[%s3833 + $0x10] sm:$0xff]
        %v3837 = vld [vmem:[%s3833 + $0x18] sm:$0xff]
        %v3838 = vld [vmem:[%s3833 + $0x20] sm:$0xff]
        %3839 = vrot.lane.b32.xlu0 %v398, 92
        %v3840 = vpop.permute.xlu0 %3839
        %3841 = vrot.lane.b32.xlu0 %v404, 92
        %v3842 = vpop.permute.xlu0 %3841
        %3843 = vrot.lane.b32.xlu0 %v399, 92
        %v3844 = vpop.permute.xlu0 %3843
        %3845 = vrot.lane.b32.xlu0 %v405, 92
        %v3846 = vpop.permute.xlu0 %3845
        %3847 = vrot.lane.b32.xlu0 %v400, 92
        %v3848 = vpop.permute.xlu0 %3847
        %3849 = vrot.lane.b32.xlu0 %v406, 92
        %v3850 = vpop.permute.xlu0 %3849
        %3851 = vrot.lane.b32.xlu0 %v401, 92
        %v3852 = vpop.permute.xlu0 %3851
        %3853 = vrot.lane.b32.xlu0 %v407, 92
        %v3854 = vpop.permute.xlu0 %3853
        %3855 = vrot.lane.b32.xlu0 %v402, 92
        %v3856 = vpop.permute.xlu0 %3855
        %3857 = vrot.lane.b32.xlu0 %v408, 92
        %v3858 = vpop.permute.xlu0 %3857
        %3859 = vrot.lane.b32.xlu0 %v403, 92
        %v3860 = vpop.permute.xlu0 %3859
        %3861 = vrot.lane.b32.xlu0 %v409, 92
        %v3862 = vpop.permute.xlu0 %3861
        %vm3863 = vcmask 752640
        %v3864 = vsel %vm3863, %v3840, %v3842
        %v3865 = vsel %vm3863, %v3844, %v3846
        %v3866 = vsel %vm3863, %v3848, %v3850
        %v3867 = vsel %vm3863, %v3852, %v3854
        %v3868 = vsel %vm3863, %v3856, %v3858
        %v3869 = vsel %vm3863, %v3860, %v3862
        %v3876 = vsel %vm469, %v3834, 0
        %v3879 = vsel %vm469, %v3835, 0
        %v3882 = vsel %vm469, %v3836, 0
        %v3885 = vsel %vm469, %v3837, 0
        %v3888 = vsel %vm469, %v3838, 0
        %v3890 = vsel %vm485, %v3869, 0
        %3892 = vmatpush.msra.mxu0 0.0
        %3893 = vmatpush.msra.mxu0 0.0
        %3894 = vmatpush.msra.mxu0 0.0
        %3895 = vmatpush.msra.mxu0 0.0
        %3896 = vmatpush.msra.mxu0 0.0
        %3897 = vmatpush.msra.mxu0 0.0
        %3898 = vmatpush.msra.mxu0 0.0
        %3899 = vmatpush.msra.mxu0 0.0
        %3900 = vmatpush.msra.mxu0 0.0
        %3901 = vmatpush.msra.mxu0 0.0
        %3902 = vmatpush.msra.mxu0 %v3890
        %3903 = vmatpush.msra.mxu0 %v3868
        %3904 = vmatpush.msra.mxu0 %v3867
        %3905 = vmatpush.msra.mxu0 %v3866
        %3906 = vmatpush.msra.mxu0 %v3865
        %3907 = vmatpush.msra.mxu0 %v3864
        %3908 = vmatmul.f32.gmra.mxu0 %v3876
        %v3909 = vpop.f32.mrf.mxu0
        %v3910 = vadd.f32 0.0, %v3909
        %3911 = vmatmul.f32.gmra.mxu0 %v3879
        %v3912 = vpop.f32.mrf.mxu0
        %v3913 = vadd.f32 0.0, %v3912
        %3914 = vmatmul.f32.gmra.mxu0 %v3882
        %v3915 = vpop.f32.mrf.mxu0
        %v3916 = vadd.f32 0.0, %v3915
        %3917 = vmatmul.f32.gmra.mxu0 %v3885
        %v3918 = vpop.f32.mrf.mxu0
        %v3919 = vadd.f32 0.0, %v3918
        %3920 = vmatmul.f32.gmra.mxu0 %v3888
        %v3921 = vpop.f32.mrf.mxu0
        %v3922 = vadd.f32 0.0, %v3921
        %3923 = vdwg.mxu0
        %v3924 = vadd.f32 %v3828, %v3910
        %v3925 = vadd.f32 %v3829, %v3913
        %v3926 = vadd.f32 %v3830, %v3916
        %v3927 = vadd.f32 %v3831, %v3919
        %v3928 = vadd.f32 %v3832, %v3922
        %s3929 = scalar_lea.vmem %s2, 1480
        %v3930 = vld [vmem:[%s3929] sm:$0xff]
        %v3931 = vld [vmem:[%s3929 + $0x8] sm:$0xff]
        %v3932 = vld [vmem:[%s3929 + $0x10] sm:$0xff]
        %v3933 = vld [vmem:[%s3929 + $0x18] sm:$0xff]
        %v3934 = vld [vmem:[%s3929 + $0x20] sm:$0xff]
        %3935 = vrot.lane.b32.xlu0 %v398, 91
        %v3936 = vpop.permute.xlu0 %3935
        %3937 = vrot.lane.b32.xlu0 %v404, 91
        %v3938 = vpop.permute.xlu0 %3937
        %3939 = vrot.lane.b32.xlu0 %v399, 91
        %v3940 = vpop.permute.xlu0 %3939
        %3941 = vrot.lane.b32.xlu0 %v405, 91
        %v3942 = vpop.permute.xlu0 %3941
        %3943 = vrot.lane.b32.xlu0 %v400, 91
        %v3944 = vpop.permute.xlu0 %3943
        %3945 = vrot.lane.b32.xlu0 %v406, 91
        %v3946 = vpop.permute.xlu0 %3945
        %3947 = vrot.lane.b32.xlu0 %v401, 91
        %v3948 = vpop.permute.xlu0 %3947
        %3949 = vrot.lane.b32.xlu0 %v407, 91
        %v3950 = vpop.permute.xlu0 %3949
        %3951 = vrot.lane.b32.xlu0 %v402, 91
        %v3952 = vpop.permute.xlu0 %3951
        %3953 = vrot.lane.b32.xlu0 %v408, 91
        %v3954 = vpop.permute.xlu0 %3953
        %3955 = vrot.lane.b32.xlu0 %v403, 91
        %v3956 = vpop.permute.xlu0 %3955
        %3957 = vrot.lane.b32.xlu0 %v409, 91
        %v3958 = vpop.permute.xlu0 %3957
        %vm3959 = vcmask 744448
        %v3960 = vsel %vm3959, %v3936, %v3938
        %v3961 = vsel %vm3959, %v3940, %v3942
        %v3962 = vsel %vm3959, %v3944, %v3946
        %v3963 = vsel %vm3959, %v3948, %v3950
        %v3964 = vsel %vm3959, %v3952, %v3954
        %v3965 = vsel %vm3959, %v3956, %v3958
        %v3972 = vsel %vm469, %v3930, 0
        %v3975 = vsel %vm469, %v3931, 0
        %v3978 = vsel %vm469, %v3932, 0
        %v3981 = vsel %vm469, %v3933, 0
        %v3984 = vsel %vm469, %v3934, 0
        %v3986 = vsel %vm485, %v3965, 0
        %3988 = vmatpush.msra.mxu0 0.0
        %3989 = vmatpush.msra.mxu0 0.0
        %3990 = vmatpush.msra.mxu0 0.0
        %3991 = vmatpush.msra.mxu0 0.0
        %3992 = vmatpush.msra.mxu0 0.0
        %3993 = vmatpush.msra.mxu0 0.0
        %3994 = vmatpush.msra.mxu0 0.0
        %3995 = vmatpush.msra.mxu0 0.0
        %3996 = vmatpush.msra.mxu0 0.0
        %3997 = vmatpush.msra.mxu0 0.0
        %3998 = vmatpush.msra.mxu0 %v3986
        %3999 = vmatpush.msra.mxu0 %v3964
        %4000 = vmatpush.msra.mxu0 %v3963
        %4001 = vmatpush.msra.mxu0 %v3962
        %4002 = vmatpush.msra.mxu0 %v3961
        %4003 = vmatpush.msra.mxu0 %v3960
        %4004 = vmatmul.f32.gmra.mxu0 %v3972
        %v4005 = vpop.f32.mrf.mxu0
        %v4006 = vadd.f32 0.0, %v4005
        %4007 = vmatmul.f32.gmra.mxu0 %v3975
        %v4008 = vpop.f32.mrf.mxu0
        %v4009 = vadd.f32 0.0, %v4008
        %4010 = vmatmul.f32.gmra.mxu0 %v3978
        %v4011 = vpop.f32.mrf.mxu0
        %v4012 = vadd.f32 0.0, %v4011
        %4013 = vmatmul.f32.gmra.mxu0 %v3981
        %v4014 = vpop.f32.mrf.mxu0
        %v4015 = vadd.f32 0.0, %v4014
        %4016 = vmatmul.f32.gmra.mxu0 %v3984
        %v4017 = vpop.f32.mrf.mxu0
        %v4018 = vadd.f32 0.0, %v4017
        %4019 = vdwg.mxu0
        %v4020 = vadd.f32 %v3924, %v4006
        %v4021 = vadd.f32 %v3925, %v4009
        %v4022 = vadd.f32 %v3926, %v4012
        %v4023 = vadd.f32 %v3927, %v4015
        %v4024 = vadd.f32 %v3928, %v4018
        %s4025 = scalar_lea.vmem %s2, 1520
        %v4026 = vld [vmem:[%s4025] sm:$0xff]
        %v4027 = vld [vmem:[%s4025 + $0x8] sm:$0xff]
        %v4028 = vld [vmem:[%s4025 + $0x10] sm:$0xff]
        %v4029 = vld [vmem:[%s4025 + $0x18] sm:$0xff]
        %v4030 = vld [vmem:[%s4025 + $0x20] sm:$0xff]
        %4031 = vrot.lane.b32.xlu0 %v398, 90
        %v4032 = vpop.permute.xlu0 %4031
        %4033 = vrot.lane.b32.xlu0 %v404, 90
        %v4034 = vpop.permute.xlu0 %4033
        %4035 = vrot.lane.b32.xlu0 %v399, 90
        %v4036 = vpop.permute.xlu0 %4035
        %4037 = vrot.lane.b32.xlu0 %v405, 90
        %v4038 = vpop.permute.xlu0 %4037
        %4039 = vrot.lane.b32.xlu0 %v400, 90
        %v4040 = vpop.permute.xlu0 %4039
        %4041 = vrot.lane.b32.xlu0 %v406, 90
        %v4042 = vpop.permute.xlu0 %4041
        %4043 = vrot.lane.b32.xlu0 %v401, 90
        %v4044 = vpop.permute.xlu0 %4043
        %4045 = vrot.lane.b32.xlu0 %v407, 90
        %v4046 = vpop.permute.xlu0 %4045
        %4047 = vrot.lane.b32.xlu0 %v402, 90
        %v4048 = vpop.permute.xlu0 %4047
        %4049 = vrot.lane.b32.xlu0 %v408, 90
        %v4050 = vpop.permute.xlu0 %4049
        %4051 = vrot.lane.b32.xlu0 %v403, 90
        %v4052 = vpop.permute.xlu0 %4051
        %4053 = vrot.lane.b32.xlu0 %v409, 90
        %v4054 = vpop.permute.xlu0 %4053
        %vm4055 = vcmask 736256
        %v4056 = vsel %vm4055, %v4032, %v4034
        %v4057 = vsel %vm4055, %v4036, %v4038
        %v4058 = vsel %vm4055, %v4040, %v4042
        %v4059 = vsel %vm4055, %v4044, %v4046
        %v4060 = vsel %vm4055, %v4048, %v4050
        %v4061 = vsel %vm4055, %v4052, %v4054
        %v4068 = vsel %vm469, %v4026, 0
        %v4071 = vsel %vm469, %v4027, 0
        %v4074 = vsel %vm469, %v4028, 0
        %v4077 = vsel %vm469, %v4029, 0
        %v4080 = vsel %vm469, %v4030, 0
        %v4082 = vsel %vm485, %v4061, 0
        %4084 = vmatpush.msra.mxu0 0.0
        %4085 = vmatpush.msra.mxu0 0.0
        %4086 = vmatpush.msra.mxu0 0.0
        %4087 = vmatpush.msra.mxu0 0.0
        %4088 = vmatpush.msra.mxu0 0.0
        %4089 = vmatpush.msra.mxu0 0.0
        %4090 = vmatpush.msra.mxu0 0.0
        %4091 = vmatpush.msra.mxu0 0.0
        %4092 = vmatpush.msra.mxu0 0.0
        %4093 = vmatpush.msra.mxu0 0.0
        %4094 = vmatpush.msra.mxu0 %v4082
        %4095 = vmatpush.msra.mxu0 %v4060
        %4096 = vmatpush.msra.mxu0 %v4059
        %4097 = vmatpush.msra.mxu0 %v4058
        %4098 = vmatpush.msra.mxu0 %v4057
        %4099 = vmatpush.msra.mxu0 %v4056
        %4100 = vmatmul.f32.gmra.mxu0 %v4068
        %v4101 = vpop.f32.mrf.mxu0
        %v4102 = vadd.f32 0.0, %v4101
        %4103 = vmatmul.f32.gmra.mxu0 %v4071
        %v4104 = vpop.f32.mrf.mxu0
        %v4105 = vadd.f32 0.0, %v4104
        %4106 = vmatmul.f32.gmra.mxu0 %v4074
        %v4107 = vpop.f32.mrf.mxu0
        %v4108 = vadd.f32 0.0, %v4107
        %4109 = vmatmul.f32.gmra.mxu0 %v4077
        %v4110 = vpop.f32.mrf.mxu0
        %v4111 = vadd.f32 0.0, %v4110
        %4112 = vmatmul.f32.gmra.mxu0 %v4080
        %v4113 = vpop.f32.mrf.mxu0
        %v4114 = vadd.f32 0.0, %v4113
        %4115 = vdwg.mxu0
        %v4116 = vadd.f32 %v4020, %v4102
        %v4117 = vadd.f32 %v4021, %v4105
        %v4118 = vadd.f32 %v4022, %v4108
        %v4119 = vadd.f32 %v4023, %v4111
        %v4120 = vadd.f32 %v4024, %v4114
        %s4121 = scalar_lea.vmem %s2, 1560
        %v4122 = vld [vmem:[%s4121] sm:$0xff]
        %v4123 = vld [vmem:[%s4121 + $0x8] sm:$0xff]
        %v4124 = vld [vmem:[%s4121 + $0x10] sm:$0xff]
        %v4125 = vld [vmem:[%s4121 + $0x18] sm:$0xff]
        %v4126 = vld [vmem:[%s4121 + $0x20] sm:$0xff]
        %4127 = vrot.lane.b32.xlu0 %v398, 89
        %v4128 = vpop.permute.xlu0 %4127
        %4129 = vrot.lane.b32.xlu0 %v404, 89
        %v4130 = vpop.permute.xlu0 %4129
        %4131 = vrot.lane.b32.xlu0 %v399, 89
        %v4132 = vpop.permute.xlu0 %4131
        %4133 = vrot.lane.b32.xlu0 %v405, 89
        %v4134 = vpop.permute.xlu0 %4133
        %4135 = vrot.lane.b32.xlu0 %v400, 89
        %v4136 = vpop.permute.xlu0 %4135
        %4137 = vrot.lane.b32.xlu0 %v406, 89
        %v4138 = vpop.permute.xlu0 %4137
        %4139 = vrot.lane.b32.xlu0 %v401, 89
        %v4140 = vpop.permute.xlu0 %4139
        %4141 = vrot.lane.b32.xlu0 %v407, 89
        %v4142 = vpop.permute.xlu0 %4141
        %4143 = vrot.lane.b32.xlu0 %v402, 89
        %v4144 = vpop.permute.xlu0 %4143
        %4145 = vrot.lane.b32.xlu0 %v408, 89
        %v4146 = vpop.permute.xlu0 %4145
        %4147 = vrot.lane.b32.xlu0 %v403, 89
        %v4148 = vpop.permute.xlu0 %4147
        %4149 = vrot.lane.b32.xlu0 %v409, 89
        %v4150 = vpop.permute.xlu0 %4149
        %vm4151 = vcmask 728064
        %v4152 = vsel %vm4151, %v4128, %v4130
        %v4153 = vsel %vm4151, %v4132, %v4134
        %v4154 = vsel %vm4151, %v4136, %v4138
        %v4155 = vsel %vm4151, %v4140, %v4142
        %v4156 = vsel %vm4151, %v4144, %v4146
        %v4157 = vsel %vm4151, %v4148, %v4150
        %v4164 = vsel %vm469, %v4122, 0
        %v4167 = vsel %vm469, %v4123, 0
        %v4170 = vsel %vm469, %v4124, 0
        %v4173 = vsel %vm469, %v4125, 0
        %v4176 = vsel %vm469, %v4126, 0
        %v4178 = vsel %vm485, %v4157, 0
        %4180 = vmatpush.msra.mxu0 0.0
        %4181 = vmatpush.msra.mxu0 0.0
        %4182 = vmatpush.msra.mxu0 0.0
        %4183 = vmatpush.msra.mxu0 0.0
        %4184 = vmatpush.msra.mxu0 0.0
        %4185 = vmatpush.msra.mxu0 0.0
        %4186 = vmatpush.msra.mxu0 0.0
        %4187 = vmatpush.msra.mxu0 0.0
        %4188 = vmatpush.msra.mxu0 0.0
        %4189 = vmatpush.msra.mxu0 0.0
        %4190 = vmatpush.msra.mxu0 %v4178
        %4191 = vmatpush.msra.mxu0 %v4156
        %4192 = vmatpush.msra.mxu0 %v4155
        %4193 = vmatpush.msra.mxu0 %v4154
        %4194 = vmatpush.msra.mxu0 %v4153
        %4195 = vmatpush.msra.mxu0 %v4152
        %4196 = vmatmul.f32.gmra.mxu0 %v4164
        %v4197 = vpop.f32.mrf.mxu0
        %v4198 = vadd.f32 0.0, %v4197
        %4199 = vmatmul.f32.gmra.mxu0 %v4167
        %v4200 = vpop.f32.mrf.mxu0
        %v4201 = vadd.f32 0.0, %v4200
        %4202 = vmatmul.f32.gmra.mxu0 %v4170
        %v4203 = vpop.f32.mrf.mxu0
        %v4204 = vadd.f32 0.0, %v4203
        %4205 = vmatmul.f32.gmra.mxu0 %v4173
        %v4206 = vpop.f32.mrf.mxu0
        %v4207 = vadd.f32 0.0, %v4206
        %4208 = vmatmul.f32.gmra.mxu0 %v4176
        %v4209 = vpop.f32.mrf.mxu0
        %v4210 = vadd.f32 0.0, %v4209
        %4211 = vdwg.mxu0
        %v4212 = vadd.f32 %v4116, %v4198
        %v4213 = vadd.f32 %v4117, %v4201
        %v4214 = vadd.f32 %v4118, %v4204
        %v4215 = vadd.f32 %v4119, %v4207
        %v4216 = vadd.f32 %v4120, %v4210
        %s4217 = scalar_lea.vmem %s2, 1600
        %v4218 = vld [vmem:[%s4217] sm:$0xff]
        %v4219 = vld [vmem:[%s4217 + $0x8] sm:$0xff]
        %v4220 = vld [vmem:[%s4217 + $0x10] sm:$0xff]
        %v4221 = vld [vmem:[%s4217 + $0x18] sm:$0xff]
        %v4222 = vld [vmem:[%s4217 + $0x20] sm:$0xff]
        %4223 = vrot.lane.b32.xlu0 %v398, 88
        %v4224 = vpop.permute.xlu0 %4223
        %4225 = vrot.lane.b32.xlu0 %v404, 88
        %v4226 = vpop.permute.xlu0 %4225
        %4227 = vrot.lane.b32.xlu0 %v399, 88
        %v4228 = vpop.permute.xlu0 %4227
        %4229 = vrot.lane.b32.xlu0 %v405, 88
        %v4230 = vpop.permute.xlu0 %4229
        %4231 = vrot.lane.b32.xlu0 %v400, 88
        %v4232 = vpop.permute.xlu0 %4231
        %4233 = vrot.lane.b32.xlu0 %v406, 88
        %v4234 = vpop.permute.xlu0 %4233
        %4235 = vrot.lane.b32.xlu0 %v401, 88
        %v4236 = vpop.permute.xlu0 %4235
        %4237 = vrot.lane.b32.xlu0 %v407, 88
        %v4238 = vpop.permute.xlu0 %4237
        %4239 = vrot.lane.b32.xlu0 %v402, 88
        %v4240 = vpop.permute.xlu0 %4239
        %4241 = vrot.lane.b32.xlu0 %v408, 88
        %v4242 = vpop.permute.xlu0 %4241
        %4243 = vrot.lane.b32.xlu0 %v403, 88
        %v4244 = vpop.permute.xlu0 %4243
        %4245 = vrot.lane.b32.xlu0 %v409, 88
        %v4246 = vpop.permute.xlu0 %4245
        %vm4247 = vcmask 719872
        %v4248 = vsel %vm4247, %v4224, %v4226
        %v4249 = vsel %vm4247, %v4228, %v4230
        %v4250 = vsel %vm4247, %v4232, %v4234
        %v4251 = vsel %vm4247, %v4236, %v4238
        %v4252 = vsel %vm4247, %v4240, %v4242
        %v4253 = vsel %vm4247, %v4244, %v4246
        %v4260 = vsel %vm469, %v4218, 0
        %v4263 = vsel %vm469, %v4219, 0
        %v4266 = vsel %vm469, %v4220, 0
        %v4269 = vsel %vm469, %v4221, 0
        %v4272 = vsel %vm469, %v4222, 0
        %v4274 = vsel %vm485, %v4253, 0
        %4276 = vmatpush.msra.mxu0 0.0
        %4277 = vmatpush.msra.mxu0 0.0
        %4278 = vmatpush.msra.mxu0 0.0
        %4279 = vmatpush.msra.mxu0 0.0
        %4280 = vmatpush.msra.mxu0 0.0
        %4281 = vmatpush.msra.mxu0 0.0
        %4282 = vmatpush.msra.mxu0 0.0
        %4283 = vmatpush.msra.mxu0 0.0
        %4284 = vmatpush.msra.mxu0 0.0
        %4285 = vmatpush.msra.mxu0 0.0
        %4286 = vmatpush.msra.mxu0 %v4274
        %4287 = vmatpush.msra.mxu0 %v4252
        %4288 = vmatpush.msra.mxu0 %v4251
        %4289 = vmatpush.msra.mxu0 %v4250
        %4290 = vmatpush.msra.mxu0 %v4249
        %4291 = vmatpush.msra.mxu0 %v4248
        %4292 = vmatmul.f32.gmra.mxu0 %v4260
        %v4293 = vpop.f32.mrf.mxu0
        %v4294 = vadd.f32 0.0, %v4293
        %4295 = vmatmul.f32.gmra.mxu0 %v4263
        %v4296 = vpop.f32.mrf.mxu0
        %v4297 = vadd.f32 0.0, %v4296
        %4298 = vmatmul.f32.gmra.mxu0 %v4266
        %v4299 = vpop.f32.mrf.mxu0
        %v4300 = vadd.f32 0.0, %v4299
        %4301 = vmatmul.f32.gmra.mxu0 %v4269
        %v4302 = vpop.f32.mrf.mxu0
        %v4303 = vadd.f32 0.0, %v4302
        %4304 = vmatmul.f32.gmra.mxu0 %v4272
        %v4305 = vpop.f32.mrf.mxu0
        %v4306 = vadd.f32 0.0, %v4305
        %4307 = vdwg.mxu0
        %v4308 = vadd.f32 %v4212, %v4294
        %v4309 = vadd.f32 %v4213, %v4297
        %v4310 = vadd.f32 %v4214, %v4300
        %v4311 = vadd.f32 %v4215, %v4303
        %v4312 = vadd.f32 %v4216, %v4306
        %s4313 = scalar_lea.vmem %s2, 1640
        %v4314 = vld [vmem:[%s4313] sm:$0xff]
        %v4315 = vld [vmem:[%s4313 + $0x8] sm:$0xff]
        %v4316 = vld [vmem:[%s4313 + $0x10] sm:$0xff]
        %v4317 = vld [vmem:[%s4313 + $0x18] sm:$0xff]
        %v4318 = vld [vmem:[%s4313 + $0x20] sm:$0xff]
        %4319 = vrot.lane.b32.xlu0 %v398, 87
        %v4320 = vpop.permute.xlu0 %4319
        %4321 = vrot.lane.b32.xlu0 %v404, 87
        %v4322 = vpop.permute.xlu0 %4321
        %4323 = vrot.lane.b32.xlu0 %v399, 87
        %v4324 = vpop.permute.xlu0 %4323
        %4325 = vrot.lane.b32.xlu0 %v405, 87
        %v4326 = vpop.permute.xlu0 %4325
        %4327 = vrot.lane.b32.xlu0 %v400, 87
        %v4328 = vpop.permute.xlu0 %4327
        %4329 = vrot.lane.b32.xlu0 %v406, 87
        %v4330 = vpop.permute.xlu0 %4329
        %4331 = vrot.lane.b32.xlu0 %v401, 87
        %v4332 = vpop.permute.xlu0 %4331
        %4333 = vrot.lane.b32.xlu0 %v407, 87
        %v4334 = vpop.permute.xlu0 %4333
        %4335 = vrot.lane.b32.xlu0 %v402, 87
        %v4336 = vpop.permute.xlu0 %4335
        %4337 = vrot.lane.b32.xlu0 %v408, 87
        %v4338 = vpop.permute.xlu0 %4337
        %4339 = vrot.lane.b32.xlu0 %v403, 87
        %v4340 = vpop.permute.xlu0 %4339
        %4341 = vrot.lane.b32.xlu0 %v409, 87
        %v4342 = vpop.permute.xlu0 %4341
        %vm4343 = vcmask 711680
        %v4344 = vsel %vm4343, %v4320, %v4322
        %v4345 = vsel %vm4343, %v4324, %v4326
        %v4346 = vsel %vm4343, %v4328, %v4330
        %v4347 = vsel %vm4343, %v4332, %v4334
        %v4348 = vsel %vm4343, %v4336, %v4338
        %v4349 = vsel %vm4343, %v4340, %v4342
        %v4356 = vsel %vm469, %v4314, 0
        %v4359 = vsel %vm469, %v4315, 0
        %v4362 = vsel %vm469, %v4316, 0
        %v4365 = vsel %vm469, %v4317, 0
        %v4368 = vsel %vm469, %v4318, 0
        %v4370 = vsel %vm485, %v4349, 0
        %4372 = vmatpush.msra.mxu0 0.0
        %4373 = vmatpush.msra.mxu0 0.0
        %4374 = vmatpush.msra.mxu0 0.0
        %4375 = vmatpush.msra.mxu0 0.0
        %4376 = vmatpush.msra.mxu0 0.0
        %4377 = vmatpush.msra.mxu0 0.0
        %4378 = vmatpush.msra.mxu0 0.0
        %4379 = vmatpush.msra.mxu0 0.0
        %4380 = vmatpush.msra.mxu0 0.0
        %4381 = vmatpush.msra.mxu0 0.0
        %4382 = vmatpush.msra.mxu0 %v4370
        %4383 = vmatpush.msra.mxu0 %v4348
        %4384 = vmatpush.msra.mxu0 %v4347
        %4385 = vmatpush.msra.mxu0 %v4346
        %4386 = vmatpush.msra.mxu0 %v4345
        %4387 = vmatpush.msra.mxu0 %v4344
        %4388 = vmatmul.f32.gmra.mxu0 %v4356
        %v4389 = vpop.f32.mrf.mxu0
        %v4390 = vadd.f32 0.0, %v4389
        %4391 = vmatmul.f32.gmra.mxu0 %v4359
        %v4392 = vpop.f32.mrf.mxu0
        %v4393 = vadd.f32 0.0, %v4392
        %4394 = vmatmul.f32.gmra.mxu0 %v4362
        %v4395 = vpop.f32.mrf.mxu0
        %v4396 = vadd.f32 0.0, %v4395
        %4397 = vmatmul.f32.gmra.mxu0 %v4365
        %v4398 = vpop.f32.mrf.mxu0
        %v4399 = vadd.f32 0.0, %v4398
        %4400 = vmatmul.f32.gmra.mxu0 %v4368
        %v4401 = vpop.f32.mrf.mxu0
        %v4402 = vadd.f32 0.0, %v4401
        %4403 = vdwg.mxu0
        %v4404 = vadd.f32 %v4308, %v4390
        %v4405 = vadd.f32 %v4309, %v4393
        %v4406 = vadd.f32 %v4310, %v4396
        %v4407 = vadd.f32 %v4311, %v4399
        %v4408 = vadd.f32 %v4312, %v4402
        %s4409 = scalar_lea.vmem %s2, 1680
        %v4410 = vld [vmem:[%s4409] sm:$0xff]
        %v4411 = vld [vmem:[%s4409 + $0x8] sm:$0xff]
        %v4412 = vld [vmem:[%s4409 + $0x10] sm:$0xff]
        %v4413 = vld [vmem:[%s4409 + $0x18] sm:$0xff]
        %v4414 = vld [vmem:[%s4409 + $0x20] sm:$0xff]
        %4415 = vrot.lane.b32.xlu0 %v398, 86
        %v4416 = vpop.permute.xlu0 %4415
        %4417 = vrot.lane.b32.xlu0 %v404, 86
        %v4418 = vpop.permute.xlu0 %4417
        %4419 = vrot.lane.b32.xlu0 %v399, 86
        %v4420 = vpop.permute.xlu0 %4419
        %4421 = vrot.lane.b32.xlu0 %v405, 86
        %v4422 = vpop.permute.xlu0 %4421
        %4423 = vrot.lane.b32.xlu0 %v400, 86
        %v4424 = vpop.permute.xlu0 %4423
        %4425 = vrot.lane.b32.xlu0 %v406, 86
        %v4426 = vpop.permute.xlu0 %4425
        %4427 = vrot.lane.b32.xlu0 %v401, 86
        %v4428 = vpop.permute.xlu0 %4427
        %4429 = vrot.lane.b32.xlu0 %v407, 86
        %v4430 = vpop.permute.xlu0 %4429
        %4431 = vrot.lane.b32.xlu0 %v402, 86
        %v4432 = vpop.permute.xlu0 %4431
        %4433 = vrot.lane.b32.xlu0 %v408, 86
        %v4434 = vpop.permute.xlu0 %4433
        %4435 = vrot.lane.b32.xlu0 %v403, 86
        %v4436 = vpop.permute.xlu0 %4435
        %4437 = vrot.lane.b32.xlu0 %v409, 86
        %v4438 = vpop.permute.xlu0 %4437
        %vm4439 = vcmask 703488
        %v4440 = vsel %vm4439, %v4416, %v4418
        %v4441 = vsel %vm4439, %v4420, %v4422
        %v4442 = vsel %vm4439, %v4424, %v4426
        %v4443 = vsel %vm4439, %v4428, %v4430
        %v4444 = vsel %vm4439, %v4432, %v4434
        %v4445 = vsel %vm4439, %v4436, %v4438
        %v4452 = vsel %vm469, %v4410, 0
        %v4455 = vsel %vm469, %v4411, 0
        %v4458 = vsel %vm469, %v4412, 0
        %v4461 = vsel %vm469, %v4413, 0
        %v4464 = vsel %vm469, %v4414, 0
        %v4466 = vsel %vm485, %v4445, 0
        %4468 = vmatpush.msra.mxu0 0.0
        %4469 = vmatpush.msra.mxu0 0.0
        %4470 = vmatpush.msra.mxu0 0.0
        %4471 = vmatpush.msra.mxu0 0.0
        %4472 = vmatpush.msra.mxu0 0.0
        %4473 = vmatpush.msra.mxu0 0.0
        %4474 = vmatpush.msra.mxu0 0.0
        %4475 = vmatpush.msra.mxu0 0.0
        %4476 = vmatpush.msra.mxu0 0.0
        %4477 = vmatpush.msra.mxu0 0.0
        %4478 = vmatpush.msra.mxu0 %v4466
        %4479 = vmatpush.msra.mxu0 %v4444
        %4480 = vmatpush.msra.mxu0 %v4443
        %4481 = vmatpush.msra.mxu0 %v4442
        %4482 = vmatpush.msra.mxu0 %v4441
        %4483 = vmatpush.msra.mxu0 %v4440
        %4484 = vmatmul.f32.gmra.mxu0 %v4452
        %v4485 = vpop.f32.mrf.mxu0
        %v4486 = vadd.f32 0.0, %v4485
        %4487 = vmatmul.f32.gmra.mxu0 %v4455
        %v4488 = vpop.f32.mrf.mxu0
        %v4489 = vadd.f32 0.0, %v4488
        %4490 = vmatmul.f32.gmra.mxu0 %v4458
        %v4491 = vpop.f32.mrf.mxu0
        %v4492 = vadd.f32 0.0, %v4491
        %4493 = vmatmul.f32.gmra.mxu0 %v4461
        %v4494 = vpop.f32.mrf.mxu0
        %v4495 = vadd.f32 0.0, %v4494
        %4496 = vmatmul.f32.gmra.mxu0 %v4464
        %v4497 = vpop.f32.mrf.mxu0
        %v4498 = vadd.f32 0.0, %v4497
        %4499 = vdwg.mxu0
        %v4500 = vadd.f32 %v4404, %v4486
        %v4501 = vadd.f32 %v4405, %v4489
        %v4502 = vadd.f32 %v4406, %v4492
        %v4503 = vadd.f32 %v4407, %v4495
        %v4504 = vadd.f32 %v4408, %v4498
        %s4505 = scalar_lea.vmem %s2, 1720
        %v4506 = vld [vmem:[%s4505] sm:$0xff]
        %v4507 = vld [vmem:[%s4505 + $0x8] sm:$0xff]
        %v4508 = vld [vmem:[%s4505 + $0x10] sm:$0xff]
        %v4509 = vld [vmem:[%s4505 + $0x18] sm:$0xff]
        %v4510 = vld [vmem:[%s4505 + $0x20] sm:$0xff]
        %4511 = vrot.lane.b32.xlu0 %v398, 85
        %v4512 = vpop.permute.xlu0 %4511
        %4513 = vrot.lane.b32.xlu0 %v404, 85
        %v4514 = vpop.permute.xlu0 %4513
        %4515 = vrot.lane.b32.xlu0 %v399, 85
        %v4516 = vpop.permute.xlu0 %4515
        %4517 = vrot.lane.b32.xlu0 %v405, 85
        %v4518 = vpop.permute.xlu0 %4517
        %4519 = vrot.lane.b32.xlu0 %v400, 85
        %v4520 = vpop.permute.xlu0 %4519
        %4521 = vrot.lane.b32.xlu0 %v406, 85
        %v4522 = vpop.permute.xlu0 %4521
        %4523 = vrot.lane.b32.xlu0 %v401, 85
        %v4524 = vpop.permute.xlu0 %4523
        %4525 = vrot.lane.b32.xlu0 %v407, 85
        %v4526 = vpop.permute.xlu0 %4525
        %4527 = vrot.lane.b32.xlu0 %v402, 85
        %v4528 = vpop.permute.xlu0 %4527
        %4529 = vrot.lane.b32.xlu0 %v408, 85
        %v4530 = vpop.permute.xlu0 %4529
        %4531 = vrot.lane.b32.xlu0 %v403, 85
        %v4532 = vpop.permute.xlu0 %4531
        %4533 = vrot.lane.b32.xlu0 %v409, 85
        %v4534 = vpop.permute.xlu0 %4533
        %vm4535 = vcmask 695296
        %v4536 = vsel %vm4535, %v4512, %v4514
        %v4537 = vsel %vm4535, %v4516, %v4518
        %v4538 = vsel %vm4535, %v4520, %v4522
        %v4539 = vsel %vm4535, %v4524, %v4526
        %v4540 = vsel %vm4535, %v4528, %v4530
        %v4541 = vsel %vm4535, %v4532, %v4534
        %v4548 = vsel %vm469, %v4506, 0
        %v4551 = vsel %vm469, %v4507, 0
        %v4554 = vsel %vm469, %v4508, 0
        %v4557 = vsel %vm469, %v4509, 0
        %v4560 = vsel %vm469, %v4510, 0
        %v4562 = vsel %vm485, %v4541, 0
        %4564 = vmatpush.msra.mxu0 0.0
        %4565 = vmatpush.msra.mxu0 0.0
        %4566 = vmatpush.msra.mxu0 0.0
        %4567 = vmatpush.msra.mxu0 0.0
        %4568 = vmatpush.msra.mxu0 0.0
        %4569 = vmatpush.msra.mxu0 0.0
        %4570 = vmatpush.msra.mxu0 0.0
        %4571 = vmatpush.msra.mxu0 0.0
        %4572 = vmatpush.msra.mxu0 0.0
        %4573 = vmatpush.msra.mxu0 0.0
        %4574 = vmatpush.msra.mxu0 %v4562
        %4575 = vmatpush.msra.mxu0 %v4540
        %4576 = vmatpush.msra.mxu0 %v4539
        %4577 = vmatpush.msra.mxu0 %v4538
        %4578 = vmatpush.msra.mxu0 %v4537
        %4579 = vmatpush.msra.mxu0 %v4536
        %4580 = vmatmul.f32.gmra.mxu0 %v4548
        %v4581 = vpop.f32.mrf.mxu0
        %v4582 = vadd.f32 0.0, %v4581
        %4583 = vmatmul.f32.gmra.mxu0 %v4551
        %v4584 = vpop.f32.mrf.mxu0
        %v4585 = vadd.f32 0.0, %v4584
        %4586 = vmatmul.f32.gmra.mxu0 %v4554
        %v4587 = vpop.f32.mrf.mxu0
        %v4588 = vadd.f32 0.0, %v4587
        %4589 = vmatmul.f32.gmra.mxu0 %v4557
        %v4590 = vpop.f32.mrf.mxu0
        %v4591 = vadd.f32 0.0, %v4590
        %4592 = vmatmul.f32.gmra.mxu0 %v4560
        %v4593 = vpop.f32.mrf.mxu0
        %v4594 = vadd.f32 0.0, %v4593
        %4595 = vdwg.mxu0
        %v4596 = vadd.f32 %v4500, %v4582
        %v4597 = vadd.f32 %v4501, %v4585
        %v4598 = vadd.f32 %v4502, %v4588
        %v4599 = vadd.f32 %v4503, %v4591
        %v4600 = vadd.f32 %v4504, %v4594
        %s4601 = scalar_lea.vmem %s2, 1760
        %v4602 = vld [vmem:[%s4601] sm:$0xff]
        %v4603 = vld [vmem:[%s4601 + $0x8] sm:$0xff]
        %v4604 = vld [vmem:[%s4601 + $0x10] sm:$0xff]
        %v4605 = vld [vmem:[%s4601 + $0x18] sm:$0xff]
        %v4606 = vld [vmem:[%s4601 + $0x20] sm:$0xff]
        %4607 = vrot.lane.b32.xlu0 %v398, 84
        %v4608 = vpop.permute.xlu0 %4607
        %4609 = vrot.lane.b32.xlu0 %v404, 84
        %v4610 = vpop.permute.xlu0 %4609
        %4611 = vrot.lane.b32.xlu0 %v399, 84
        %v4612 = vpop.permute.xlu0 %4611
        %4613 = vrot.lane.b32.xlu0 %v405, 84
        %v4614 = vpop.permute.xlu0 %4613
        %4615 = vrot.lane.b32.xlu0 %v400, 84
        %v4616 = vpop.permute.xlu0 %4615
        %4617 = vrot.lane.b32.xlu0 %v406, 84
        %v4618 = vpop.permute.xlu0 %4617
        %4619 = vrot.lane.b32.xlu0 %v401, 84
        %v4620 = vpop.permute.xlu0 %4619
        %4621 = vrot.lane.b32.xlu0 %v407, 84
        %v4622 = vpop.permute.xlu0 %4621
        %4623 = vrot.lane.b32.xlu0 %v402, 84
        %v4624 = vpop.permute.xlu0 %4623
        %4625 = vrot.lane.b32.xlu0 %v408, 84
        %v4626 = vpop.permute.xlu0 %4625
        %4627 = vrot.lane.b32.xlu0 %v403, 84
        %v4628 = vpop.permute.xlu0 %4627
        %4629 = vrot.lane.b32.xlu0 %v409, 84
        %v4630 = vpop.permute.xlu0 %4629
        %vm4631 = vcmask 687104
        %v4632 = vsel %vm4631, %v4608, %v4610
        %v4633 = vsel %vm4631, %v4612, %v4614
        %v4634 = vsel %vm4631, %v4616, %v4618
        %v4635 = vsel %vm4631, %v4620, %v4622
        %v4636 = vsel %vm4631, %v4624, %v4626
        %v4637 = vsel %vm4631, %v4628, %v4630
        %v4644 = vsel %vm469, %v4602, 0
        %v4647 = vsel %vm469, %v4603, 0
        %v4650 = vsel %vm469, %v4604, 0
        %v4653 = vsel %vm469, %v4605, 0
        %v4656 = vsel %vm469, %v4606, 0
        %v4658 = vsel %vm485, %v4637, 0
        %4660 = vmatpush.msra.mxu0 0.0
        %4661 = vmatpush.msra.mxu0 0.0
        %4662 = vmatpush.msra.mxu0 0.0
        %4663 = vmatpush.msra.mxu0 0.0
        %4664 = vmatpush.msra.mxu0 0.0
        %4665 = vmatpush.msra.mxu0 0.0
        %4666 = vmatpush.msra.mxu0 0.0
        %4667 = vmatpush.msra.mxu0 0.0
        %4668 = vmatpush.msra.mxu0 0.0
        %4669 = vmatpush.msra.mxu0 0.0
        %4670 = vmatpush.msra.mxu0 %v4658
        %4671 = vmatpush.msra.mxu0 %v4636
        %4672 = vmatpush.msra.mxu0 %v4635
        %4673 = vmatpush.msra.mxu0 %v4634
        %4674 = vmatpush.msra.mxu0 %v4633
        %4675 = vmatpush.msra.mxu0 %v4632
        %4676 = vmatmul.f32.gmra.mxu0 %v4644
        %v4677 = vpop.f32.mrf.mxu0
        %v4678 = vadd.f32 0.0, %v4677
        %4679 = vmatmul.f32.gmra.mxu0 %v4647
        %v4680 = vpop.f32.mrf.mxu0
        %v4681 = vadd.f32 0.0, %v4680
        %4682 = vmatmul.f32.gmra.mxu0 %v4650
        %v4683 = vpop.f32.mrf.mxu0
        %v4684 = vadd.f32 0.0, %v4683
        %4685 = vmatmul.f32.gmra.mxu0 %v4653
        %v4686 = vpop.f32.mrf.mxu0
        %v4687 = vadd.f32 0.0, %v4686
        %4688 = vmatmul.f32.gmra.mxu0 %v4656
        %v4689 = vpop.f32.mrf.mxu0
        %v4690 = vadd.f32 0.0, %v4689
        %4691 = vdwg.mxu0
        %v4692 = vadd.f32 %v4596, %v4678
        %v4693 = vadd.f32 %v4597, %v4681
        %v4694 = vadd.f32 %v4598, %v4684
        %v4695 = vadd.f32 %v4599, %v4687
        %v4696 = vadd.f32 %v4600, %v4690
        %s4697 = scalar_lea.vmem %s2, 1800
        %v4698 = vld [vmem:[%s4697] sm:$0xff]
        %v4699 = vld [vmem:[%s4697 + $0x8] sm:$0xff]
        %v4700 = vld [vmem:[%s4697 + $0x10] sm:$0xff]
        %v4701 = vld [vmem:[%s4697 + $0x18] sm:$0xff]
        %v4702 = vld [vmem:[%s4697 + $0x20] sm:$0xff]
        %4703 = vrot.lane.b32.xlu0 %v398, 83
        %v4704 = vpop.permute.xlu0 %4703
        %4705 = vrot.lane.b32.xlu0 %v404, 83
        %v4706 = vpop.permute.xlu0 %4705
        %4707 = vrot.lane.b32.xlu0 %v399, 83
        %v4708 = vpop.permute.xlu0 %4707
        %4709 = vrot.lane.b32.xlu0 %v405, 83
        %v4710 = vpop.permute.xlu0 %4709
        %4711 = vrot.lane.b32.xlu0 %v400, 83
        %v4712 = vpop.permute.xlu0 %4711
        %4713 = vrot.lane.b32.xlu0 %v406, 83
        %v4714 = vpop.permute.xlu0 %4713
        %4715 = vrot.lane.b32.xlu0 %v401, 83
        %v4716 = vpop.permute.xlu0 %4715
        %4717 = vrot.lane.b32.xlu0 %v407, 83
        %v4718 = vpop.permute.xlu0 %4717
        %4719 = vrot.lane.b32.xlu0 %v402, 83
        %v4720 = vpop.permute.xlu0 %4719
        %4721 = vrot.lane.b32.xlu0 %v408, 83
        %v4722 = vpop.permute.xlu0 %4721
        %4723 = vrot.lane.b32.xlu0 %v403, 83
        %v4724 = vpop.permute.xlu0 %4723
        %4725 = vrot.lane.b32.xlu0 %v409, 83
        %v4726 = vpop.permute.xlu0 %4725
        %vm4727 = vcmask 678912
        %v4728 = vsel %vm4727, %v4704, %v4706
        %v4729 = vsel %vm4727, %v4708, %v4710
        %v4730 = vsel %vm4727, %v4712, %v4714
        %v4731 = vsel %vm4727, %v4716, %v4718
        %v4732 = vsel %vm4727, %v4720, %v4722
        %v4733 = vsel %vm4727, %v4724, %v4726
        %v4740 = vsel %vm469, %v4698, 0
        %v4743 = vsel %vm469, %v4699, 0
        %v4746 = vsel %vm469, %v4700, 0
        %v4749 = vsel %vm469, %v4701, 0
        %v4752 = vsel %vm469, %v4702, 0
        %v4754 = vsel %vm485, %v4733, 0
        %4756 = vmatpush.msra.mxu0 0.0
        %4757 = vmatpush.msra.mxu0 0.0
        %4758 = vmatpush.msra.mxu0 0.0
        %4759 = vmatpush.msra.mxu0 0.0
        %4760 = vmatpush.msra.mxu0 0.0
        %4761 = vmatpush.msra.mxu0 0.0
        %4762 = vmatpush.msra.mxu0 0.0
        %4763 = vmatpush.msra.mxu0 0.0
        %4764 = vmatpush.msra.mxu0 0.0
        %4765 = vmatpush.msra.mxu0 0.0
        %4766 = vmatpush.msra.mxu0 %v4754
        %4767 = vmatpush.msra.mxu0 %v4732
        %4768 = vmatpush.msra.mxu0 %v4731
        %4769 = vmatpush.msra.mxu0 %v4730
        %4770 = vmatpush.msra.mxu0 %v4729
        %4771 = vmatpush.msra.mxu0 %v4728
        %4772 = vmatmul.f32.gmra.mxu0 %v4740
        %v4773 = vpop.f32.mrf.mxu0
        %v4774 = vadd.f32 0.0, %v4773
        %4775 = vmatmul.f32.gmra.mxu0 %v4743
        %v4776 = vpop.f32.mrf.mxu0
        %v4777 = vadd.f32 0.0, %v4776
        %4778 = vmatmul.f32.gmra.mxu0 %v4746
        %v4779 = vpop.f32.mrf.mxu0
        %v4780 = vadd.f32 0.0, %v4779
        %4781 = vmatmul.f32.gmra.mxu0 %v4749
        %v4782 = vpop.f32.mrf.mxu0
        %v4783 = vadd.f32 0.0, %v4782
        %4784 = vmatmul.f32.gmra.mxu0 %v4752
        %v4785 = vpop.f32.mrf.mxu0
        %v4786 = vadd.f32 0.0, %v4785
        %4787 = vdwg.mxu0
        %v4788 = vadd.f32 %v4692, %v4774
        %v4789 = vadd.f32 %v4693, %v4777
        %v4790 = vadd.f32 %v4694, %v4780
        %v4791 = vadd.f32 %v4695, %v4783
        %v4792 = vadd.f32 %v4696, %v4786
        %s4793 = scalar_lea.vmem %s2, 1840
        %v4794 = vld [vmem:[%s4793] sm:$0xff]
        %v4795 = vld [vmem:[%s4793 + $0x8] sm:$0xff]
        %v4796 = vld [vmem:[%s4793 + $0x10] sm:$0xff]
        %v4797 = vld [vmem:[%s4793 + $0x18] sm:$0xff]
        %v4798 = vld [vmem:[%s4793 + $0x20] sm:$0xff]
        %4799 = vrot.lane.b32.xlu0 %v398, 82
        %v4800 = vpop.permute.xlu0 %4799
        %4801 = vrot.lane.b32.xlu0 %v404, 82
        %v4802 = vpop.permute.xlu0 %4801
        %4803 = vrot.lane.b32.xlu0 %v399, 82
        %v4804 = vpop.permute.xlu0 %4803
        %4805 = vrot.lane.b32.xlu0 %v405, 82
        %v4806 = vpop.permute.xlu0 %4805
        %4807 = vrot.lane.b32.xlu0 %v400, 82
        %v4808 = vpop.permute.xlu0 %4807
        %4809 = vrot.lane.b32.xlu0 %v406, 82
        %v4810 = vpop.permute.xlu0 %4809
        %4811 = vrot.lane.b32.xlu0 %v401, 82
        %v4812 = vpop.permute.xlu0 %4811
        %4813 = vrot.lane.b32.xlu0 %v407, 82
        %v4814 = vpop.permute.xlu0 %4813
        %4815 = vrot.lane.b32.xlu0 %v402, 82
        %v4816 = vpop.permute.xlu0 %4815
        %4817 = vrot.lane.b32.xlu0 %v408, 82
        %v4818 = vpop.permute.xlu0 %4817
        %4819 = vrot.lane.b32.xlu0 %v403, 82
        %v4820 = vpop.permute.xlu0 %4819
        %4821 = vrot.lane.b32.xlu0 %v409, 82
        %v4822 = vpop.permute.xlu0 %4821
        %vm4823 = vcmask 670720
        %v4824 = vsel %vm4823, %v4800, %v4802
        %v4825 = vsel %vm4823, %v4804, %v4806
        %v4826 = vsel %vm4823, %v4808, %v4810
        %v4827 = vsel %vm4823, %v4812, %v4814
        %v4828 = vsel %vm4823, %v4816, %v4818
        %v4829 = vsel %vm4823, %v4820, %v4822
        %v4836 = vsel %vm469, %v4794, 0
        %v4839 = vsel %vm469, %v4795, 0
        %v4842 = vsel %vm469, %v4796, 0
        %v4845 = vsel %vm469, %v4797, 0
        %v4848 = vsel %vm469, %v4798, 0
        %v4850 = vsel %vm485, %v4829, 0
        %4852 = vmatpush.msra.mxu0 0.0
        %4853 = vmatpush.msra.mxu0 0.0
        %4854 = vmatpush.msra.mxu0 0.0
        %4855 = vmatpush.msra.mxu0 0.0
        %4856 = vmatpush.msra.mxu0 0.0
        %4857 = vmatpush.msra.mxu0 0.0
        %4858 = vmatpush.msra.mxu0 0.0
        %4859 = vmatpush.msra.mxu0 0.0
        %4860 = vmatpush.msra.mxu0 0.0
        %4861 = vmatpush.msra.mxu0 0.0
        %4862 = vmatpush.msra.mxu0 %v4850
        %4863 = vmatpush.msra.mxu0 %v4828
        %4864 = vmatpush.msra.mxu0 %v4827
        %4865 = vmatpush.msra.mxu0 %v4826
        %4866 = vmatpush.msra.mxu0 %v4825
        %4867 = vmatpush.msra.mxu0 %v4824
        %4868 = vmatmul.f32.gmra.mxu0 %v4836
        %v4869 = vpop.f32.mrf.mxu0
        %v4870 = vadd.f32 0.0, %v4869
        %4871 = vmatmul.f32.gmra.mxu0 %v4839
        %v4872 = vpop.f32.mrf.mxu0
        %v4873 = vadd.f32 0.0, %v4872
        %4874 = vmatmul.f32.gmra.mxu0 %v4842
        %v4875 = vpop.f32.mrf.mxu0
        %v4876 = vadd.f32 0.0, %v4875
        %4877 = vmatmul.f32.gmra.mxu0 %v4845
        %v4878 = vpop.f32.mrf.mxu0
        %v4879 = vadd.f32 0.0, %v4878
        %4880 = vmatmul.f32.gmra.mxu0 %v4848
        %v4881 = vpop.f32.mrf.mxu0
        %v4882 = vadd.f32 0.0, %v4881
        %4883 = vdwg.mxu0
        %v4884 = vadd.f32 %v4788, %v4870
        %v4885 = vadd.f32 %v4789, %v4873
        %v4886 = vadd.f32 %v4790, %v4876
        %v4887 = vadd.f32 %v4791, %v4879
        %v4888 = vadd.f32 %v4792, %v4882
        %s4889 = scalar_lea.vmem %s2, 1880
        %v4890 = vld [vmem:[%s4889] sm:$0xff]
        %v4891 = vld [vmem:[%s4889 + $0x8] sm:$0xff]
        %v4892 = vld [vmem:[%s4889 + $0x10] sm:$0xff]
        %v4893 = vld [vmem:[%s4889 + $0x18] sm:$0xff]
        %v4894 = vld [vmem:[%s4889 + $0x20] sm:$0xff]
        %4895 = vrot.lane.b32.xlu0 %v398, 81
        %v4896 = vpop.permute.xlu0 %4895
        %4897 = vrot.lane.b32.xlu0 %v404, 81
        %v4898 = vpop.permute.xlu0 %4897
        %4899 = vrot.lane.b32.xlu0 %v399, 81
        %v4900 = vpop.permute.xlu0 %4899
        %4901 = vrot.lane.b32.xlu0 %v405, 81
        %v4902 = vpop.permute.xlu0 %4901
        %4903 = vrot.lane.b32.xlu0 %v400, 81
        %v4904 = vpop.permute.xlu0 %4903
        %4905 = vrot.lane.b32.xlu0 %v406, 81
        %v4906 = vpop.permute.xlu0 %4905
        %4907 = vrot.lane.b32.xlu0 %v401, 81
        %v4908 = vpop.permute.xlu0 %4907
        %4909 = vrot.lane.b32.xlu0 %v407, 81
        %v4910 = vpop.permute.xlu0 %4909
        %4911 = vrot.lane.b32.xlu0 %v402, 81
        %v4912 = vpop.permute.xlu0 %4911
        %4913 = vrot.lane.b32.xlu0 %v408, 81
        %v4914 = vpop.permute.xlu0 %4913
        %4915 = vrot.lane.b32.xlu0 %v403, 81
        %v4916 = vpop.permute.xlu0 %4915
        %4917 = vrot.lane.b32.xlu0 %v409, 81
        %v4918 = vpop.permute.xlu0 %4917
        %vm4919 = vcmask 662528
        %v4920 = vsel %vm4919, %v4896, %v4898
        %v4921 = vsel %vm4919, %v4900, %v4902
        %v4922 = vsel %vm4919, %v4904, %v4906
        %v4923 = vsel %vm4919, %v4908, %v4910
        %v4924 = vsel %vm4919, %v4912, %v4914
        %v4925 = vsel %vm4919, %v4916, %v4918
        %v4932 = vsel %vm469, %v4890, 0
        %v4935 = vsel %vm469, %v4891, 0
        %v4938 = vsel %vm469, %v4892, 0
        %v4941 = vsel %vm469, %v4893, 0
        %v4944 = vsel %vm469, %v4894, 0
        %v4946 = vsel %vm485, %v4925, 0
        %4948 = vmatpush.msra.mxu0 0.0
        %4949 = vmatpush.msra.mxu0 0.0
        %4950 = vmatpush.msra.mxu0 0.0
        %4951 = vmatpush.msra.mxu0 0.0
        %4952 = vmatpush.msra.mxu0 0.0
        %4953 = vmatpush.msra.mxu0 0.0
        %4954 = vmatpush.msra.mxu0 0.0
        %4955 = vmatpush.msra.mxu0 0.0
        %4956 = vmatpush.msra.mxu0 0.0
        %4957 = vmatpush.msra.mxu0 0.0
        %4958 = vmatpush.msra.mxu0 %v4946
        %4959 = vmatpush.msra.mxu0 %v4924
        %4960 = vmatpush.msra.mxu0 %v4923
        %4961 = vmatpush.msra.mxu0 %v4922
        %4962 = vmatpush.msra.mxu0 %v4921
        %4963 = vmatpush.msra.mxu0 %v4920
        %4964 = vmatmul.f32.gmra.mxu0 %v4932
        %v4965 = vpop.f32.mrf.mxu0
        %v4966 = vadd.f32 0.0, %v4965
        %4967 = vmatmul.f32.gmra.mxu0 %v4935
        %v4968 = vpop.f32.mrf.mxu0
        %v4969 = vadd.f32 0.0, %v4968
        %4970 = vmatmul.f32.gmra.mxu0 %v4938
        %v4971 = vpop.f32.mrf.mxu0
        %v4972 = vadd.f32 0.0, %v4971
        %4973 = vmatmul.f32.gmra.mxu0 %v4941
        %v4974 = vpop.f32.mrf.mxu0
        %v4975 = vadd.f32 0.0, %v4974
        %4976 = vmatmul.f32.gmra.mxu0 %v4944
        %v4977 = vpop.f32.mrf.mxu0
        %v4978 = vadd.f32 0.0, %v4977
        %4979 = vdwg.mxu0
        %v4980 = vadd.f32 %v4884, %v4966
        %v4981 = vadd.f32 %v4885, %v4969
        %v4982 = vadd.f32 %v4886, %v4972
        %v4983 = vadd.f32 %v4887, %v4975
        %v4984 = vadd.f32 %v4888, %v4978
        %s4985 = scalar_lea.vmem %s2, 1920
        %v4986 = vld [vmem:[%s4985] sm:$0xff]
        %v4987 = vld [vmem:[%s4985 + $0x8] sm:$0xff]
        %v4988 = vld [vmem:[%s4985 + $0x10] sm:$0xff]
        %v4989 = vld [vmem:[%s4985 + $0x18] sm:$0xff]
        %v4990 = vld [vmem:[%s4985 + $0x20] sm:$0xff]
        %4991 = vrot.lane.b32.xlu0 %v398, 80
        %v4992 = vpop.permute.xlu0 %4991
        %4993 = vrot.lane.b32.xlu0 %v404, 80
        %v4994 = vpop.permute.xlu0 %4993
        %4995 = vrot.lane.b32.xlu0 %v399, 80
        %v4996 = vpop.permute.xlu0 %4995
        %4997 = vrot.lane.b32.xlu0 %v405, 80
        %v4998 = vpop.permute.xlu0 %4997
        %4999 = vrot.lane.b32.xlu0 %v400, 80
        %v5000 = vpop.permute.xlu0 %4999
        %5001 = vrot.lane.b32.xlu0 %v406, 80
        %v5002 = vpop.permute.xlu0 %5001
        %5003 = vrot.lane.b32.xlu0 %v401, 80
        %v5004 = vpop.permute.xlu0 %5003
        %5005 = vrot.lane.b32.xlu0 %v407, 80
        %v5006 = vpop.permute.xlu0 %5005
        %5007 = vrot.lane.b32.xlu0 %v402, 80
        %v5008 = vpop.permute.xlu0 %5007
        %5009 = vrot.lane.b32.xlu0 %v408, 80
        %v5010 = vpop.permute.xlu0 %5009
        %5011 = vrot.lane.b32.xlu0 %v403, 80
        %v5012 = vpop.permute.xlu0 %5011
        %5013 = vrot.lane.b32.xlu0 %v409, 80
        %v5014 = vpop.permute.xlu0 %5013
        %vm5015 = vcmask 654336
        %v5016 = vsel %vm5015, %v4992, %v4994
        %v5017 = vsel %vm5015, %v4996, %v4998
        %v5018 = vsel %vm5015, %v5000, %v5002
        %v5019 = vsel %vm5015, %v5004, %v5006
        %v5020 = vsel %vm5015, %v5008, %v5010
        %v5021 = vsel %vm5015, %v5012, %v5014
        %v5028 = vsel %vm469, %v4986, 0
        %v5031 = vsel %vm469, %v4987, 0
        %v5034 = vsel %vm469, %v4988, 0
        %v5037 = vsel %vm469, %v4989, 0
        %v5040 = vsel %vm469, %v4990, 0
        %v5042 = vsel %vm485, %v5021, 0
        %5044 = vmatpush.msra.mxu0 0.0
        %5045 = vmatpush.msra.mxu0 0.0
        %5046 = vmatpush.msra.mxu0 0.0
        %5047 = vmatpush.msra.mxu0 0.0
        %5048 = vmatpush.msra.mxu0 0.0
        %5049 = vmatpush.msra.mxu0 0.0
        %5050 = vmatpush.msra.mxu0 0.0
        %5051 = vmatpush.msra.mxu0 0.0
        %5052 = vmatpush.msra.mxu0 0.0
        %5053 = vmatpush.msra.mxu0 0.0
        %5054 = vmatpush.msra.mxu0 %v5042
        %5055 = vmatpush.msra.mxu0 %v5020
        %5056 = vmatpush.msra.mxu0 %v5019
        %5057 = vmatpush.msra.mxu0 %v5018
        %5058 = vmatpush.msra.mxu0 %v5017
        %5059 = vmatpush.msra.mxu0 %v5016
        %5060 = vmatmul.f32.gmra.mxu0 %v5028
        %v5061 = vpop.f32.mrf.mxu0
        %v5062 = vadd.f32 0.0, %v5061
        %5063 = vmatmul.f32.gmra.mxu0 %v5031
        %v5064 = vpop.f32.mrf.mxu0
        %v5065 = vadd.f32 0.0, %v5064
        %5066 = vmatmul.f32.gmra.mxu0 %v5034
        %v5067 = vpop.f32.mrf.mxu0
        %v5068 = vadd.f32 0.0, %v5067
        %5069 = vmatmul.f32.gmra.mxu0 %v5037
        %v5070 = vpop.f32.mrf.mxu0
        %v5071 = vadd.f32 0.0, %v5070
        %5072 = vmatmul.f32.gmra.mxu0 %v5040
        %v5073 = vpop.f32.mrf.mxu0
        %v5074 = vadd.f32 0.0, %v5073
        %5075 = vdwg.mxu0
        %v5076 = vadd.f32 %v4980, %v5062
        %v5077 = vadd.f32 %v4981, %v5065
        %v5078 = vadd.f32 %v4982, %v5068
        %v5079 = vadd.f32 %v4983, %v5071
        %v5080 = vadd.f32 %v4984, %v5074
        %s5081 = scalar_lea.vmem %s2, 1960
        %v5082 = vld [vmem:[%s5081] sm:$0xff]
        %v5083 = vld [vmem:[%s5081 + $0x8] sm:$0xff]
        %v5084 = vld [vmem:[%s5081 + $0x10] sm:$0xff]
        %v5085 = vld [vmem:[%s5081 + $0x18] sm:$0xff]
        %v5086 = vld [vmem:[%s5081 + $0x20] sm:$0xff]
        %5087 = vrot.lane.b32.xlu0 %v398, 79
        %v5088 = vpop.permute.xlu0 %5087
        %5089 = vrot.lane.b32.xlu0 %v404, 79
        %v5090 = vpop.permute.xlu0 %5089
        %5091 = vrot.lane.b32.xlu0 %v399, 79
        %v5092 = vpop.permute.xlu0 %5091
        %5093 = vrot.lane.b32.xlu0 %v405, 79
        %v5094 = vpop.permute.xlu0 %5093
        %5095 = vrot.lane.b32.xlu0 %v400, 79
        %v5096 = vpop.permute.xlu0 %5095
        %5097 = vrot.lane.b32.xlu0 %v406, 79
        %v5098 = vpop.permute.xlu0 %5097
        %5099 = vrot.lane.b32.xlu0 %v401, 79
        %v5100 = vpop.permute.xlu0 %5099
        %5101 = vrot.lane.b32.xlu0 %v407, 79
        %v5102 = vpop.permute.xlu0 %5101
        %5103 = vrot.lane.b32.xlu0 %v402, 79
        %v5104 = vpop.permute.xlu0 %5103
        %5105 = vrot.lane.b32.xlu0 %v408, 79
        %v5106 = vpop.permute.xlu0 %5105
        %5107 = vrot.lane.b32.xlu0 %v403, 79
        %v5108 = vpop.permute.xlu0 %5107
        %5109 = vrot.lane.b32.xlu0 %v409, 79
        %v5110 = vpop.permute.xlu0 %5109
        %vm5111 = vcmask 646144
        %v5112 = vsel %vm5111, %v5088, %v5090
        %v5113 = vsel %vm5111, %v5092, %v5094
        %v5114 = vsel %vm5111, %v5096, %v5098
        %v5115 = vsel %vm5111, %v5100, %v5102
        %v5116 = vsel %vm5111, %v5104, %v5106
        %v5117 = vsel %vm5111, %v5108, %v5110
        %v5124 = vsel %vm469, %v5082, 0
        %v5127 = vsel %vm469, %v5083, 0
        %v5130 = vsel %vm469, %v5084, 0
        %v5133 = vsel %vm469, %v5085, 0
        %v5136 = vsel %vm469, %v5086, 0
        %v5138 = vsel %vm485, %v5117, 0
        %5140 = vmatpush.msra.mxu0 0.0
        %5141 = vmatpush.msra.mxu0 0.0
        %5142 = vmatpush.msra.mxu0 0.0
        %5143 = vmatpush.msra.mxu0 0.0
        %5144 = vmatpush.msra.mxu0 0.0
        %5145 = vmatpush.msra.mxu0 0.0
        %5146 = vmatpush.msra.mxu0 0.0
        %5147 = vmatpush.msra.mxu0 0.0
        %5148 = vmatpush.msra.mxu0 0.0
        %5149 = vmatpush.msra.mxu0 0.0
        %5150 = vmatpush.msra.mxu0 %v5138
        %5151 = vmatpush.msra.mxu0 %v5116
        %5152 = vmatpush.msra.mxu0 %v5115
        %5153 = vmatpush.msra.mxu0 %v5114
        %5154 = vmatpush.msra.mxu0 %v5113
        %5155 = vmatpush.msra.mxu0 %v5112
        %5156 = vmatmul.f32.gmra.mxu0 %v5124
        %v5157 = vpop.f32.mrf.mxu0
        %v5158 = vadd.f32 0.0, %v5157
        %5159 = vmatmul.f32.gmra.mxu0 %v5127
        %v5160 = vpop.f32.mrf.mxu0
        %v5161 = vadd.f32 0.0, %v5160
        %5162 = vmatmul.f32.gmra.mxu0 %v5130
        %v5163 = vpop.f32.mrf.mxu0
        %v5164 = vadd.f32 0.0, %v5163
        %5165 = vmatmul.f32.gmra.mxu0 %v5133
        %v5166 = vpop.f32.mrf.mxu0
        %v5167 = vadd.f32 0.0, %v5166
        %5168 = vmatmul.f32.gmra.mxu0 %v5136
        %v5169 = vpop.f32.mrf.mxu0
        %v5170 = vadd.f32 0.0, %v5169
        %5171 = vdwg.mxu0
        %v5172 = vadd.f32 %v5076, %v5158
        %v5173 = vadd.f32 %v5077, %v5161
        %v5174 = vadd.f32 %v5078, %v5164
        %v5175 = vadd.f32 %v5079, %v5167
        %v5176 = vadd.f32 %v5080, %v5170
        %v5177 = vld [vmem:[%s3] sm:$0xff]
        %v5178 = vld [vmem:[%s3 + $0x8] sm:$0xff]
        %v5179 = vld [vmem:[%s3 + $0x10] sm:$0xff]
        %v5180 = vld [vmem:[%s3 + $0x18] sm:$0xff]
        %v5181 = vld [vmem:[%s3 + $0x20] sm:$0xff]
        %5183 = vset.pattern.permute.xlu0 0
        %5184 = vperm.xlu0 %5183, %v5177
        %v5185 = vpop.permute.xlu0 %5184
        %5188 = vset.pattern.permute.xlu0 0
        %5189 = vperm.xlu0 %5188, %v5178
        %v5190 = vpop.permute.xlu0 %5189
        %5193 = vset.pattern.permute.xlu0 0
        %5194 = vperm.xlu0 %5193, %v5179
        %v5195 = vpop.permute.xlu0 %5194
        %5198 = vset.pattern.permute.xlu0 0
        %5199 = vperm.xlu0 %5198, %v5180
        %v5200 = vpop.permute.xlu0 %5199
        %5203 = vset.pattern.permute.xlu0 0
        %5204 = vperm.xlu0 %5203, %v5181
        %v5205 = vpop.permute.xlu0 %5204
        %v5207 = vadd.f32 %v5172, %v5185
        %v5208 = vadd.f32 %v5173, %v5190
        %v5209 = vadd.f32 %v5174, %v5195
        %v5210 = vadd.f32 %v5175, %v5200
        %v5211 = vadd.f32 %v5176, %v5205
        %5212 = vst [vmem:[%s376] sm:$0xff] %v5207
        %5213 = vst [vmem:[%s376 + $0x8] sm:$0xff] %v5208
        %5214 = vst [vmem:[%s376 + $0x10] sm:$0xff] %v5209
        %5215 = vst [vmem:[%s376 + $0x18] sm:$0xff] %v5210
        %5216 = vst [vmem:[%s376 + $0x20] sm:$0xff] %v5211
        %s5217 = smul.u32 %s22, 128
        %v5218 = vlaneseq
        %v5219 = vand.u32 %v5218, 127
        %v5220 = vstv %s5217
        %v5221 = vadd.s32 %v5220, %v5219
        %vm5222 = vcmp.lt.s32.totalorder %v5221, 240
        %v5223 = vsel %vm5222, 1, 0
        %vm5224 = vcmp.eq.s32.totalorder %v5223, 1
        %v5225 = vsel %vm5224, %v5207, 0.0
        %v5226 = vsel %vm5224, %v5208, 0.0
        %v5227 = vsel %vm5224, %v5209, 0.0
        %v5228 = vsel %vm5224, %v5210, 0.0
        %v5229 = vsel %vm5224, %v5211, 0.0
        %5230 = vadd.xlane.f32.xlu0 %v5225
        %v5231 = vpop.xlane.xlu0 %5230
        %5232 = vadd.xlane.f32.xlu0 %v5226
        %v5233 = vpop.xlane.xlu0 %5232
        %5234 = vadd.xlane.f32.xlu0 %v5227
        %v5235 = vpop.xlane.xlu0 %5234
        %5236 = vadd.xlane.f32.xlu0 %v5228
        %v5237 = vpop.xlane.xlu0 %5236
        %5238 = vadd.xlane.f32.xlu0 %v5229
        %v5239 = vpop.xlane.xlu0 %5238
        %vm5240 = vcmask 7168
        %5241 = vst.msk [vmem:[%s397] sm:$0xff] %vm5240, %v5231
        %5242 = vst.msk [vmem:[%s397 + $0x8] sm:$0xff] %vm5240, %v5233
        %5243 = vst.msk [vmem:[%s397 + $0x10] sm:$0xff] %vm5240, %v5235
        %5244 = vst.msk [vmem:[%s397 + $0x18] sm:$0xff] %vm5240, %v5237
        %5245 = vst.msk [vmem:[%s397 + $0x20] sm:$0xff] %vm5240, %v5239
        %v5246 = vmul.f32 %v5225, %v5225
        %v5247 = vmul.f32 %v5226, %v5226
        %v5248 = vmul.f32 %v5227, %v5227
        %v5249 = vmul.f32 %v5228, %v5228
        %v5250 = vmul.f32 %v5229, %v5229
        %5251 = vadd.xlane.f32.xlu0 %v5246
        %v5252 = vpop.xlane.xlu0 %5251
        %5253 = vadd.xlane.f32.xlu0 %v5247
        %v5254 = vpop.xlane.xlu0 %5253
        %5255 = vadd.xlane.f32.xlu0 %v5248
        %v5256 = vpop.xlane.xlu0 %5255
        %5257 = vadd.xlane.f32.xlu0 %v5249
        %v5258 = vpop.xlane.xlu0 %5257
        %5259 = vadd.xlane.f32.xlu0 %v5250
        %v5260 = vpop.xlane.xlu0 %5259
        %vm5261 = vcmask 15368
        %5262 = vst.msk [vmem:[%s397] sm:$0xff] %vm5261, %v5252
        %5263 = vst.msk [vmem:[%s397 + $0x8] sm:$0xff] %vm5261, %v5254
        %5264 = vst.msk [vmem:[%s397 + $0x10] sm:$0xff] %vm5261, %v5256
        %5265 = vst.msk [vmem:[%s397 + $0x18] sm:$0xff] %vm5261, %v5258
        %5266 = vst.msk [vmem:[%s397 + $0x20] sm:$0xff] %vm5261, %v5260
        %s5267 = sand.u32 %s139, 1
        %s5268 = sand.u32 %s139, 1
        %s5269 = smul.addr %s5268, 40
        %s5270 = scalar_lea.vmem [#allocation4], %s5269
        %p5271 = scmp.lt.s32.totalorder %s21, 1
        %s5272 = scalar_select %p5271, %s21, 1
        %p5273 = scmp.lt.s32.totalorder %s22, 1
        %s5274 = scalar_select %p5273, %s22, 1
        %s5275 = smul.addr %s5274, 5
        %s5276 = smul.addr %s5272, 10
        %s5277 = sadd.s32 %s5275, %s5276
        %s5278 = smul.addr %s5277, 8
        %s5279 = scalar_lea.vmem %s5, %s5278
        // Predicated region
        $region113: #{globalnetwork_forward.2} parent=103 // pred_check
          %p5280 = pneg %p149
        $region114: #{globalnetwork_forward.2} parent=103 // pred_check_branch
          %5282 = sbr.rel (%p5280) target = $region116
        $region115: #{globalnetwork_forward.2} parent=103 // pred_region
          %s5283 = smul.addr %s21, 10
          %s5284 = sadd.s32 %s22, %s5283
          %s5285 = smul.addr %s5284, 8
          %s5286 = scalar_lea.vmem %s4, %s5285
          // Predicated region
          $region117: #{globalnetwork_forward.2} parent=115 // pred_check
            _
          $region118: #{globalnetwork_forward.2} parent=115 // pred_check_branch
            %5288 = sbr.rel (0) target = $region120
          $region119: #{globalnetwork_forward.2} parent=115 // pred_region
            // Predicated region
            $region121: #{globalnetwork_forward.2} parent=119 // pred_check
              _
            $region122: #{globalnetwork_forward.2} parent=119 // pred_check_branch
              %5290 = sbr.rel (0) target = $region124
            $region123: #{globalnetwork_forward.2} parent=119 // pred_region
              // Predicated region
              $region136: #{globalnetwork_forward.2} parent=123 // pred_check
                _
              $region137: #{globalnetwork_forward.2} parent=123 // pred_check_branch
                %5314 = sbr.rel (0) target = $region139
              $region138: #{globalnetwork_forward.2} parent=123 // pred_region
                loop: start=0, step=1, limit=1
                $region140: #{globalnetwork_forward.2} parent=138 // loop_pre_header
                  _
                $region141: #{globalnetwork_forward.2} parent=138 // loop_header
                  %s5316 = sphi 0, %s5320
                  %p5317 = scmp.ge.s32.totalorder %s5316, 1
                  %s5321 = sphi %s5270, %s5270
                  %s5322 = sphi %s5286, %s5286
                $region142: #{globalnetwork_forward.2} parent=138 // loop_header_branch
                  %5319 = sbr.rel (%p5317) target = $region146
                $region143: #{globalnetwork_forward.2} parent=138 // loop_body
                  %v5323 = vld [vmem:[%s5321] sm:$0xff]
                  %5324 = vst [vmem:[%s5322] sm:$0xff] %v5323
                  %v5325 = vld [vmem:[%s5321 + $0x8] sm:$0xff]
                  %5326 = vst [vmem:[%s5322 + $0x10] sm:$0xff] %v5325
                  %v5327 = vld [vmem:[%s5321 + $0x10] sm:$0xff]
                  %5328 = vst [vmem:[%s5322 + $0x20] sm:$0xff] %v5327
                  %v5329 = vld [vmem:[%s5321 + $0x18] sm:$0xff]
                  %5330 = vst [vmem:[%s5322 + $0x30] sm:$0xff] %v5329
                  %v5331 = vld [vmem:[%s5321 + $0x20] sm:$0xff]
                  %5332 = vst [vmem:[%s5322 + $0x40] sm:$0xff] %v5331
                $region144: #{globalnetwork_forward.2} parent=138 // loop_footer
                  %s5320 = sadd.s32 1, %s5316
                $region145: #{globalnetwork_forward.2} parent=138 // loop_footer_branch
                  %5315 = sbr.rel target = $region141
                $region146: #{globalnetwork_forward.2} parent=138 // loop_exit
                  _
              $region139: #{globalnetwork_forward.2} parent=123 // pred_fallthru
                _
              // Predicated region
              $region147: #{globalnetwork_forward.2} parent=123 // pred_check
                _
              $region148: #{globalnetwork_forward.2} parent=123 // pred_check_branch
                %5334 = sbr.rel target = $region150
              $region149: #{globalnetwork_forward.2} parent=123 // pred_region
                _
              $region150: #{globalnetwork_forward.2} parent=123 // pred_fallthru
                _
            $region124: #{globalnetwork_forward.2} parent=119 // pred_fallthru
              _
            // Predicated region
            $region125: #{globalnetwork_forward.2} parent=119 // pred_check
              _
            $region126: #{globalnetwork_forward.2} parent=119 // pred_check_branch
              %5292 = sbr.rel target = $region128
            $region127: #{globalnetwork_forward.2} parent=119 // pred_region
              %s5294 = ssub.s32 256, 1
              loop: start=0, step=1, limit=1
              $region129: #{globalnetwork_forward.2} parent=127 // loop_pre_header
                _
              $region130: #{globalnetwork_forward.2} parent=127 // loop_header
                %s5296 = sphi 0, %s5300
                %p5297 = scmp.ge.s32.totalorder %s5296, 1
                %s5301 = sphi %s5270, %s5270
                %s5302 = sphi %s5286, %s5286
              $region131: #{globalnetwork_forward.2} parent=127 // loop_header_branch
                %5299 = sbr.rel (%p5297) target = $region135
              $region132: #{globalnetwork_forward.2} parent=127 // loop_body
                %v5303 = vld [vmem:[%s5301] sm:%s5294]
                %5304 = vst [vmem:[%s5302] sm:%s5294] %v5303
                %v5305 = vld [vmem:[%s5301 + $0x8] sm:%s5294]
                %5306 = vst [vmem:[%s5302 + $0x10] sm:%s5294] %v5305
                %v5307 = vld [vmem:[%s5301 + $0x10] sm:%s5294]
                %5308 = vst [vmem:[%s5302 + $0x20] sm:%s5294] %v5307
                %v5309 = vld [vmem:[%s5301 + $0x18] sm:%s5294]
                %5310 = vst [vmem:[%s5302 + $0x30] sm:%s5294] %v5309
                %v5311 = vld [vmem:[%s5301 + $0x20] sm:%s5294]
                %5312 = vst [vmem:[%s5302 + $0x40] sm:%s5294] %v5311
              $region133: #{globalnetwork_forward.2} parent=127 // loop_footer
                %s5300 = sadd.s32 1, %s5296
              $region134: #{globalnetwork_forward.2} parent=127 // loop_footer_branch
                %5295 = sbr.rel target = $region130
              $region135: #{globalnetwork_forward.2} parent=127 // loop_exit
                _
            $region128: #{globalnetwork_forward.2} parent=119 // pred_fallthru
              _
          $region120: #{globalnetwork_forward.2} parent=115 // pred_fallthru
            _
          %5335 = vnop
        $region116: #{globalnetwork_forward.2} parent=103 // pred_fallthru
          _
        // Predicated region
        $region151: #{globalnetwork_forward.2} parent=103 // pred_check
          %p5336 = pneg %p177
        $region152: #{globalnetwork_forward.2} parent=103 // pred_check_branch
          %5338 = sbr.rel (%p5336) target = $region154
        $region153: #{globalnetwork_forward.2} parent=103 // pred_region
          _
        $region154: #{globalnetwork_forward.2} parent=103 // pred_fallthru
          _
      $region104: #{globalnetwork_forward.2} parent=5 // pred_fallthru
        _
      %p5339 = scmp.le.s32.totalorder 2, %s12
      // Predicated region
      $region155: #{globalnetwork_forward.2} parent=5 // pred_check
        %p5340 = pneg %p5339
      $region156: #{globalnetwork_forward.2} parent=5 // pred_check_branch
        %5342 = sbr.rel (%p5340) target = $region158
      $region157: #{globalnetwork_forward.2} parent=5 // pred_region
        %s5343 = ssub.s32 %s12, 2
        // Predicated region
        $region159: #{globalnetwork_forward.2} parent=157 // pred_check
          %p5344 = pneg %p155
        $region160: #{globalnetwork_forward.2} parent=157 // pred_check_branch
          %5346 = sbr.rel (%p5344) target = $region162
        $region161: #{globalnetwork_forward.2} parent=157 // pred_region
          %s5347 = sand.u32 %s140, 1
          %s5348 = sand.u32 %s140, 1
          %s5349 = smul.addr %s5348, 40
          %s5350 = scalar_lea.vmem [#allocation4], %s5349
        $region162: #{globalnetwork_forward.2} parent=157 // pred_fallthru
          _
        // Predicated region
        $region163: #{globalnetwork_forward.2} parent=157 // pred_check
          %p5351 = pneg %p183
        $region164: #{globalnetwork_forward.2} parent=157 // pred_check_branch
          %5353 = sbr.rel (%p5351) target = $region166
        $region165: #{globalnetwork_forward.2} parent=157 // pred_region
          %p5354 = scmp.lt.s32.totalorder %s23, 1
          %s5355 = scalar_select %p5354, %s23, 1
          %p5356 = scmp.lt.s32.totalorder %s24, 1
          %s5357 = scalar_select %p5356, %s24, 1
          %s5358 = smul.addr %s5357, 5
          %s5359 = smul.addr %s5355, 10
          %s5360 = sadd.s32 %s5358, %s5359
          %s5361 = smul.addr %s5360, 8
          %s5362 = scalar_lea.vmem %s5, %s5361
        $region166: #{globalnetwork_forward.2} parent=157 // pred_fallthru
          _
      $region158: #{globalnetwork_forward.2} parent=5 // pred_fallthru
        _
    $region6: #{globalnetwork_forward.2} parent=1 // loop_footer
      %s16 = sadd.s32 1, %s12
    $region7: #{globalnetwork_forward.2} parent=1 // loop_footer_branch
      %11 = sbr.rel target = $region3
    $region8: #{globalnetwork_forward.2} parent=1 // loop_exit
      _

</llo_original>
